<compile_context>
chip_gen: v6e
topology: v6e:2x2x1
jax: 0.10.0
libtpu: 0.0.40
codegen_flags: <defaults>
</compile_context>

<pallas_src>
import functools

import jax
import jax.numpy as jnp
import numpy as np
from jax import lax
from jax.experimental import pallas as pl
from jax.experimental.pallas import tpu as pltpu

_EPS = 1e-5
_LANES = 128


def _round_up(x, m):
    return (x + m - 1) // m * m


def _vmem_capacity_bytes():
    """Per-core VMEM capacity; conservative default if the query fails."""
    try:
        info = pltpu.get_tpu_info()
        cap = int(getattr(info, "vmem_capacity_bytes", 0) or 0)
        if cap > 0:
            return cap
    except Exception:
        pass
    return 64 << 20                      # v7x per-core VMEM (smallest of the three)


def _pick_tile_h(H, W, c_store, cp, in_itm, out_itm, budget_bytes, cap_rows):
    """Largest divisor of H (<= cap_rows) whose double-buffered blocks fit."""
    best = 1
    for th in range(1, H + 1):
        if H % th or th > cap_rows:
            continue
        need = (2 * ((th + 2) * (W + 2) * c_store * in_itm      # halo input window
                     + th * W * cp * out_itm                    # conv output tile
                     + 2 * cp * 4)                              # packed stats tile
                + (th + 2) * (W + 2) * c_store * 4              # f32 window temp
                + 4 * th * W * cp * 4)                          # accumulator + temps
        if need <= budget_bytes:
            best = th
    return best


# --------------------------------------------------------------------------
# Kernels
# --------------------------------------------------------------------------
def _conv3x3_stats_kernel(x_ref, w_ref, b_ref, scale_ref, shift_ref,
                          o_ref, stats_ref,
                          *, tile_h, H, W, cin_k, apply_input_bnrelu,
                          use_tap_dots):
    """One output row-tile of a 3x3 / stride-1 / pad-1 conv (+ optional fused
    BN+ReLU on the input) + packed per-tile partial BN statistics."""
    cp = o_ref.shape[3]
    t = pl.program_id(1)
    row0 = t * tile_h                               # top padded row of the window

    if x_ref.shape[1] == tile_h + 2:                # halo-tiled input window
        xt = x_ref[0]
    else:                                           # fallback: resident padded image
        xt = x_ref[0, pl.ds(pl.multiple_of(row0, tile_h), tile_h + 2), :, :]

    if cin_k < xt.shape[-1]:                        # contract only real channels
        xt = xt[:, :, :cin_k]

    if apply_input_bnrelu:
        # Fused BN+ReLU of the previous conv's output (pointwise, halo rows too).
        # The 1-pixel zero border must stay exactly 0 afterwards -> interior
        # mask, built at the activation's own lane width (no 1-lane iotas).
        sc = scale_ref[0, :cin_k].reshape(1, 1, cin_k)
        sh = shift_ref[0, :cin_k].reshape(1, 1, cin_k)
        y = jnp.maximum(xt.astype(jnp.float32) * sc + sh, 0.0)
        shp = (tile_h + 2, W + 2, cin_k)
        rows = lax.broadcasted_iota(jnp.int32, shp, 0) + row0
        cols = lax.broadcasted_iota(jnp.int32, shp, 1)
        interior = (rows > 0) & (rows < H + 1) & (cols > 0) & (cols < W + 1)
        xt = jnp.where(interior, y, 0.0).astype(w_ref.dtype)
    else:
        xt = xt.astype(w_ref.dtype)

    if use_tap_dots:
        # 9 accumulating per-tap MXU dots on shifted views (no materialized
        # im2col patch -> no lane-concat, far less VMEM / vld-vst traffic).
        acc = jnp.zeros((tile_h * W, cp), jnp.float32)
        for tap in range(9):
            kh, kw = divmod(tap, 3)
            tap_x = xt[kh:kh + tile_h, kw:kw + W, :].reshape(tile_h * W, cin_k)
            acc = acc + jnp.dot(tap_x,
                                w_ref[tap * cin_k:(tap + 1) * cin_k, :],
                                preferred_element_type=jnp.float32)
    else:
        # Tiny cin: one concatenated (tile_h*W, 9*cin_k) matmul beats nine
        # K-starved MXU passes.
        pieces = [xt[kh:kh + tile_h, kw:kw + W, :]
                  for kh in range(3) for kw in range(3)]
        patch = jnp.concatenate(pieces, axis=-1).reshape(tile_h * W, 9 * cin_k)
        acc = jnp.dot(patch, w_ref[...], preferred_element_type=jnp.float32)

    acc = acc + b_ref[...]                                   # (tile_h*W, cp)
    out = acc.astype(o_ref.dtype)
    o_ref[...] = out.reshape(1, tile_h, W, cp)

    # Packed partial BN statistics of exactly what was stored.
    outf = out.astype(jnp.float32)
    stats = jnp.concatenate([jnp.sum(outf, axis=0, keepdims=True),
                             jnp.sum(outf * outf, axis=0, keepdims=True)],
                            axis=0)
    stats_ref[...] = stats.reshape(1, 1, 2, cp)


def _bnrelu_kernel(x_ref, scale_ref, shift_ref, o_ref):
    """Pointwise y = relu(scale * x + shift); channel un-padding folded in."""
    cout = o_ref.shape[3]
    x = x_ref[0, :, :, :cout].astype(jnp.float32)
    y = (x * scale_ref[0, :cout].reshape(1, 1, cout)
         + shift_ref[0, :cout].reshape(1, 1, cout))
    o_ref[...] = jnp.maximum(y, 0.0).reshape(o_ref.shape).astype(o_ref.dtype)


# --------------------------------------------------------------------------
# pallas_call wrappers
# --------------------------------------------------------------------------
def _conv3x3_with_stats(x_pad, w_flat, bias, scale, shift, *, H, W, tile_h,
                        cin_k, apply_input_bnrelu, use_tap_dots, use_halo,
                        out_dtype, vmem_cap):
    """x_pad (N, H+2, W+2, c_store) -> conv out (N, H, W, cp) + packed BN partials."""
    N, c_store = x_pad.shape[0], x_pad.shape[3]
    cp = w_flat.shape[1]
    num_t = H // tile_h

    in_itm = np.dtype(x_pad.dtype).itemsize
    out_itm = np.dtype(out_dtype).itemsize
    in_rows = (tile_h + 2) if use_halo else (H + 2)
    need = (2 * (in_rows * (W + 2) * c_store * in_itm
                 + tile_h * W * cp * out_itm + 2 * cp * 4)
            + 9 * cin_k * cp * np.dtype(w_flat.dtype).itemsize
            + (tile_h + 2) * (W + 2) * c_store * 4
            + 4 * tile_h * W * cp * 4 + 6 * cp * 4)
    vmem_limit = int(min(max(2 * need, 32 << 20), int(0.85 * vmem_cap)))

    kernel = functools.partial(
        _conv3x3_stats_kernel, tile_h=tile_h, H=H, W=W, cin_k=cin_k,
        apply_input_bnrelu=apply_input_bnrelu, use_tap_dots=use_tap_dots)

    if use_halo:
        # Row-halo window via element-offset indexing: VMEM is O(tile); the
        # 2-row overlap is simply re-read (2/tile_h extra input traffic).
        x_spec = pl.BlockSpec((1, pl.Element(tile_h + 2), W + 2, c_store),
                              lambda n, t: (n, t * tile_h, 0, 0))
    else:
        # Fallback: full padded image resident across the row-tile axis.
        x_spec = pl.BlockSpec((1, H + 2, W + 2, c_store),
                              lambda n, t: (n, 0, 0, 0))

    return pl.pallas_call(
        kernel,
        out_shape=(
            jax.ShapeDtypeStruct((N, H, W, cp), out_dtype),
            jax.ShapeDtypeStruct((N, num_t, 2, cp), jnp.float32),
        ),
        grid=(N, num_t),
        in_specs=[
            x_spec,
            pl.BlockSpec((9 * cin_k, cp), lambda n, t: (0, 0)),
            pl.BlockSpec((1, cp), lambda n, t: (0, 0)),
            pl.BlockSpec((1, cp), lambda n, t: (0, 0)),
            pl.BlockSpec((1, cp), lambda n, t: (0, 0)),
        ],
        out_specs=(
            pl.BlockSpec((1, tile_h, W, cp), lambda n, t: (n, t, 0, 0)),
            pl.BlockSpec((1, 1, 2, cp), lambda n, t: (n, t, 0, 0)),
        ),
        compiler_params=pltpu.CompilerParams(
            dimension_semantics=("parallel", "parallel"),
            vmem_limit_bytes=vmem_limit),
    )(x_pad, w_flat, bias, scale, shift)


def _bnrelu(x, scale, shift, *, tile_h, cout, out_dtype, vmem_cap):
    N, H, W, cp = x.shape
    num_t = H // tile_h
    need = (2 * tile_h * W * (cp * np.dtype(x.dtype).itemsize
                              + cout * np.dtype(out_dtype).itemsize)
            + 2 * tile_h * W * cp * 4 + 4 * cp * 4)
    vmem_limit = int(min(max(2 * need, 16 << 20), int(0.85 * vmem_cap)))

    return pl.pallas_call(
        _bnrelu_kernel,
        out_shape=jax.ShapeDtypeStruct((N, H, W, cout), out_dtype),
        grid=(N, num_t),
        in_specs=[
            pl.BlockSpec((1, tile_h, W, cp), lambda n, t: (n, t, 0, 0)),
            pl.BlockSpec((1, cp), lambda n, t: (0, 0)),
            pl.BlockSpec((1, cp), lambda n, t: (0, 0)),
        ],
        out_specs=pl.BlockSpec((1, tile_h, W, cout), lambda n, t: (n, t, 0, 0)),
        compiler_params=pltpu.CompilerParams(
            dimension_semantics=("parallel", "parallel"),
            vmem_limit_bytes=vmem_limit),
    )(x, scale, shift)


def _finalize_bn(stats, gamma, beta, count):
    """Packed per-tile (sum, sum_sq) partials -> fused BN (scale, shift).
    Biased variance, matching PyTorch training-mode normalization."""
    s = jnp.sum(stats[:, :, 0, :], axis=(0, 1))
    q = jnp.sum(stats[:, :, 1, :], axis=(0, 1))
    mean = s / count
    var = jnp.maximum(q / count - mean * mean, 0.0)
    scale = gamma * lax.rsqrt(var + _EPS)
    shift = beta - mean * scale
    return scale.reshape(1, -1), shift.reshape(1, -1)


def conv_block_forward(x_nchw, params, *, max_tile_h=32,
                       compute_dtype=jnp.bfloat16, use_halo=True,
                       force_tap_dots=False):
    """Pallas conv_block: (Conv3x3 pad1 + BN(train-mode) + ReLU) x 2.
    NCHW in / NCHW out (matches the PyTorch module)."""
    w1, b1, g1, be1, w2, b2, g2, be2 = params
    N, Cin, H, W = x_nchw.shape
    Cout = w1.shape[0]
    Cp = _round_up(Cout, _LANES)               # lane-dense channel padding
    count = N * H * W
    use_halo = bool(use_halo) and hasattr(pl, "Element")

    vmem_cap = _vmem_capacity_bytes()
    itm = np.dtype(compute_dtype).itemsize
    tile_h = _pick_tile_h(H, W, Cp, Cp, itm, itm,
                          budget_bytes=int(0.35 * vmem_cap),
                          cap_rows=max_tile_h)

    def pad_c(v):
        return jnp.pad(v.astype(jnp.float32), (0, Cp - Cout))

    # conv #1 weights: OIHW -> (kh, kw, Cin, Cout) -> (9*Cin, Cp)
    w1_k = jnp.transpose(w1, (2, 3, 1, 0))
    w1_k = jnp.pad(w1_k, ((0, 0), (0, 0), (0, 0), (0, Cp - Cout)))
    w1_k = w1_k.reshape(9 * Cin, Cp).astype(compute_dtype)
    # conv #2 weights: contract only the REAL Cout input channels (9*Cout rows);
    # only the output-channel dim is lane-padded.
    w2_k = jnp.transpose(w2, (2, 3, 1, 0))
    w2_k = jnp.pad(w2_k, ((0, 0), (0, 0), (0, 0), (0, Cp - Cout)))
    w2_k = w2_k.reshape(9 * Cout, Cp).astype(compute_dtype)

    b1_k = pad_c(b1).reshape(1, Cp)
    b2_k = pad_c(b2).reshape(1, Cp)
    g1_p, be1_p = pad_c(g1), pad_c(be1)
    g2_p, be2_p = pad_c(g2), pad_c(be2)
    zeros = jnp.zeros((1, Cp), jnp.float32)    # dummy scale/shift for pass 1

    # NHWC, spatial halo, bf16 for the MXU.
    x = jnp.transpose(x_nchw, (0, 2, 3, 1)).astype(compute_dtype)
    x_pad = jnp.pad(x, ((0, 0), (1, 1), (1, 1), (0, 0)))

    tap1 = force_tap_dots or (Cin >= 16)
    tap2 = force_tap_dots or (Cout >= 16)

    # Pass 1: conv1 + packed partial BN1 statistics.
    c1, st1 = _conv3x3_with_stats(
        x_pad, w1_k, b1_k, zeros, zeros, H=H, W=W, tile_h=tile_h, cin_k=Cin,
        apply_input_bnrelu=False, use_tap_dots=tap1, use_halo=use_halo,
        out_dtype=compute_dtype, vmem_cap=vmem_cap)
    scale1, shift1 = _finalize_bn(st1, g1_p, be1_p, count)

    # TODO(synk): this pad is still a full HBM round trip of c1; folding it into
    # pass 1's output layout needs element-offset output windows.
    c1_pad = jnp.pad(c1, ((0, 0), (1, 1), (1, 1), (0, 0)))

    # Pass 2: fused BN1+ReLU on the input, conv2, packed partial BN2 statistics.
    c2, st2 = _conv3x3_with_stats(
        c1_pad, w2_k, b2_k, scale1, shift1, H=H, W=W, tile_h=tile_h, cin_k=Cout,
        apply_input_bnrelu=True, use_tap_dots=tap2, use_halo=use_halo,
        out_dtype=compute_dtype, vmem_cap=vmem_cap)
    scale2, shift2 = _finalize_bn(st2, g2_p, be2_p, count)

    # Pass 3: pointwise BN2 + ReLU; channel un-padding folded into the kernel.
    y = _bnrelu(c2, scale2, shift2, tile_h=tile_h, cout=Cout,
                out_dtype=x_nchw.dtype, vmem_cap=vmem_cap)
    return jnp.transpose(y, (0, 3, 1, 2))      # single boundary transpose


# --------------------------------------------------------------------------
# Plain-JAX reference (matches the PyTorch forward, training-mode BN)
# --------------------------------------------------------------------------
def _reference(x_nchw, params):
    w1, b1, g1, be1, w2, b2, g2, be2 = params

    def block(x, w, b, g, be):
        y = lax.conv_general_dilated(
            x, w, window_strides=(1, 1), padding=((1, 1), (1, 1)),
            dimension_numbers=("NCHW", "OIHW", "NCHW"),
            precision=lax.Precision.HIGHEST)
        y = y + b[None, :, None, None]
        m = jnp.mean(y, axis=(0, 2, 3), keepdims=True)
        v = jnp.mean((y - m) ** 2, axis=(0, 2, 3), keepdims=True)
        y = (y - m) * lax.rsqrt(v + _EPS) * g[None, :, None, None] \
            + be[None, :, None, None]
        return jnp.maximum(y, 0.0)

    return block(block(x_nchw, w1, b1, g1, be1), w2, b2, g2, be2)


if __name__ == "__main__":
    N, Cin, Cout, H, W = 2, 4, 8, 16, 16
    key = jax.random.PRNGKey(0)
    ks = jax.random.split(key, 9)

    x = jax.random.normal(ks[0], (N, Cin, H, W), jnp.float32)
    w1 = 0.1 * jax.random.normal(ks[1], (Cout, Cin, 3, 3), jnp.float32)
    b1 = 0.1 * jax.random.normal(ks[2], (Cout,), jnp.float32)
    g1 = 1.0 + 0.1 * jax.random.normal(ks[3], (Cout,), jnp.float32)
    be1 = 0.1 * jax.random.normal(ks[4], (Cout,), jnp.float32)
    w2 = 0.1 * jax.random.normal(ks[5], (Cout, Cout, 3, 3), jnp.float32)
    b2 = 0.1 * jax.random.normal(ks[6], (Cout,), jnp.float32)
    g2 = 1.0 + 0.1 * jax.random.normal(ks[7], (Cout,), jnp.float32)
    be2 = 0.1 * jax.random.normal(ks[8], (Cout,), jnp.float32)
    params = (w1, b1, g1, be1, w2, b2, g2, be2)

    ref = np.asarray(_reference(x, params))

    def run(**kw):
        fn = jax.jit(functools.partial(conv_block_forward, max_tile_h=8, **kw))
        return np.asarray(jax.block_until_ready(fn(x, params)))

    # Main path: row-halo (pl.Element) input windows.  If the installed Pallas
    # cannot lower element-offset windows, fall back to the resident-image
    # BlockSpec (identical math, just more VMEM).
    halo_ok = True
    try:
        out = run(use_halo=True)
    except Exception:
        halo_ok = False
        out = run(use_halo=False)

    # bf16 MXU inputs vs. f32 (HIGHEST) reference through two convs and two
    # batch-norm normalizations -> loosened tolerance; real bugs are O(1) off.
    np.testing.assert_allclose(out, ref, atol=8e-2, rtol=8e-2)

    # Also exercise the per-tap accumulating-dot path (the one real channel
    # counts take; the tiny demo otherwise uses the concatenated matmul).
    out_tap = run(use_halo=halo_ok, force_tap_dots=True)
    np.testing.assert_allclose(out_tap, ref, atol=8e-2, rtol=8e-2)

    print("KERNEL_OK")
</pallas_src>

<mosaic_0001>
module attributes {stable_mosaic.version = 11 : i64} {
  func.func @_conv3x3_stats_kernel(%arg0: i32, %arg1: i32, %arg2: memref<1x18x18x4xbf16, #tpu.memory_space<vmem>>, %arg3: memref<36x128xbf16, #tpu.memory_space<vmem>>, %arg4: memref<1x128xf32, #tpu.memory_space<vmem>>, %arg5: memref<1x128xf32, #tpu.memory_space<vmem>>, %arg6: memref<1x128xf32, #tpu.memory_space<vmem>>, %arg7: memref<1x8x16x128xbf16, #tpu.memory_space<vmem>>, %arg8: memref<1x1x2x128xf32, #tpu.memory_space<vmem>>) attributes {dimension_semantics = [#tpu.dimension_semantics<parallel>, #tpu.dimension_semantics<parallel>], iteration_bounds = array<i64: 2, 2>, scalar_prefetch = 0 : i64, scratch_operands = 0 : i64, tpu.core_type = #tpu.core_type<tc>, window_params = [{transform_indices = @transform_0, window_bounds = array<i64: 1, 18, 18, 4>}, {pipeline_mode = #tpu.pipeline_mode<synchronous>, transform_indices = @transform_1, window_bounds = array<i64: 36, 128>}, {pipeline_mode = #tpu.pipeline_mode<synchronous>, transform_indices = @transform_2, window_bounds = array<i64: 1, 128>}, {pipeline_mode = #tpu.pipeline_mode<synchronous>, transform_indices = @transform_3, window_bounds = array<i64: 1, 128>}, {pipeline_mode = #tpu.pipeline_mode<synchronous>, transform_indices = @transform_4, window_bounds = array<i64: 1, 128>}, {transform_indices = @transform_5, window_bounds = array<i64: 1, 8, 16, 128>}, {transform_indices = @transform_6, window_bounds = array<i64: 1, 1, 2, 128>}]} {
    %c8_i32 = arith.constant 8 : i32
    %0 = arith.muli %arg1, %c8_i32 : i32
    %1 = tpu.assume_multiple %0, 8 : i32
    %c0 = arith.constant 0 : index
    %2 = arith.index_cast %1 : i32 to index
    %c0_0 = arith.constant 0 : index
    %c0_1 = arith.constant 0 : index
    %3 = vector.load %arg2[%c0, %2, %c0_0, %c0_1] : memref<1x18x18x4xbf16, #tpu.memory_space<vmem>>, vector<1x10x18x4xbf16>
    %4 = vector.shape_cast %3 : vector<1x10x18x4xbf16> to vector<10x18x4xbf16>
    %5 = vector.extract_strided_slice %4 {offsets = [0, 0, 0], sizes = [8, 16, 4], strides = [1, 1, 1]} : vector<10x18x4xbf16> to vector<8x16x4xbf16>
    %6 = vector.extract_strided_slice %4 {offsets = [0, 1, 0], sizes = [8, 16, 4], strides = [1, 1, 1]} : vector<10x18x4xbf16> to vector<8x16x4xbf16>
    %7 = vector.extract_strided_slice %4 {offsets = [0, 2, 0], sizes = [8, 16, 4], strides = [1, 1, 1]} : vector<10x18x4xbf16> to vector<8x16x4xbf16>
    %8 = vector.extract_strided_slice %4 {offsets = [1, 0, 0], sizes = [8, 16, 4], strides = [1, 1, 1]} : vector<10x18x4xbf16> to vector<8x16x4xbf16>
    %9 = vector.extract_strided_slice %4 {offsets = [1, 1, 0], sizes = [8, 16, 4], strides = [1, 1, 1]} : vector<10x18x4xbf16> to vector<8x16x4xbf16>
    %10 = vector.extract_strided_slice %4 {offsets = [1, 2, 0], sizes = [8, 16, 4], strides = [1, 1, 1]} : vector<10x18x4xbf16> to vector<8x16x4xbf16>
    %11 = vector.extract_strided_slice %4 {offsets = [2, 0, 0], sizes = [8, 16, 4], strides = [1, 1, 1]} : vector<10x18x4xbf16> to vector<8x16x4xbf16>
    %12 = vector.extract_strided_slice %4 {offsets = [2, 1, 0], sizes = [8, 16, 4], strides = [1, 1, 1]} : vector<10x18x4xbf16> to vector<8x16x4xbf16>
    %13 = vector.extract_strided_slice %4 {offsets = [2, 2, 0], sizes = [8, 16, 4], strides = [1, 1, 1]} : vector<10x18x4xbf16> to vector<8x16x4xbf16>
    %14 = tpu.concatenate %5, %6, %7, %8, %9, %10, %11, %12, %13 in 2 : vector<8x16x4xbf16>, vector<8x16x4xbf16>, vector<8x16x4xbf16>, vector<8x16x4xbf16>, vector<8x16x4xbf16>, vector<8x16x4xbf16>, vector<8x16x4xbf16>, vector<8x16x4xbf16>, vector<8x16x4xbf16> -> vector<8x16x36xbf16>
    %15 = vector.shape_cast %14 : vector<8x16x36xbf16> to vector<128x36xbf16>
    %c0_2 = arith.constant 0 : index
    %c0_3 = arith.constant 0 : index
    %16 = vector.load %arg3[%c0_2, %c0_3] : memref<36x128xbf16, #tpu.memory_space<vmem>>, vector<36x128xbf16>
    %cst = arith.constant dense<0.000000e+00> : vector<128x128xf32>
    %17 = tpu.matmul %15, %16, %cst {dimension_numbers = #tpu.dot_dimension_numbers<[1], [0], [0], [1], [0, 0, 1, 1], [], []>} : vector<128x36xbf16>, vector<36x128xbf16>, vector<128x128xf32> -> vector<128x128xf32>
    %c0_4 = arith.constant 0 : index
    %c0_5 = arith.constant 0 : index
    %18 = vector.load %arg4[%c0_4, %c0_5] : memref<1x128xf32, #tpu.memory_space<vmem>>, vector<1x128xf32>
    %19 = vector.broadcast %18 : vector<1x128xf32> to vector<128x128xf32>
    %20 = arith.addf %17, %19 : vector<128x128xf32>
    %21 = arith.truncf %20 : vector<128x128xf32> to vector<128x128xbf16>
    %22 = vector.shape_cast %21 : vector<128x128xbf16> to vector<1x8x16x128xbf16>
    %c0_6 = arith.constant 0 : index
    %c0_7 = arith.constant 0 : index
    %c0_8 = arith.constant 0 : index
    %c0_9 = arith.constant 0 : index
    %23 = vector.load %arg7[%c0_6, %c0_7, %c0_8, %c0_9] : memref<1x8x16x128xbf16, #tpu.memory_space<vmem>>, vector<1x8x16x128xbf16>
    tpu.vector_store %arg7[%c0_6, %c0_7, %c0_8, %c0_9], %22 {strides = array<i32>} : memref<1x8x16x128xbf16, #tpu.memory_space<vmem>>, vector<1x8x16x128xbf16>,
    %24 = arith.extf %21 : vector<128x128xbf16> to vector<128x128xf32>
    %cst_10 = arith.constant dense<0.000000e+00> : vector<128xf32>
    %25 = vector.multi_reduction <add>, %24, %cst_10 [0] : vector<128x128xf32> to vector<128xf32>
    %26 = vector.shape_cast %25 : vector<128xf32> to vector<1x128xf32>
    %27 = arith.mulf %24, %24 : vector<128x128xf32>
    %cst_11 = arith.constant dense<0.000000e+00> : vector<128xf32>
    %28 = vector.multi_reduction <add>, %27, %cst_11 [0] : vector<128x128xf32> to vector<128xf32>
    %29 = vector.shape_cast %28 : vector<128xf32> to vector<1x128xf32>
    %30 = tpu.concatenate %26, %29 in 0 : vector<1x128xf32>, vector<1x128xf32> -> vector<2x128xf32>
    %31 = vector.shape_cast %30 : vector<2x128xf32> to vector<1x1x2x128xf32>
    %c0_12 = arith.constant 0 : index
    %c0_13 = arith.constant 0 : index
    %c0_14 = arith.constant 0 : index
    %c0_15 = arith.constant 0 : index
    %32 = vector.load %arg8[%c0_12, %c0_13, %c0_14, %c0_15] : memref<1x1x2x128xf32, #tpu.memory_space<vmem>>, vector<1x1x2x128xf32>
    tpu.vector_store %arg8[%c0_12, %c0_13, %c0_14, %c0_15], %31 {strides = array<i32>} : memref<1x1x2x128xf32, #tpu.memory_space<vmem>>, vector<1x1x2x128xf32>,
    return
  }
  func.func @transform_0(%arg0: i32, %arg1: i32) -> (i32, i32, i32, i32) {
    %c0_i32 = arith.constant 0 : i32
    %c0_i32_0 = arith.constant 0 : i32
    %c0_i32_1 = arith.constant 0 : i32
    %c0_i32_2 = arith.constant 0 : i32
    return %arg0, %c0_i32, %c0_i32_0, %c0_i32_1 : i32, i32, i32, i32
  }
  func.func @transform_1(%arg0: i32, %arg1: i32) -> (i32, i32) {
    %c0_i32 = arith.constant 0 : i32
    %c0_i32_0 = arith.constant 0 : i32
    %c0_i32_1 = arith.constant 0 : i32
    return %c0_i32, %c0_i32_0 : i32, i32
  }
  func.func @transform_2(%arg0: i32, %arg1: i32) -> (i32, i32) {
    %c0_i32 = arith.constant 0 : i32
    %c0_i32_0 = arith.constant 0 : i32
    %c0_i32_1 = arith.constant 0 : i32
    return %c0_i32, %c0_i32_0 : i32, i32
  }
  func.func @transform_3(%arg0: i32, %arg1: i32) -> (i32, i32) {
    %c0_i32 = arith.constant 0 : i32
    %c0_i32_0 = arith.constant 0 : i32
    %c0_i32_1 = arith.constant 0 : i32
    return %c0_i32, %c0_i32_0 : i32, i32
  }
  func.func @transform_4(%arg0: i32, %arg1: i32) -> (i32, i32) {
    %c0_i32 = arith.constant 0 : i32
    %c0_i32_0 = arith.constant 0 : i32
    %c0_i32_1 = arith.constant 0 : i32
    return %c0_i32, %c0_i32_0 : i32, i32
  }
  func.func @transform_5(%arg0: i32, %arg1: i32) -> (i32, i32, i32, i32) {
    %c0_i32 = arith.constant 0 : i32
    %c0_i32_0 = arith.constant 0 : i32
    %c0_i32_1 = arith.constant 0 : i32
    return %arg0, %arg1, %c0_i32, %c0_i32_0 : i32, i32, i32, i32
  }
  func.func @transform_6(%arg0: i32, %arg1: i32) -> (i32, i32, i32, i32) {
    %c0_i32 = arith.constant 0 : i32
    %c0_i32_0 = arith.constant 0 : i32
    %c0_i32_1 = arith.constant 0 : i32
    return %arg0, %arg1, %c0_i32, %c0_i32_0 : i32, i32, i32, i32
  }
}

module attributes {stable_mosaic.version = 11 : i64} {
  func.func @_conv3x3_stats_kernel(%arg0: i32, %arg1: i32, %arg2: memref<1x18x18x128xbf16, #tpu.memory_space<vmem>>, %arg3: memref<72x128xbf16, #tpu.memory_space<vmem>>, %arg4: memref<1x128xf32, #tpu.memory_space<vmem>>, %arg5: memref<1x128xf32, #tpu.memory_space<vmem>>, %arg6: memref<1x128xf32, #tpu.memory_space<vmem>>, %arg7: memref<1x8x16x128xbf16, #tpu.memory_space<vmem>>, %arg8: memref<1x1x2x128xf32, #tpu.memory_space<vmem>>) attributes {dimension_semantics = [#tpu.dimension_semantics<parallel>, #tpu.dimension_semantics<parallel>], iteration_bounds = array<i64: 2, 2>, scalar_prefetch = 0 : i64, scratch_operands = 0 : i64, tpu.core_type = #tpu.core_type<tc>, window_params = [{transform_indices = @transform_0, window_bounds = array<i64: 1, 18, 18, 128>}, {pipeline_mode = #tpu.pipeline_mode<synchronous>, transform_indices = @transform_1, window_bounds = array<i64: 72, 128>}, {pipeline_mode = #tpu.pipeline_mode<synchronous>, transform_indices = @transform_2, window_bounds = array<i64: 1, 128>}, {pipeline_mode = #tpu.pipeline_mode<synchronous>, transform_indices = @transform_3, window_bounds = array<i64: 1, 128>}, {pipeline_mode = #tpu.pipeline_mode<synchronous>, transform_indices = @transform_4, window_bounds = array<i64: 1, 128>}, {transform_indices = @transform_5, window_bounds = array<i64: 1, 8, 16, 128>}, {transform_indices = @transform_6, window_bounds = array<i64: 1, 1, 2, 128>}]} {
    %c8_i32 = arith.constant 8 : i32
    %0 = arith.muli %arg1, %c8_i32 : i32
    %1 = tpu.assume_multiple %0, 8 : i32
    %c0 = arith.constant 0 : index
    %2 = arith.index_cast %1 : i32 to index
    %c0_0 = arith.constant 0 : index
    %c0_1 = arith.constant 0 : index
    %3 = vector.load %arg2[%c0, %2, %c0_0, %c0_1] : memref<1x18x18x128xbf16, #tpu.memory_space<vmem>>, vector<1x10x18x128xbf16>
    %4 = vector.shape_cast %3 : vector<1x10x18x128xbf16> to vector<10x18x128xbf16>
    %5 = vector.extract_strided_slice %4 {offsets = [0, 0, 0], sizes = [10, 18, 8], strides = [1, 1, 1]} : vector<10x18x128xbf16> to vector<10x18x8xbf16>
    %c0_2 = arith.constant 0 : index
    %c0_3 = arith.constant 0 : index
    %6 = vector.load %arg5[%c0_2, %c0_3] : memref<1x128xf32, #tpu.memory_space<vmem>>, vector<1x8xf32>
    %7 = vector.shape_cast %6 : vector<1x8xf32> to vector<8xf32>
    %8 = vector.shape_cast %7 : vector<8xf32> to vector<1x1x8xf32>
    %c0_4 = arith.constant 0 : index
    %c0_5 = arith.constant 0 : index
    %9 = vector.load %arg6[%c0_4, %c0_5] : memref<1x128xf32, #tpu.memory_space<vmem>>, vector<1x8xf32>
    %10 = vector.shape_cast %9 : vector<1x8xf32> to vector<8xf32>
    %11 = vector.shape_cast %10 : vector<8xf32> to vector<1x1x8xf32>
    %12 = arith.extf %5 : vector<10x18x8xbf16> to vector<10x18x8xf32>
    %13 = vector.broadcast %8 : vector<1x1x8xf32> to vector<10x18x8xf32>
    %14 = arith.mulf %12, %13 : vector<10x18x8xf32>
    %15 = vector.broadcast %11 : vector<1x1x8xf32> to vector<10x18x8xf32>
    %16 = arith.addf %14, %15 : vector<10x18x8xf32>
    %cst = arith.constant 0.000000e+00 : f32
    %17 = vector.broadcast %cst : f32 to vector<10x18x8xf32>
    %18 = arith.maximumf %16, %17 : vector<10x18x8xf32>
    %19 = tpu.iota {dimensions = array<i32: 0>} : vector<10x18x8xi32>
    %20 = vector.broadcast %0 : i32 to vector<10x18x8xi32>
    %21 = arith.addi %19, %20 : vector<10x18x8xi32>
    %22 = tpu.iota {dimensions = array<i32: 1>} : vector<10x18x8xi32>
    %c0_i32 = arith.constant 0 : i32
    %23 = vector.broadcast %c0_i32 : i32 to vector<10x18x8xi32>
    %24 = arith.cmpi sgt, %21, %23 : vector<10x18x8xi32>
    %c17_i32 = arith.constant 17 : i32
    %25 = vector.broadcast %c17_i32 : i32 to vector<10x18x8xi32>
    %26 = arith.cmpi slt, %21, %25 : vector<10x18x8xi32>
    %27 = arith.andi %24, %26 : vector<10x18x8xi1>
    %c0_i32_6 = arith.constant 0 : i32
    %28 = vector.broadcast %c0_i32_6 : i32 to vector<10x18x8xi32>
    %29 = arith.cmpi sgt, %22, %28 : vector<10x18x8xi32>
    %30 = arith.andi %27, %29 : vector<10x18x8xi1>
    %c17_i32_7 = arith.constant 17 : i32
    %31 = vector.broadcast %c17_i32_7 : i32 to vector<10x18x8xi32>
    %32 = arith.cmpi slt, %22, %31 : vector<10x18x8xi32>
    %33 = arith.andi %30, %32 : vector<10x18x8xi1>
    %cst_8 = arith.constant 0.000000e+00 : f32
    %34 = vector.broadcast %cst_8 : f32 to vector<10x18x8xf32>
    %35 = arith.select %33, %18, %34 : vector<10x18x8xi1>, vector<10x18x8xf32>
    %36 = arith.truncf %35 : vector<10x18x8xf32> to vector<10x18x8xbf16>
    %37 = vector.extract_strided_slice %36 {offsets = [0, 0, 0], sizes = [8, 16, 8], strides = [1, 1, 1]} : vector<10x18x8xbf16> to vector<8x16x8xbf16>
    %38 = vector.extract_strided_slice %36 {offsets = [0, 1, 0], sizes = [8, 16, 8], strides = [1, 1, 1]} : vector<10x18x8xbf16> to vector<8x16x8xbf16>
    %39 = vector.extract_strided_slice %36 {offsets = [0, 2, 0], sizes = [8, 16, 8], strides = [1, 1, 1]} : vector<10x18x8xbf16> to vector<8x16x8xbf16>
    %40 = vector.extract_strided_slice %36 {offsets = [1, 0, 0], sizes = [8, 16, 8], strides = [1, 1, 1]} : vector<10x18x8xbf16> to vector<8x16x8xbf16>
    %41 = vector.extract_strided_slice %36 {offsets = [1, 1, 0], sizes = [8, 16, 8], strides = [1, 1, 1]} : vector<10x18x8xbf16> to vector<8x16x8xbf16>
    %42 = vector.extract_strided_slice %36 {offsets = [1, 2, 0], sizes = [8, 16, 8], strides = [1, 1, 1]} : vector<10x18x8xbf16> to vector<8x16x8xbf16>
    %43 = vector.extract_strided_slice %36 {offsets = [2, 0, 0], sizes = [8, 16, 8], strides = [1, 1, 1]} : vector<10x18x8xbf16> to vector<8x16x8xbf16>
    %44 = vector.extract_strided_slice %36 {offsets = [2, 1, 0], sizes = [8, 16, 8], strides = [1, 1, 1]} : vector<10x18x8xbf16> to vector<8x16x8xbf16>
    %45 = vector.extract_strided_slice %36 {offsets = [2, 2, 0], sizes = [8, 16, 8], strides = [1, 1, 1]} : vector<10x18x8xbf16> to vector<8x16x8xbf16>
    %46 = tpu.concatenate %37, %38, %39, %40, %41, %42, %43, %44, %45 in 2 : vector<8x16x8xbf16>, vector<8x16x8xbf16>, vector<8x16x8xbf16>, vector<8x16x8xbf16>, vector<8x16x8xbf16>, vector<8x16x8xbf16>, vector<8x16x8xbf16>, vector<8x16x8xbf16>, vector<8x16x8xbf16> -> vector<8x16x72xbf16>
    %47 = vector.shape_cast %46 : vector<8x16x72xbf16> to vector<128x72xbf16>
    %c0_9 = arith.constant 0 : index
    %c0_10 = arith.constant 0 : index
    %48 = vector.load %arg3[%c0_9, %c0_10] : memref<72x128xbf16, #tpu.memory_space<vmem>>, vector<72x128xbf16>
    %cst_11 = arith.constant dense<0.000000e+00> : vector<128x128xf32>
    %49 = tpu.matmul %47, %48, %cst_11 {dimension_numbers = #tpu.dot_dimension_numbers<[1], [0], [0], [1], [0, 0, 1, 1], [], []>} : vector<128x72xbf16>, vector<72x128xbf16>, vector<128x128xf32> -> vector<128x128xf32>
    %c0_12 = arith.constant 0 : index
    %c0_13 = arith.constant 0 : index
    %50 = vector.load %arg4[%c0_12, %c0_13] : memref<1x128xf32, #tpu.memory_space<vmem>>, vector<1x128xf32>
    %51 = vector.broadcast %50 : vector<1x128xf32> to vector<128x128xf32>
    %52 = arith.addf %49, %51 : vector<128x128xf32>
    %53 = arith.truncf %52 : vector<128x128xf32> to vector<128x128xbf16>
    %54 = vector.shape_cast %53 : vector<128x128xbf16> to vector<1x8x16x128xbf16>
    %c0_14 = arith.constant 0 : index
    %c0_15 = arith.constant 0 : index
    %c0_16 = arith.constant 0 : index
    %c0_17 = arith.constant 0 : index
    %55 = vector.load %arg7[%c0_14, %c0_15, %c0_16, %c0_17] : memref<1x8x16x128xbf16, #tpu.memory_space<vmem>>, vector<1x8x16x128xbf16>
    tpu.vector_store %arg7[%c0_14, %c0_15, %c0_16, %c0_17], %54 {strides = array<i32>} : memref<1x8x16x128xbf16, #tpu.memory_space<vmem>>, vector<1x8x16x128xbf16>,
    %56 = arith.extf %53 : vector<128x128xbf16> to vector<128x128xf32>
    %cst_18 = arith.constant dense<0.000000e+00> : vector<128xf32>
    %57 = vector.multi_reduction <add>, %56, %cst_18 [0] : vector<128x128xf32> to vector<128xf32>
    %58 = vector.shape_cast %57 : vector<128xf32> to vector<1x128xf32>
    %59 = arith.mulf %56, %56 : vector<128x128xf32>
    %cst_19 = arith.constant dense<0.000000e+00> : vector<128xf32>
    %60 = vector.multi_reduction <add>, %59, %cst_19 [0] : vector<128x128xf32> to vector<128xf32>
    %61 = vector.shape_cast %60 : vector<128xf32> to vector<1x128xf32>
    %62 = tpu.concatenate %58, %61 in 0 : vector<1x128xf32>, vector<1x128xf32> -> vector<2x128xf32>
    %63 = vector.shape_cast %62 : vector<2x128xf32> to vector<1x1x2x128xf32>
    %c0_20 = arith.constant 0 : index
    %c0_21 = arith.constant 0 : index
    %c0_22 = arith.constant 0 : index
    %c0_23 = arith.constant 0 : index
    %64 = vector.load %arg8[%c0_20, %c0_21, %c0_22, %c0_23] : memref<1x1x2x128xf32, #tpu.memory_space<vmem>>, vector<1x1x2x128xf32>
    tpu.vector_store %arg8[%c0_20, %c0_21, %c0_22, %c0_23], %63 {strides = array<i32>} : memref<1x1x2x128xf32, #tpu.memory_space<vmem>>, vector<1x1x2x128xf32>,
    return
  }
  func.func @transform_0(%arg0: i32, %arg1: i32) -> (i32, i32, i32, i32) {
    %c0_i32 = arith.constant 0 : i32
    %c0_i32_0 = arith.constant 0 : i32
    %c0_i32_1 = arith.constant 0 : i32
    %c0_i32_2 = arith.constant 0 : i32
    return %arg0, %c0_i32, %c0_i32_0, %c0_i32_1 : i32, i32, i32, i32
  }
  func.func @transform_1(%arg0: i32, %arg1: i32) -> (i32, i32) {
    %c0_i32 = arith.constant 0 : i32
    %c0_i32_0 = arith.constant 0 : i32
    %c0_i32_1 = arith.constant 0 : i32
    return %c0_i32, %c0_i32_0 : i32, i32
  }
  func.func @transform_2(%arg0: i32, %arg1: i32) -> (i32, i32) {
    %c0_i32 = arith.constant 0 : i32
    %c0_i32_0 = arith.constant 0 : i32
    %c0_i32_1 = arith.constant 0 : i32
    return %c0_i32, %c0_i32_0 : i32, i32
  }
  func.func @transform_3(%arg0: i32, %arg1: i32) -> (i32, i32) {
    %c0_i32 = arith.constant 0 : i32
    %c0_i32_0 = arith.constant 0 : i32
    %c0_i32_1 = arith.constant 0 : i32
    return %c0_i32, %c0_i32_0 : i32, i32
  }
  func.func @transform_4(%arg0: i32, %arg1: i32) -> (i32, i32) {
    %c0_i32 = arith.constant 0 : i32
    %c0_i32_0 = arith.constant 0 : i32
    %c0_i32_1 = arith.constant 0 : i32
    return %c0_i32, %c0_i32_0 : i32, i32
  }
  func.func @transform_5(%arg0: i32, %arg1: i32) -> (i32, i32, i32, i32) {
    %c0_i32 = arith.constant 0 : i32
    %c0_i32_0 = arith.constant 0 : i32
    %c0_i32_1 = arith.constant 0 : i32
    return %arg0, %arg1, %c0_i32, %c0_i32_0 : i32, i32, i32, i32
  }
  func.func @transform_6(%arg0: i32, %arg1: i32) -> (i32, i32, i32, i32) {
    %c0_i32 = arith.constant 0 : i32
    %c0_i32_0 = arith.constant 0 : i32
    %c0_i32_1 = arith.constant 0 : i32
    return %arg0, %arg1, %c0_i32, %c0_i32_0 : i32, i32, i32, i32
  }
}

module attributes {stable_mosaic.version = 11 : i64} {
  func.func @_bnrelu_kernel(%arg0: i32, %arg1: i32, %arg2: memref<1x8x16x128xbf16, #tpu.memory_space<vmem>>, %arg3: memref<1x128xf32, #tpu.memory_space<vmem>>, %arg4: memref<1x128xf32, #tpu.memory_space<vmem>>, %arg5: memref<1x8x16x8xf32, #tpu.memory_space<vmem>>) attributes {dimension_semantics = [#tpu.dimension_semantics<parallel>, #tpu.dimension_semantics<parallel>], iteration_bounds = array<i64: 2, 2>, scalar_prefetch = 0 : i64, scratch_operands = 0 : i64, tpu.core_type = #tpu.core_type<tc>, window_params = [{transform_indices = @transform_0, window_bounds = array<i64: 1, 8, 16, 128>}, {pipeline_mode = #tpu.pipeline_mode<synchronous>, transform_indices = @transform_1, window_bounds = array<i64: 1, 128>}, {pipeline_mode = #tpu.pipeline_mode<synchronous>, transform_indices = @transform_2, window_bounds = array<i64: 1, 128>}, {transform_indices = @transform_3, window_bounds = array<i64: 1, 8, 16, 8>}]} {
    %c0 = arith.constant 0 : index
    %c0_0 = arith.constant 0 : index
    %c0_1 = arith.constant 0 : index
    %c0_2 = arith.constant 0 : index
    %0 = vector.load %arg2[%c0, %c0_0, %c0_1, %c0_2] : memref<1x8x16x128xbf16, #tpu.memory_space<vmem>>, vector<1x8x16x8xbf16>
    %1 = vector.shape_cast %0 : vector<1x8x16x8xbf16> to vector<8x16x8xbf16>
    %2 = arith.extf %1 : vector<8x16x8xbf16> to vector<8x16x8xf32>
    %c0_3 = arith.constant 0 : index
    %c0_4 = arith.constant 0 : index
    %3 = vector.load %arg3[%c0_3, %c0_4] : memref<1x128xf32, #tpu.memory_space<vmem>>, vector<1x8xf32>
    %4 = vector.shape_cast %3 : vector<1x8xf32> to vector<8xf32>
    %5 = vector.shape_cast %4 : vector<8xf32> to vector<1x1x8xf32>
    %6 = vector.broadcast %5 : vector<1x1x8xf32> to vector<8x16x8xf32>
    %7 = arith.mulf %2, %6 : vector<8x16x8xf32>
    %c0_5 = arith.constant 0 : index
    %c0_6 = arith.constant 0 : index
    %8 = vector.load %arg4[%c0_5, %c0_6] : memref<1x128xf32, #tpu.memory_space<vmem>>, vector<1x8xf32>
    %9 = vector.shape_cast %8 : vector<1x8xf32> to vector<8xf32>
    %10 = vector.shape_cast %9 : vector<8xf32> to vector<1x1x8xf32>
    %11 = vector.broadcast %10 : vector<1x1x8xf32> to vector<8x16x8xf32>
    %12 = arith.addf %7, %11 : vector<8x16x8xf32>
    %cst = arith.constant 0.000000e+00 : f32
    %13 = vector.broadcast %cst : f32 to vector<8x16x8xf32>
    %14 = arith.maximumf %12, %13 : vector<8x16x8xf32>
    %15 = vector.shape_cast %14 : vector<8x16x8xf32> to vector<1x8x16x8xf32>
    %c0_7 = arith.constant 0 : index
    %c0_8 = arith.constant 0 : index
    %c0_9 = arith.constant 0 : index
    %c0_10 = arith.constant 0 : index
    %16 = vector.load %arg5[%c0_7, %c0_8, %c0_9, %c0_10] : memref<1x8x16x8xf32, #tpu.memory_space<vmem>>, vector<1x8x16x8xf32>
    tpu.vector_store %arg5[%c0_7, %c0_8, %c0_9, %c0_10], %15 {strides = array<i32>} : memref<1x8x16x8xf32, #tpu.memory_space<vmem>>, vector<1x8x16x8xf32>,
    return
  }
  func.func @transform_0(%arg0: i32, %arg1: i32) -> (i32, i32, i32, i32) {
    %c0_i32 = arith.constant 0 : i32
    %c0_i32_0 = arith.constant 0 : i32
    %c0_i32_1 = arith.constant 0 : i32
    return %arg0, %arg1, %c0_i32, %c0_i32_0 : i32, i32, i32, i32
  }
  func.func @transform_1(%arg0: i32, %arg1: i32) -> (i32, i32) {
    %c0_i32 = arith.constant 0 : i32
    %c0_i32_0 = arith.constant 0 : i32
    %c0_i32_1 = arith.constant 0 : i32
    return %c0_i32, %c0_i32_0 : i32, i32
  }
  func.func @transform_2(%arg0: i32, %arg1: i32) -> (i32, i32) {
    %c0_i32 = arith.constant 0 : i32
    %c0_i32_0 = arith.constant 0 : i32
    %c0_i32_1 = arith.constant 0 : i32
    return %c0_i32, %c0_i32_0 : i32, i32
  }
  func.func @transform_3(%arg0: i32, %arg1: i32) -> (i32, i32, i32, i32) {
    %c0_i32 = arith.constant 0 : i32
    %c0_i32_0 = arith.constant 0 : i32
    %c0_i32_1 = arith.constant 0 : i32
    return %arg0, %arg1, %c0_i32, %c0_i32_0 : i32, i32, i32, i32
  }
}

</mosaic_0001>

<llo_original>
// kernel: conv_block_forward.5
$region0: #{conv_block_forward.5}
  #allocation0 [shape = 'u32[]', space=smem, size = 0x4, offset = 0x4, fixed_abs, tag = 'smem constant byte address 0x4 - core index']
  #allocation1 [shape = 'u32[144,128]{1,0:T(1,128)}', space=vmem, size = 0x12000, scoped, tag = 'internal scratch']
  %s0 = inlined_call_operand.vmem [shape: bf16[2,16,16,128], index: 0, kind: input, shape index: {}]
  %s1 = inlined_call_operand.vmem [shape: f32[1,128], index: 1, kind: input, shape index: {}]
  %s2 = inlined_call_operand.vmem [shape: f32[1,128], index: 2, kind: input, shape index: {}]
  %s3 = inlined_call_operand.vmem [shape: f32[2,16,16,8], index: 3, kind: output, shape index: {}]
  %s4 = sld [smem:[#allocation0]]
  $region45: #{conv_block_forward.5} parent=0
    _
  %s6 = ssub.s32 1, %s4
  %s7 = scalar_select 0, %s6, %s4
  loop: start=0, step=1, limit=6
  $region2: #{conv_block_forward.5} parent=0 // loop_pre_header
    _
  $region3: #{conv_block_forward.5} parent=0 // loop_header
    %s9 = sphi 0, %s13
    %p10 = scmp.ge.s32.totalorder %s9, 6
    %s16 = sphi 0, %s28
    %s17 = sphi 0, %s24
    %s18 = sphi 0, %s16
    %s19 = sphi 0, %s17
    %s20 = sphi 0, %s18
    %s21 = sphi 0, %s19
    %s33 = sphi 0, %s35
    %s36 = sphi 0, %s33
    %s37 = sphi 0, %s36
    %s53 = sphi 0, %s37
    %s57 = sphi 0, %s57
    %s59 = sphi 0, %s57
    %s60 = sphi 0, %s59
    %s74 = sphi 0, %s60
    %s78 = sphi 0, %s78
    %s80 = sphi 0, %s78
    %s81 = sphi 0, %s80
    %s95 = sphi 0, %s81
    %s103 = sphi 0, %s105
    %s106 = sphi 0, %s103
    %s107 = sphi 0, %s106
    %s123 = sphi 0, %s107
  $region4: #{conv_block_forward.5} parent=0 // loop_header_branch
    %12 = sbr.rel (%p10) target = $region8
  $region5: #{conv_block_forward.5} parent=0 // loop_body
    %s14 = ssub.s32 %s9, 1
    %s15 = ssub.s32 %s9, 2
    %s22 = sadd.s32 1, %s17
    %p23 = scmp.ge.s32.totalorder %s22, 2
    %s24 = scalar_select %p23, 0, %s22
    %s25 = sadd.s32 1, %s16
    %s26 = scalar_select %p23, %s25, %s16
    %p27 = scmp.ge.s32.totalorder %s26, 2
    %s28 = scalar_select %p27, 0, %s26
    %s29 = ssub.s32 %s16, %s28
    %s30 = ssub.s32 %s17, %s24
    %s31 = sor.u32 %s29, %s30
    %p32 = scmp.eq.s32.totalorder %s31, 0
    %s34 = sadd.s32 %s33, 1
    %s35 = scalar_select %p32, %s33, %s34
    %p38 = pneg %p32
    %p39 = scmp.eq.s32.totalorder %s9, 3
    %p40 = por %p38, %p39
    %p41 = scmp.ne.s32.totalorder %s33, %s36
    %p42 = scmp.eq.s32.totalorder %s9, 0
    %p43 = por %p41, %p42
    %p44 = scmp.ne.s32.totalorder %s33, %s36
    %p45 = scmp.eq.s32.totalorder %s14, 3
    %p46 = por %p44, %p45
    %p47 = scmp.ne.s32.totalorder %s36, %s37
    %p48 = scmp.eq.s32.totalorder %s14, 0
    %p49 = por %p47, %p48
    %p50 = scmp.ne.s32.totalorder %s36, %s37
    %p51 = scmp.eq.s32.totalorder %s15, 3
    %p52 = por %p50, %p51
    %p54 = scmp.ne.s32.totalorder %s37, %s53
    %p55 = scmp.eq.s32.totalorder %s15, 0
    %p56 = por %p54, %p55
    %s58 = sadd.s32 %s57, 1
    %p61 = scmp.eq.s32.totalorder %s9, 3
    %p62 = scmp.ne.s32.totalorder %s57, %s59
    %p63 = scmp.eq.s32.totalorder %s9, 0
    %p64 = por %p62, %p63
    %p65 = scmp.ne.s32.totalorder %s57, %s59
    %p66 = scmp.eq.s32.totalorder %s14, 3
    %p67 = por %p65, %p66
    %p68 = scmp.ne.s32.totalorder %s59, %s60
    %p69 = scmp.eq.s32.totalorder %s14, 0
    %p70 = por %p68, %p69
    %p71 = scmp.ne.s32.totalorder %s59, %s60
    %p72 = scmp.eq.s32.totalorder %s15, 3
    %p73 = por %p71, %p72
    %p75 = scmp.ne.s32.totalorder %s60, %s74
    %p76 = scmp.eq.s32.totalorder %s15, 0
    %p77 = por %p75, %p76
    %s79 = sadd.s32 %s78, 1
    %p82 = scmp.eq.s32.totalorder %s9, 3
    %p83 = scmp.ne.s32.totalorder %s78, %s80
    %p84 = scmp.eq.s32.totalorder %s9, 0
    %p85 = por %p83, %p84
    %p86 = scmp.ne.s32.totalorder %s78, %s80
    %p87 = scmp.eq.s32.totalorder %s14, 3
    %p88 = por %p86, %p87
    %p89 = scmp.ne.s32.totalorder %s80, %s81
    %p90 = scmp.eq.s32.totalorder %s14, 0
    %p91 = por %p89, %p90
    %p92 = scmp.ne.s32.totalorder %s80, %s81
    %p93 = scmp.eq.s32.totalorder %s15, 3
    %p94 = por %p92, %p93
    %p96 = scmp.ne.s32.totalorder %s81, %s95
    %p97 = scmp.eq.s32.totalorder %s15, 0
    %p98 = por %p96, %p97
    %s99 = ssub.s32 %s16, %s28
    %s100 = ssub.s32 %s17, %s24
    %s101 = sor.u32 %s99, %s100
    %p102 = scmp.eq.s32.totalorder %s101, 0
    %s104 = sadd.s32 %s103, 1
    %s105 = scalar_select %p102, %s103, %s104
    %p108 = pneg %p102
    %p109 = scmp.eq.s32.totalorder %s9, 3
    %p110 = por %p108, %p109
    %p111 = scmp.ne.s32.totalorder %s103, %s106
    %p112 = scmp.eq.s32.totalorder %s9, 0
    %p113 = por %p111, %p112
    %p114 = scmp.ne.s32.totalorder %s103, %s106
    %p115 = scmp.eq.s32.totalorder %s14, 3
    %p116 = por %p114, %p115
    %p117 = scmp.ne.s32.totalorder %s106, %s107
    %p118 = scmp.eq.s32.totalorder %s14, 0
    %p119 = por %p117, %p118
    %p120 = scmp.ne.s32.totalorder %s106, %s107
    %p121 = scmp.eq.s32.totalorder %s15, 3
    %p122 = por %p120, %p121
    %p124 = scmp.ne.s32.totalorder %s107, %s123
    %p125 = scmp.eq.s32.totalorder %s15, 0
    %p126 = por %p124, %p125
    %p127 = scmp.le.s32.totalorder 1, %s9
    %p128 = scmp.lt.s32.totalorder %s9, 5
    %p129 = pnand %p127, %p128
    %p130 = pneg %p129
    // Predicated region
    $region9: #{conv_block_forward.5} parent=5 // pred_check
      _
    $region10: #{conv_block_forward.5} parent=5 // pred_check_branch
      %132 = sbr.rel (%p129) target = $region12
    $region11: #{conv_block_forward.5} parent=5 // pred_region
      %s133 = ssub.s32 %s9, 1
      // Predicated region
      $region13: #{conv_block_forward.5} parent=11 // pred_check
        %p134 = pneg %p70
      $region14: #{conv_block_forward.5} parent=11 // pred_check_branch
        %136 = sbr.rel (%p134) target = $region16
      $region15: #{conv_block_forward.5} parent=11 // pred_region
        _
      $region16: #{conv_block_forward.5} parent=11 // pred_fallthru
        _
      // Predicated region
      $region17: #{conv_block_forward.5} parent=11 // pred_check
        %p137 = pneg %p91
      $region18: #{conv_block_forward.5} parent=11 // pred_check_branch
        %139 = sbr.rel (%p137) target = $region20
      $region19: #{conv_block_forward.5} parent=11 // pred_region
        _
      $region20: #{conv_block_forward.5} parent=11 // pred_fallthru
        _
    $region12: #{conv_block_forward.5} parent=5 // pred_fallthru
      _
    %p140 = scmp.lt.s32.totalorder %s9, 4
    // Predicated region
    $region21: #{conv_block_forward.5} parent=5 // pred_check
      %p141 = pneg %p140
    $region22: #{conv_block_forward.5} parent=5 // pred_check_branch
      %143 = sbr.rel (%p141) target = $region24
    $region23: #{conv_block_forward.5} parent=5 // pred_region
      // Predicated region
      $region25: #{conv_block_forward.5} parent=23 // pred_check
        %p144 = pneg %p43
      $region26: #{conv_block_forward.5} parent=23 // pred_check_branch
        %146 = sbr.rel (%p144) target = $region28
      $region27: #{conv_block_forward.5} parent=23 // pred_region
        %s147 = smul.u32 8, %s17
        %p148 = scmp.lt.s32.totalorder %s16, 1
        %s149 = scalar_select %p148, %s16, 1
        %p150 = scmp.lt.s32.totalorder %s147, 15
        %s151 = scalar_select %p150, %s147, 15
        %s152 = smul.addr %s151, 2
        %s153 = smul.addr %s149, 32
        %s154 = sadd.s32 %s152, %s153
        %s155 = smul.addr %s154, 4
        %s156 = scalar_lea.vmem %s0, %s155
        %s157 = smul.u32 8, %s17
      $region28: #{conv_block_forward.5} parent=23 // pred_fallthru
        _
    $region24: #{conv_block_forward.5} parent=5 // pred_fallthru
      _
    %p158 = scmp.le.s32.totalorder 1, %s9
    %p159 = scmp.lt.s32.totalorder %s9, 5
    %p160 = pnand %p158, %p159
    %p161 = pneg %p160
    // Predicated region
    $region29: #{conv_block_forward.5} parent=5 // pred_check
      _
    $region30: #{conv_block_forward.5} parent=5 // pred_check_branch
      %163 = sbr.rel (%p160) target = $region32
    $region31: #{conv_block_forward.5} parent=5 // pred_region
      %s164 = ssub.s32 %s9, 1
      %s165 = smul.u32 8, %s19
      %p166 = scmp.lt.s32.totalorder %s18, 1
      %s167 = scalar_select %p166, %s18, 1
      %p168 = scmp.lt.s32.totalorder %s165, 15
      %s169 = scalar_select %p168, %s165, 15
      %s170 = smul.addr %s169, 2
      %s171 = smul.addr %s167, 32
      %s172 = sadd.s32 %s170, %s171
      %s173 = smul.addr %s172, 4
      %s174 = scalar_lea.vmem %s0, %s173
      %p175 = pneg %p49
      %p176 = pneg %p46
      %p177 = pneg %p70
      %p178 = pneg %p67
      %p179 = pneg %p91
      %p180 = pneg %p88
      %p181 = pneg %p119
      %p182 = pneg %p116
      %s183 = smul.u32 8, %s19
      %p184 = scmp.lt.s32.totalorder %s18, 1
      %s185 = scalar_select %p184, %s18, 1
      %p186 = scmp.lt.s32.totalorder %s183, 15
      %s187 = scalar_select %p186, %s183, 15
      %s188 = smul.addr %s187, 2
      %s189 = smul.addr %s185, 32
      %s190 = sadd.s32 %s188, %s189
      %s191 = smul.addr %s190, 8
      %s192 = scalar_lea.vmem %s3, %s191
      %s193 = smul.u32 8, %s19
      %p194 = scmp.lt.s32.totalorder %s18, 1
      %s195 = scalar_select %p194, %s18, 1
      %p196 = scmp.lt.s32.totalorder %s193, 15
      %s197 = scalar_select %p196, %s193, 15
      %s198 = smul.addr %s197, 2
      %s199 = smul.addr %s195, 32
      %s200 = sadd.s32 %s198, %s199
      %s201 = smul.addr %s200, 4
      %s202 = scalar_lea.vmem %s0, %s201
      %s203 = smul.u32 8, %s19
      %s204 = smul.u32 8, %s19
      %p205 = scmp.lt.s32.totalorder %s18, 1
      %s206 = scalar_select %p205, %s18, 1
      %p207 = scmp.lt.s32.totalorder %s204, 15
      %s208 = scalar_select %p207, %s204, 15
      %s209 = smul.addr %s208, 2
      %s210 = smul.addr %s206, 32
      %s211 = sadd.s32 %s209, %s210
      %s212 = smul.addr %s211, 8
      %s213 = scalar_lea.vmem %s3, %s212
      %s214 = smul.u32 8, %s19
      %v215 = vld [vmem:[%s202] sm:$0xf]
      %v216 = vld [vmem:[%s202 + $0x4] sm:$0xf]
      %v217 = vld [vmem:[%s202 + $0x8] sm:$0xf]
      %v218 = vld [vmem:[%s202 + $0xc] sm:$0xf]
      %v219 = vld [vmem:[%s202 + $0x10] sm:$0xf]
      %v220 = vld [vmem:[%s202 + $0x14] sm:$0xf]
      %v221 = vld [vmem:[%s202 + $0x18] sm:$0xf]
      %v222 = vld [vmem:[%s202 + $0x1c] sm:$0xf]
      %v223 = vld [vmem:[%s202 + $0x20] sm:$0xf]
      %v224 = vld [vmem:[%s202 + $0x24] sm:$0xf]
      %v225 = vld [vmem:[%s202 + $0x28] sm:$0xf]
      %v226 = vld [vmem:[%s202 + $0x2c] sm:$0xf]
      %v227 = vld [vmem:[%s202 + $0x30] sm:$0xf]
      %v228 = vld [vmem:[%s202 + $0x34] sm:$0xf]
      %v229 = vld [vmem:[%s202 + $0x38] sm:$0xf]
      %v230 = vld [vmem:[%s202 + $0x3c] sm:$0xf]
      %v231 = vunpack.c.l.bf16 %v215
      %v232 = vunpack.c.l.bf16 %v216
      %v233 = vunpack.c.l.bf16 %v217
      %v234 = vunpack.c.l.bf16 %v218
      %v235 = vunpack.c.l.bf16 %v219
      %v236 = vunpack.c.l.bf16 %v220
      %v237 = vunpack.c.l.bf16 %v221
      %v238 = vunpack.c.l.bf16 %v222
      %v239 = vunpack.c.l.bf16 %v223
      %v240 = vunpack.c.l.bf16 %v224
      %v241 = vunpack.c.l.bf16 %v225
      %v242 = vunpack.c.l.bf16 %v226
      %v243 = vunpack.c.l.bf16 %v227
      %v244 = vunpack.c.l.bf16 %v228
      %v245 = vunpack.c.l.bf16 %v229
      %v246 = vunpack.c.l.bf16 %v230
      %v247 = vld [vmem:[%s1] sm:$0x1]
      %v249 = vlaneseq
      %v250 = vshrl.u32 %v249, 7
      %v251 = vsub.s32 0, %v250
      %v252 = vrot.slane %v247, %v251
      %v254 = vmul.f32 %v231, %v252
      %v255 = vmul.f32 %v232, %v252
      %v256 = vmul.f32 %v233, %v252
      %v257 = vmul.f32 %v234, %v252
      %v258 = vmul.f32 %v235, %v252
      %v259 = vmul.f32 %v236, %v252
      %v260 = vmul.f32 %v237, %v252
      %v261 = vmul.f32 %v238, %v252
      %v262 = vmul.f32 %v239, %v252
      %v263 = vmul.f32 %v240, %v252
      %v264 = vmul.f32 %v241, %v252
      %v265 = vmul.f32 %v242, %v252
      %v266 = vmul.f32 %v243, %v252
      %v267 = vmul.f32 %v244, %v252
      %v268 = vmul.f32 %v245, %v252
      %v269 = vmul.f32 %v246, %v252
      %v270 = vld [vmem:[%s2] sm:$0x1]
      %v272 = vlaneseq
      %v273 = vshrl.u32 %v272, 7
      %v274 = vsub.s32 0, %v273
      %v275 = vrot.slane %v270, %v274
      %v277 = vadd.f32 %v254, %v275
      %v278 = vadd.f32 %v255, %v275
      %v279 = vadd.f32 %v256, %v275
      %v280 = vadd.f32 %v257, %v275
      %v281 = vadd.f32 %v258, %v275
      %v282 = vadd.f32 %v259, %v275
      %v283 = vadd.f32 %v260, %v275
      %v284 = vadd.f32 %v261, %v275
      %v285 = vadd.f32 %v262, %v275
      %v286 = vadd.f32 %v263, %v275
      %v287 = vadd.f32 %v264, %v275
      %v288 = vadd.f32 %v265, %v275
      %v289 = vadd.f32 %v266, %v275
      %v290 = vadd.f32 %v267, %v275
      %v291 = vadd.f32 %v268, %v275
      %v292 = vadd.f32 %v269, %v275
      %v293 = vmax.f32 %v277, 0.0
      %v294 = vmax.f32 %v278, 0.0
      %v295 = vmax.f32 %v279, 0.0
      %v296 = vmax.f32 %v280, 0.0
      %v297 = vmax.f32 %v281, 0.0
      %v298 = vmax.f32 %v282, 0.0
      %v299 = vmax.f32 %v283, 0.0
      %v300 = vmax.f32 %v284, 0.0
      %v301 = vmax.f32 %v285, 0.0
      %v302 = vmax.f32 %v286, 0.0
      %v303 = vmax.f32 %v287, 0.0
      %v304 = vmax.f32 %v288, 0.0
      %v305 = vmax.f32 %v289, 0.0
      %v306 = vmax.f32 %v290, 0.0
      %v307 = vmax.f32 %v291, 0.0
      %v308 = vmax.f32 %v292, 0.0
      %vm309 = vcmask 64512
      %310 = vst.msk [vmem:[%s213] sm:$0xff] %vm309, %v293
      %311 = vst.msk [vmem:[%s213 + $0x8] sm:$0xff] %vm309, %v294
      %312 = vst.msk [vmem:[%s213 + $0x10] sm:$0xff] %vm309, %v295
      %313 = vst.msk [vmem:[%s213 + $0x18] sm:$0xff] %vm309, %v296
      %314 = vst.msk [vmem:[%s213 + $0x20] sm:$0xff] %vm309, %v297
      %315 = vst.msk [vmem:[%s213 + $0x28] sm:$0xff] %vm309, %v298
      %316 = vst.msk [vmem:[%s213 + $0x30] sm:$0xff] %vm309, %v299
      %317 = vst.msk [vmem:[%s213 + $0x38] sm:$0xff] %vm309, %v300
      %318 = vst.msk [vmem:[%s213 + $0x40] sm:$0xff] %vm309, %v301
      %319 = vst.msk [vmem:[%s213 + $0x48] sm:$0xff] %vm309, %v302
      %320 = vst.msk [vmem:[%s213 + $0x50] sm:$0xff] %vm309, %v303
      %321 = vst.msk [vmem:[%s213 + $0x58] sm:$0xff] %vm309, %v304
      %322 = vst.msk [vmem:[%s213 + $0x60] sm:$0xff] %vm309, %v305
      %323 = vst.msk [vmem:[%s213 + $0x68] sm:$0xff] %vm309, %v306
      %324 = vst.msk [vmem:[%s213 + $0x70] sm:$0xff] %vm309, %v307
      %325 = vst.msk [vmem:[%s213 + $0x78] sm:$0xff] %vm309, %v308
      %s326 = smul.u32 8, %s19
      %p327 = scmp.lt.s32.totalorder %s18, 1
      %s328 = scalar_select %p327, %s18, 1
      %p329 = scmp.lt.s32.totalorder %s326, 15
      %s330 = scalar_select %p329, %s326, 15
      %s331 = smul.addr %s330, 2
      %s332 = smul.addr %s328, 32
      %s333 = sadd.s32 %s331, %s332
      %s334 = smul.addr %s333, 8
      %s335 = scalar_lea.vmem %s3, %s334
      // Predicated region
      $region33: #{conv_block_forward.5} parent=31 // pred_check
        %p336 = pneg %p116
      $region34: #{conv_block_forward.5} parent=31 // pred_check_branch
        %338 = sbr.rel (%p336) target = $region36
      $region35: #{conv_block_forward.5} parent=31 // pred_region
        %s339 = smul.u32 8, %s19
      $region36: #{conv_block_forward.5} parent=31 // pred_fallthru
        _
    $region32: #{conv_block_forward.5} parent=5 // pred_fallthru
      _
    %p340 = scmp.le.s32.totalorder 2, %s9
    // Predicated region
    $region37: #{conv_block_forward.5} parent=5 // pred_check
      %p341 = pneg %p340
    $region38: #{conv_block_forward.5} parent=5 // pred_check_branch
      %343 = sbr.rel (%p341) target = $region40
    $region39: #{conv_block_forward.5} parent=5 // pred_region
      %s344 = ssub.s32 %s9, 2
      // Predicated region
      $region41: #{conv_block_forward.5} parent=39 // pred_check
        %p345 = pneg %p122
      $region42: #{conv_block_forward.5} parent=39 // pred_check_branch
        %347 = sbr.rel (%p345) target = $region44
      $region43: #{conv_block_forward.5} parent=39 // pred_region
        %s348 = smul.u32 8, %s21
        %p349 = scmp.lt.s32.totalorder %s20, 1
        %s350 = scalar_select %p349, %s20, 1
        %p351 = scmp.lt.s32.totalorder %s348, 15
        %s352 = scalar_select %p351, %s348, 15
        %s353 = smul.addr %s352, 2
        %s354 = smul.addr %s350, 32
        %s355 = sadd.s32 %s353, %s354
        %s356 = smul.addr %s355, 8
        %s357 = scalar_lea.vmem %s3, %s356
      $region44: #{conv_block_forward.5} parent=39 // pred_fallthru
        _
    $region40: #{conv_block_forward.5} parent=5 // pred_fallthru
      _
  $region6: #{conv_block_forward.5} parent=0 // loop_footer
    %s13 = sadd.s32 1, %s9
  $region7: #{conv_block_forward.5} parent=0 // loop_footer_branch
    %8 = sbr.rel target = $region3
  $region8: #{conv_block_forward.5} parent=0 // loop_exit
    _

// kernel: conv_block_forward.3
$region0: #{conv_block_forward.3}
  #allocation0 [shape = 'u32[]', space=smem, size = 0x4, offset = 0x4, fixed_abs, tag = 'smem constant byte address 0x4 - core index']
  #allocation1 [shape = 'u32[144,128]{1,0:T(1,128)}', space=vmem, size = 0x12000, scoped, tag = 'internal scratch']
  %s0 = inlined_call_operand.vmem [shape: bf16[2,18,18,4], index: 0, kind: input, shape index: {}]
  %s1 = inlined_call_operand.vmem [shape: bf16[36,128], index: 1, kind: input, shape index: {}]
  %s2 = inlined_call_operand.vmem [shape: f32[1,128], index: 2, kind: input, shape index: {}]
  %s3 = inlined_call_operand.vmem [shape: f32[1,128], index: 3, kind: input, shape index: {}, may-alias: {3,4}]
  %s4 = inlined_call_operand.vmem [shape: f32[1,128], index: 4, kind: input, shape index: {}, may-alias: {3,4}]
  %s5 = inlined_call_operand.vmem [shape: bf16[2,16,16,128], index: 5, kind: output, shape index: {0}]
  %s6 = inlined_call_operand.vmem [shape: f32[2,2,2,128], index: 6, kind: output, shape index: {1}]
  %7 = xla_tuple %s5, %s6
  %s8 = sld [smem:[#allocation0]]
  $region61: #{conv_block_forward.3} parent=0
    _
  %s10 = ssub.s32 1, %s8
  %s11 = scalar_select 0, %s10, %s8
  loop: start=0, step=1, limit=6
  $region2: #{conv_block_forward.3} parent=0 // loop_pre_header
    _
  $region3: #{conv_block_forward.3} parent=0 // loop_header
    %s13 = sphi 0, %s17
    %p14 = scmp.ge.s32.totalorder %s13, 6
    %s20 = sphi 0, %s32
    %s21 = sphi 0, %s28
    %s22 = sphi 0, %s20
    %s23 = sphi 0, %s21
    %s24 = sphi 0, %s22
    %s25 = sphi 0, %s23
    %s35 = sphi 0, %s37
    %s38 = sphi 0, %s35
    %s39 = sphi 0, %s38
    %s55 = sphi 0, %s39
    %s59 = sphi 0, %s59
    %s61 = sphi 0, %s59
    %s62 = sphi 0, %s61
    %s76 = sphi 0, %s62
    %s80 = sphi 0, %s80
    %s82 = sphi 0, %s80
    %s83 = sphi 0, %s82
    %s97 = sphi 0, %s83
    %s101 = sphi 0, %s101
    %s103 = sphi 0, %s101
    %s104 = sphi 0, %s103
    %s118 = sphi 0, %s104
    %s122 = sphi 0, %s122
    %s124 = sphi 0, %s122
    %s125 = sphi 0, %s124
    %s139 = sphi 0, %s125
    %s147 = sphi 0, %s149
    %s150 = sphi 0, %s147
    %s151 = sphi 0, %s150
    %s167 = sphi 0, %s151
    %s175 = sphi 0, %s177
    %s178 = sphi 0, %s175
    %s179 = sphi 0, %s178
    %s195 = sphi 0, %s179
  $region4: #{conv_block_forward.3} parent=0 // loop_header_branch
    %16 = sbr.rel (%p14) target = $region8
  $region5: #{conv_block_forward.3} parent=0 // loop_body
    %s18 = ssub.s32 %s13, 1
    %s19 = ssub.s32 %s13, 2
    %s26 = sadd.s32 1, %s21
    %p27 = scmp.ge.s32.totalorder %s26, 2
    %s28 = scalar_select %p27, 0, %s26
    %s29 = sadd.s32 1, %s20
    %s30 = scalar_select %p27, %s29, %s20
    %p31 = scmp.ge.s32.totalorder %s30, 2
    %s32 = scalar_select %p31, 0, %s30
    %s33 = ssub.s32 %s20, %s32
    %p34 = scmp.eq.s32.totalorder %s33, 0
    %s36 = sadd.s32 %s35, 1
    %s37 = scalar_select %p34, %s35, %s36
    %p40 = pneg %p34
    %p41 = scmp.eq.s32.totalorder %s13, 3
    %p42 = por %p40, %p41
    %p43 = scmp.ne.s32.totalorder %s35, %s38
    %p44 = scmp.eq.s32.totalorder %s13, 0
    %p45 = por %p43, %p44
    %p46 = scmp.ne.s32.totalorder %s35, %s38
    %p47 = scmp.eq.s32.totalorder %s18, 3
    %p48 = por %p46, %p47
    %p49 = scmp.ne.s32.totalorder %s38, %s39
    %p50 = scmp.eq.s32.totalorder %s18, 0
    %p51 = por %p49, %p50
    %p52 = scmp.ne.s32.totalorder %s38, %s39
    %p53 = scmp.eq.s32.totalorder %s19, 3
    %p54 = por %p52, %p53
    %p56 = scmp.ne.s32.totalorder %s39, %s55
    %p57 = scmp.eq.s32.totalorder %s19, 0
    %p58 = por %p56, %p57
    %s60 = sadd.s32 %s59, 1
    %p63 = scmp.eq.s32.totalorder %s13, 3
    %p64 = scmp.ne.s32.totalorder %s59, %s61
    %p65 = scmp.eq.s32.totalorder %s13, 0
    %p66 = por %p64, %p65
    %p67 = scmp.ne.s32.totalorder %s59, %s61
    %p68 = scmp.eq.s32.totalorder %s18, 3
    %p69 = por %p67, %p68
    %p70 = scmp.ne.s32.totalorder %s61, %s62
    %p71 = scmp.eq.s32.totalorder %s18, 0
    %p72 = por %p70, %p71
    %p73 = scmp.ne.s32.totalorder %s61, %s62
    %p74 = scmp.eq.s32.totalorder %s19, 3
    %p75 = por %p73, %p74
    %p77 = scmp.ne.s32.totalorder %s62, %s76
    %p78 = scmp.eq.s32.totalorder %s19, 0
    %p79 = por %p77, %p78
    %s81 = sadd.s32 %s80, 1
    %p84 = scmp.eq.s32.totalorder %s13, 3
    %p85 = scmp.ne.s32.totalorder %s80, %s82
    %p86 = scmp.eq.s32.totalorder %s13, 0
    %p87 = por %p85, %p86
    %p88 = scmp.ne.s32.totalorder %s80, %s82
    %p89 = scmp.eq.s32.totalorder %s18, 3
    %p90 = por %p88, %p89
    %p91 = scmp.ne.s32.totalorder %s82, %s83
    %p92 = scmp.eq.s32.totalorder %s18, 0
    %p93 = por %p91, %p92
    %p94 = scmp.ne.s32.totalorder %s82, %s83
    %p95 = scmp.eq.s32.totalorder %s19, 3
    %p96 = por %p94, %p95
    %p98 = scmp.ne.s32.totalorder %s83, %s97
    %p99 = scmp.eq.s32.totalorder %s19, 0
    %p100 = por %p98, %p99
    %s102 = sadd.s32 %s101, 1
    %p105 = scmp.eq.s32.totalorder %s13, 3
    %p106 = scmp.ne.s32.totalorder %s101, %s103
    %p107 = scmp.eq.s32.totalorder %s13, 0
    %p108 = por %p106, %p107
    %p109 = scmp.ne.s32.totalorder %s101, %s103
    %p110 = scmp.eq.s32.totalorder %s18, 3
    %p111 = por %p109, %p110
    %p112 = scmp.ne.s32.totalorder %s103, %s104
    %p113 = scmp.eq.s32.totalorder %s18, 0
    %p114 = por %p112, %p113
    %p115 = scmp.ne.s32.totalorder %s103, %s104
    %p116 = scmp.eq.s32.totalorder %s19, 3
    %p117 = por %p115, %p116
    %p119 = scmp.ne.s32.totalorder %s104, %s118
    %p120 = scmp.eq.s32.totalorder %s19, 0
    %p121 = por %p119, %p120
    %s123 = sadd.s32 %s122, 1
    %p126 = scmp.eq.s32.totalorder %s13, 3
    %p127 = scmp.ne.s32.totalorder %s122, %s124
    %p128 = scmp.eq.s32.totalorder %s13, 0
    %p129 = por %p127, %p128
    %p130 = scmp.ne.s32.totalorder %s122, %s124
    %p131 = scmp.eq.s32.totalorder %s18, 3
    %p132 = por %p130, %p131
    %p133 = scmp.ne.s32.totalorder %s124, %s125
    %p134 = scmp.eq.s32.totalorder %s18, 0
    %p135 = por %p133, %p134
    %p136 = scmp.ne.s32.totalorder %s124, %s125
    %p137 = scmp.eq.s32.totalorder %s19, 3
    %p138 = por %p136, %p137
    %p140 = scmp.ne.s32.totalorder %s125, %s139
    %p141 = scmp.eq.s32.totalorder %s19, 0
    %p142 = por %p140, %p141
    %s143 = ssub.s32 %s20, %s32
    %s144 = ssub.s32 %s21, %s28
    %s145 = sor.u32 %s143, %s144
    %p146 = scmp.eq.s32.totalorder %s145, 0
    %s148 = sadd.s32 %s147, 1
    %s149 = scalar_select %p146, %s147, %s148
    %p152 = pneg %p146
    %p153 = scmp.eq.s32.totalorder %s13, 3
    %p154 = por %p152, %p153
    %p155 = scmp.ne.s32.totalorder %s147, %s150
    %p156 = scmp.eq.s32.totalorder %s13, 0
    %p157 = por %p155, %p156
    %p158 = scmp.ne.s32.totalorder %s147, %s150
    %p159 = scmp.eq.s32.totalorder %s18, 3
    %p160 = por %p158, %p159
    %p161 = scmp.ne.s32.totalorder %s150, %s151
    %p162 = scmp.eq.s32.totalorder %s18, 0
    %p163 = por %p161, %p162
    %p164 = scmp.ne.s32.totalorder %s150, %s151
    %p165 = scmp.eq.s32.totalorder %s19, 3
    %p166 = por %p164, %p165
    %p168 = scmp.ne.s32.totalorder %s151, %s167
    %p169 = scmp.eq.s32.totalorder %s19, 0
    %p170 = por %p168, %p169
    %s171 = ssub.s32 %s20, %s32
    %s172 = ssub.s32 %s21, %s28
    %s173 = sor.u32 %s171, %s172
    %p174 = scmp.eq.s32.totalorder %s173, 0
    %s176 = sadd.s32 %s175, 1
    %s177 = scalar_select %p174, %s175, %s176
    %p180 = pneg %p174
    %p181 = scmp.eq.s32.totalorder %s13, 3
    %p182 = por %p180, %p181
    %p183 = scmp.ne.s32.totalorder %s175, %s178
    %p184 = scmp.eq.s32.totalorder %s13, 0
    %p185 = por %p183, %p184
    %p186 = scmp.ne.s32.totalorder %s175, %s178
    %p187 = scmp.eq.s32.totalorder %s18, 3
    %p188 = por %p186, %p187
    %p189 = scmp.ne.s32.totalorder %s178, %s179
    %p190 = scmp.eq.s32.totalorder %s18, 0
    %p191 = por %p189, %p190
    %p192 = scmp.ne.s32.totalorder %s178, %s179
    %p193 = scmp.eq.s32.totalorder %s19, 3
    %p194 = por %p192, %p193
    %p196 = scmp.ne.s32.totalorder %s179, %s195
    %p197 = scmp.eq.s32.totalorder %s19, 0
    %p198 = por %p196, %p197
    %p199 = scmp.le.s32.totalorder 1, %s13
    %p200 = scmp.lt.s32.totalorder %s13, 5
    %p201 = pnand %p199, %p200
    %p202 = pneg %p201
    // Predicated region
    $region9: #{conv_block_forward.3} parent=5 // pred_check
      _
    $region10: #{conv_block_forward.3} parent=5 // pred_check_branch
      %204 = sbr.rel (%p201) target = $region12
    $region11: #{conv_block_forward.3} parent=5 // pred_region
      %s205 = ssub.s32 %s13, 1
      // Predicated region
      $region13: #{conv_block_forward.3} parent=11 // pred_check
        %p206 = pneg %p72
      $region14: #{conv_block_forward.3} parent=11 // pred_check_branch
        %208 = sbr.rel (%p206) target = $region16
      $region15: #{conv_block_forward.3} parent=11 // pred_region
        _
      $region16: #{conv_block_forward.3} parent=11 // pred_fallthru
        _
      // Predicated region
      $region17: #{conv_block_forward.3} parent=11 // pred_check
        %p209 = pneg %p93
      $region18: #{conv_block_forward.3} parent=11 // pred_check_branch
        %211 = sbr.rel (%p209) target = $region20
      $region19: #{conv_block_forward.3} parent=11 // pred_region
        _
      $region20: #{conv_block_forward.3} parent=11 // pred_fallthru
        _
      // Predicated region
      $region21: #{conv_block_forward.3} parent=11 // pred_check
        %p212 = pneg %p114
      $region22: #{conv_block_forward.3} parent=11 // pred_check_branch
        %214 = sbr.rel (%p212) target = $region24
      $region23: #{conv_block_forward.3} parent=11 // pred_region
        _
      $region24: #{conv_block_forward.3} parent=11 // pred_fallthru
        _
      // Predicated region
      $region25: #{conv_block_forward.3} parent=11 // pred_check
        %p215 = pneg %p135
      $region26: #{conv_block_forward.3} parent=11 // pred_check_branch
        %217 = sbr.rel (%p215) target = $region28
      $region27: #{conv_block_forward.3} parent=11 // pred_region
        _
      $region28: #{conv_block_forward.3} parent=11 // pred_fallthru
        _
    $region12: #{conv_block_forward.3} parent=5 // pred_fallthru
      _
    %p218 = scmp.lt.s32.totalorder %s13, 4
    // Predicated region
    $region29: #{conv_block_forward.3} parent=5 // pred_check
      %p219 = pneg %p218
    $region30: #{conv_block_forward.3} parent=5 // pred_check_branch
      %221 = sbr.rel (%p219) target = $region32
    $region31: #{conv_block_forward.3} parent=5 // pred_region
      // Predicated region
      $region33: #{conv_block_forward.3} parent=31 // pred_check
        %p222 = pneg %p45
      $region34: #{conv_block_forward.3} parent=31 // pred_check_branch
        %224 = sbr.rel (%p222) target = $region36
      $region35: #{conv_block_forward.3} parent=31 // pred_region
        %p225 = scmp.lt.s32.totalorder %s20, 1
        %s226 = scalar_select %p225, %s20, 1
        %s227 = smul.addr %s226, 54
        %s228 = smul.addr %s227, 4
        %s229 = scalar_lea.vmem %s0, %s228
      $region36: #{conv_block_forward.3} parent=31 // pred_fallthru
        _
    $region32: #{conv_block_forward.3} parent=5 // pred_fallthru
      _
    %p230 = scmp.le.s32.totalorder 1, %s13
    %p231 = scmp.lt.s32.totalorder %s13, 5
    %p232 = pnand %p230, %p231
    %p233 = pneg %p232
    // Predicated region
    $region37: #{conv_block_forward.3} parent=5 // pred_check
      _
    $region38: #{conv_block_forward.3} parent=5 // pred_check_branch
      %235 = sbr.rel (%p232) target = $region40
    $region39: #{conv_block_forward.3} parent=5 // pred_region
      %s236 = ssub.s32 %s13, 1
      %p237 = scmp.lt.s32.totalorder %s22, 1
      %s238 = scalar_select %p237, %s22, 1
      %s239 = smul.addr %s238, 54
      %s240 = smul.addr %s239, 4
      %s241 = scalar_lea.vmem %s0, %s240
      %p242 = pneg %p51
      %p243 = pneg %p48
      %p244 = pneg %p72
      %p245 = pneg %p69
      %p246 = pneg %p93
      %p247 = pneg %p90
      %p248 = pneg %p114
      %p249 = pneg %p111
      %p250 = pneg %p135
      %p251 = pneg %p132
      %p252 = pneg %p163
      %p253 = pneg %p160
      %s254 = smul.u32 8, %s23
      %p255 = scmp.lt.s32.totalorder %s22, 1
      %s256 = scalar_select %p255, %s22, 1
      %p257 = scmp.lt.s32.totalorder %s254, 15
      %s258 = scalar_select %p257, %s254, 15
      %s259 = smul.addr %s258, 2
      %s260 = smul.addr %s256, 32
      %s261 = sadd.s32 %s259, %s260
      %s262 = smul.addr %s261, 4
      %s263 = scalar_lea.vmem %s5, %s262
      %p264 = pneg %p191
      %p265 = pneg %p188
      %p266 = scmp.lt.s32.totalorder %s22, 1
      %s267 = scalar_select %p266, %s22, 1
      %p268 = scmp.lt.s32.totalorder %s23, 1
      %s269 = scalar_select %p268, %s23, 1
      %s270 = smul.addr %s267, 2
      %s271 = sadd.s32 %s269, %s270
      %s272 = smul.addr %s271, 2
      %s273 = scalar_lea.vmem %s6, %s272
      %p274 = scmp.lt.s32.totalorder %s22, 1
      %s275 = scalar_select %p274, %s22, 1
      %s276 = smul.addr %s275, 54
      %s277 = smul.addr %s276, 4
      %s278 = scalar_lea.vmem %s0, %s277
      %s279 = smul.u32 8, %s23
      %p280 = scmp.lt.s32.totalorder %s22, 1
      %s281 = scalar_select %p280, %s22, 1
      %p282 = scmp.lt.s32.totalorder %s279, 15
      %s283 = scalar_select %p282, %s279, 15
      %s284 = smul.addr %s283, 2
      %s285 = smul.addr %s281, 32
      %s286 = sadd.s32 %s284, %s285
      %s287 = smul.addr %s286, 4
      %s288 = scalar_lea.vmem %s5, %s287
      %s289 = smul.u32 8, %s23
      %p290 = scmp.lt.s32.totalorder %s22, 1
      %s291 = scalar_select %p290, %s22, 1
      %p292 = scmp.lt.s32.totalorder %s23, 1
      %s293 = scalar_select %p292, %s23, 1
      %s294 = smul.addr %s291, 2
      %s295 = sadd.s32 %s293, %s294
      %s296 = smul.addr %s295, 2
      %s297 = scalar_lea.vmem %s6, %s296
      %s299 = smul.u32 %s23, 8
      %s300 = smul.u32 %s299, 3
      %s301 = smul.addr %s300, 4
      %s302 = scalar_lea.vmem %s278, %s301
      %v303 = vld [vmem:[%s302] sm:$0xf]
      %v304 = vld [vmem:[%s302 + $0x4] sm:$0xf]
      %v305 = vld [vmem:[%s302 + $0x8] sm:$0x1]
      %v306 = vld [vmem:[%s302 + $0xc] sm:$0xf]
      %v307 = vld [vmem:[%s302 + $0x10] sm:$0xf]
      %v308 = vld [vmem:[%s302 + $0x14] sm:$0x1]
      %v309 = vld [vmem:[%s302 + $0x18] sm:$0xf]
      %v310 = vld [vmem:[%s302 + $0x1c] sm:$0xf]
      %v311 = vld [vmem:[%s302 + $0x20] sm:$0x1]
      %v312 = vld [vmem:[%s302 + $0x24] sm:$0xf]
      %v313 = vld [vmem:[%s302 + $0x28] sm:$0xf]
      %v314 = vld [vmem:[%s302 + $0x2c] sm:$0x1]
      %v315 = vld [vmem:[%s302 + $0x30] sm:$0xf]
      %v316 = vld [vmem:[%s302 + $0x34] sm:$0xf]
      %v317 = vld [vmem:[%s302 + $0x38] sm:$0x1]
      %v318 = vld [vmem:[%s302 + $0x3c] sm:$0xf]
      %v319 = vld [vmem:[%s302 + $0x40] sm:$0xf]
      %v320 = vld [vmem:[%s302 + $0x44] sm:$0x1]
      %v321 = vld [vmem:[%s302 + $0x48] sm:$0xf]
      %v322 = vld [vmem:[%s302 + $0x4c] sm:$0xf]
      %v323 = vld [vmem:[%s302 + $0x50] sm:$0x1]
      %v324 = vld [vmem:[%s302 + $0x54] sm:$0xf]
      %v325 = vld [vmem:[%s302 + $0x58] sm:$0xf]
      %v326 = vld [vmem:[%s302 + $0x5c] sm:$0x1]
      %v327 = vld [vmem:[%s302 + $0x60] sm:$0xf]
      %v328 = vld [vmem:[%s302 + $0x64] sm:$0xf]
      %v329 = vld [vmem:[%s302 + $0x68] sm:$0x1]
      %v330 = vld [vmem:[%s302 + $0x6c] sm:$0xf]
      %v331 = vld [vmem:[%s302 + $0x70] sm:$0xf]
      %v332 = vld [vmem:[%s302 + $0x74] sm:$0x1]
      %v349 = vunpack.c.l.b16 %v303
      %v350 = vunpack.c.l.b16 %v304
      %v351 = vunpack.c.l.b16 %v306
      %v352 = vunpack.c.l.b16 %v307
      %v353 = vunpack.c.l.b16 %v309
      %v354 = vunpack.c.l.b16 %v310
      %v355 = vunpack.c.l.b16 %v312
      %v356 = vunpack.c.l.b16 %v313
      %v357 = vunpack.c.l.b16 %v315
      %v358 = vunpack.c.l.b16 %v316
      %v359 = vunpack.c.l.b16 %v318
      %v360 = vunpack.c.l.b16 %v319
      %v361 = vunpack.c.l.b16 %v321
      %v362 = vunpack.c.l.b16 %v322
      %v363 = vunpack.c.l.b16 %v324
      %v364 = vunpack.c.l.b16 %v325
      %v365 = vpack.c.b16 %v350, %v349
      %v366 = vpack.c.b16 %v352, %v351
      %v367 = vpack.c.b16 %v354, %v353
      %v368 = vpack.c.b16 %v356, %v355
      %v369 = vpack.c.b16 %v358, %v357
      %v370 = vpack.c.b16 %v360, %v359
      %v371 = vpack.c.b16 %v362, %v361
      %v372 = vpack.c.b16 %v364, %v363
      %v381 = vunpack.c.l.b16 %v305
      %v382 = vunpack.c.l.b16 %v308
      %v383 = vunpack.c.l.b16 %v311
      %v384 = vunpack.c.l.b16 %v314
      %v385 = vunpack.c.l.b16 %v317
      %v386 = vunpack.c.l.b16 %v320
      %v387 = vunpack.c.l.b16 %v323
      %v388 = vunpack.c.l.b16 %v326
      %v389 = vpack.c.b16 %v381, %v381
      %v390 = vpack.c.b16 %v382, %v382
      %v391 = vpack.c.b16 %v383, %v383
      %v392 = vpack.c.b16 %v384, %v384
      %v393 = vpack.c.b16 %v385, %v385
      %v394 = vpack.c.b16 %v386, %v386
      %v395 = vpack.c.b16 %v387, %v387
      %v396 = vpack.c.b16 %v388, %v388
      %vm397 = vsmask.f32 7424
      %v399 = vshrl.u32 %v365, 16
      %v401 = vshll.u32 %v365, 16
      %v403 = vrot.slane %v401, 1
      %v404 = vor.u32 %v399, %v403
      %v406 = vshll.u32 %v389, 16
      %v408 = vrot.slane %v406, 1
      %v409 = vsel %vm397, %v404, %v408
      %v411 = vshrl.u32 %v366, 16
      %v413 = vshll.u32 %v366, 16
      %v415 = vrot.slane %v413, 1
      %v416 = vor.u32 %v411, %v415
      %v418 = vshll.u32 %v390, 16
      %v420 = vrot.slane %v418, 1
      %v421 = vsel %vm397, %v416, %v420
      %v423 = vshrl.u32 %v367, 16
      %v425 = vshll.u32 %v367, 16
      %v427 = vrot.slane %v425, 1
      %v428 = vor.u32 %v423, %v427
      %v430 = vshll.u32 %v391, 16
      %v432 = vrot.slane %v430, 1
      %v433 = vsel %vm397, %v428, %v432
      %v435 = vshrl.u32 %v368, 16
      %v437 = vshll.u32 %v368, 16
      %v439 = vrot.slane %v437, 1
      %v440 = vor.u32 %v435, %v439
      %v442 = vshll.u32 %v392, 16
      %v444 = vrot.slane %v442, 1
      %v445 = vsel %vm397, %v440, %v444
      %v447 = vshrl.u32 %v369, 16
      %v449 = vshll.u32 %v369, 16
      %v451 = vrot.slane %v449, 1
      %v452 = vor.u32 %v447, %v451
      %v454 = vshll.u32 %v393, 16
      %v456 = vrot.slane %v454, 1
      %v457 = vsel %vm397, %v452, %v456
      %v459 = vshrl.u32 %v370, 16
      %v461 = vshll.u32 %v370, 16
      %v463 = vrot.slane %v461, 1
      %v464 = vor.u32 %v459, %v463
      %v466 = vshll.u32 %v394, 16
      %v468 = vrot.slane %v466, 1
      %v469 = vsel %vm397, %v464, %v468
      %v471 = vshrl.u32 %v371, 16
      %v473 = vshll.u32 %v371, 16
      %v475 = vrot.slane %v473, 1
      %v476 = vor.u32 %v471, %v475
      %v478 = vshll.u32 %v395, 16
      %v480 = vrot.slane %v478, 1
      %v481 = vsel %vm397, %v476, %v480
      %v483 = vshrl.u32 %v372, 16
      %v485 = vshll.u32 %v372, 16
      %v487 = vrot.slane %v485, 1
      %v488 = vor.u32 %v483, %v487
      %v490 = vshll.u32 %v396, 16
      %v492 = vrot.slane %v490, 1
      %v493 = vsel %vm397, %v488, %v492
      %494 = vrot.lane.b32.xlu0 %v409, 4
      %v495 = vpop.permute.xlu0 %494
      %496 = vrot.lane.b32.xlu0 %v421, 4
      %v497 = vpop.permute.xlu0 %496
      %498 = vrot.lane.b32.xlu0 %v433, 4
      %v499 = vpop.permute.xlu0 %498
      %500 = vrot.lane.b32.xlu0 %v445, 4
      %v501 = vpop.permute.xlu0 %500
      %502 = vrot.lane.b32.xlu0 %v457, 4
      %v503 = vpop.permute.xlu0 %502
      %504 = vrot.lane.b32.xlu0 %v469, 4
      %v505 = vpop.permute.xlu0 %504
      %506 = vrot.lane.b32.xlu0 %v481, 4
      %v507 = vpop.permute.xlu0 %506
      %508 = vrot.lane.b32.xlu0 %v493, 4
      %v509 = vpop.permute.xlu0 %508
      %vm510 = vcmask 1046528
      %v511 = vrot.slane %v365, 1
      %v512 = vrot.slane %v389, 1
      %v513 = vsel %vm510, %v511, %v512
      %v514 = vrot.slane %v366, 1
      %v515 = vrot.slane %v390, 1
      %v516 = vsel %vm510, %v514, %v515
      %v517 = vrot.slane %v367, 1
      %v518 = vrot.slane %v391, 1
      %v519 = vsel %vm510, %v517, %v518
      %v520 = vrot.slane %v368, 1
      %v521 = vrot.slane %v392, 1
      %v522 = vsel %vm510, %v520, %v521
      %v523 = vrot.slane %v369, 1
      %v524 = vrot.slane %v393, 1
      %v525 = vsel %vm510, %v523, %v524
      %v526 = vrot.slane %v370, 1
      %v527 = vrot.slane %v394, 1
      %v528 = vsel %vm510, %v526, %v527
      %v529 = vrot.slane %v371, 1
      %v530 = vrot.slane %v395, 1
      %v531 = vsel %vm510, %v529, %v530
      %v532 = vrot.slane %v372, 1
      %v533 = vrot.slane %v396, 1
      %v534 = vsel %vm510, %v532, %v533
      %535 = vrot.lane.b32.xlu0 %v513, 8
      %v536 = vpop.permute.xlu0 %535
      %537 = vrot.lane.b32.xlu0 %v516, 8
      %v538 = vpop.permute.xlu0 %537
      %539 = vrot.lane.b32.xlu0 %v519, 8
      %v540 = vpop.permute.xlu0 %539
      %541 = vrot.lane.b32.xlu0 %v522, 8
      %v542 = vpop.permute.xlu0 %541
      %543 = vrot.lane.b32.xlu0 %v525, 8
      %v544 = vpop.permute.xlu0 %543
      %545 = vrot.lane.b32.xlu0 %v528, 8
      %v546 = vpop.permute.xlu0 %545
      %547 = vrot.lane.b32.xlu0 %v531, 8
      %v548 = vpop.permute.xlu0 %547
      %549 = vrot.lane.b32.xlu0 %v534, 8
      %v550 = vpop.permute.xlu0 %549
      %v553 = vunpack.c.l.b16 %v327
      %v554 = vunpack.c.l.b16 %v328
      %v555 = vpack.c.b16 %v554, %v553
      %556 = vrot.lane.b32.xlu0 %v366, 12
      %v557 = vpop.permute.xlu0 %556
      %558 = vrot.lane.b32.xlu0 %v367, 12
      %v559 = vpop.permute.xlu0 %558
      %560 = vrot.lane.b32.xlu0 %v368, 12
      %v561 = vpop.permute.xlu0 %560
      %562 = vrot.lane.b32.xlu0 %v369, 12
      %v563 = vpop.permute.xlu0 %562
      %564 = vrot.lane.b32.xlu0 %v370, 12
      %v565 = vpop.permute.xlu0 %564
      %566 = vrot.lane.b32.xlu0 %v371, 12
      %v567 = vpop.permute.xlu0 %566
      %568 = vrot.lane.b32.xlu0 %v372, 12
      %v569 = vpop.permute.xlu0 %568
      %570 = vrot.lane.b32.xlu0 %v555, 12
      %v571 = vpop.permute.xlu0 %570
      %v573 = vunpack.c.l.b16 %v329
      %v574 = vpack.c.b16 %v573, %v573
      %v576 = vshrl.u32 %v555, 16
      %v578 = vshll.u32 %v555, 16
      %v580 = vrot.slane %v578, 1
      %v581 = vor.u32 %v576, %v580
      %v583 = vshll.u32 %v574, 16
      %v585 = vrot.slane %v583, 1
      %v586 = vsel %vm397, %v581, %v585
      %587 = vrot.lane.b32.xlu0 %v421, 16
      %v588 = vpop.permute.xlu0 %587
      %589 = vrot.lane.b32.xlu0 %v433, 16
      %v590 = vpop.permute.xlu0 %589
      %591 = vrot.lane.b32.xlu0 %v445, 16
      %v592 = vpop.permute.xlu0 %591
      %593 = vrot.lane.b32.xlu0 %v457, 16
      %v594 = vpop.permute.xlu0 %593
      %595 = vrot.lane.b32.xlu0 %v469, 16
      %v596 = vpop.permute.xlu0 %595
      %597 = vrot.lane.b32.xlu0 %v481, 16
      %v598 = vpop.permute.xlu0 %597
      %599 = vrot.lane.b32.xlu0 %v493, 16
      %v600 = vpop.permute.xlu0 %599
      %601 = vrot.lane.b32.xlu0 %v586, 16
      %v602 = vpop.permute.xlu0 %601
      %v603 = vrot.slane %v555, 1
      %v604 = vrot.slane %v574, 1
      %v605 = vsel %vm510, %v603, %v604
      %606 = vrot.lane.b32.xlu0 %v516, 20
      %v607 = vpop.permute.xlu0 %606
      %608 = vrot.lane.b32.xlu0 %v519, 20
      %v609 = vpop.permute.xlu0 %608
      %610 = vrot.lane.b32.xlu0 %v522, 20
      %v611 = vpop.permute.xlu0 %610
      %612 = vrot.lane.b32.xlu0 %v525, 20
      %v613 = vpop.permute.xlu0 %612
      %614 = vrot.lane.b32.xlu0 %v528, 20
      %v615 = vpop.permute.xlu0 %614
      %616 = vrot.lane.b32.xlu0 %v531, 20
      %v617 = vpop.permute.xlu0 %616
      %618 = vrot.lane.b32.xlu0 %v534, 20
      %v619 = vpop.permute.xlu0 %618
      %620 = vrot.lane.b32.xlu0 %v605, 20
      %v621 = vpop.permute.xlu0 %620
      %v624 = vunpack.c.l.b16 %v330
      %v625 = vunpack.c.l.b16 %v331
      %v626 = vpack.c.b16 %v625, %v624
      %627 = vrot.lane.b32.xlu0 %v367, 24
      %v628 = vpop.permute.xlu0 %627
      %629 = vrot.lane.b32.xlu0 %v368, 24
      %v630 = vpop.permute.xlu0 %629
      %631 = vrot.lane.b32.xlu0 %v369, 24
      %v632 = vpop.permute.xlu0 %631
      %633 = vrot.lane.b32.xlu0 %v370, 24
      %v634 = vpop.permute.xlu0 %633
      %635 = vrot.lane.b32.xlu0 %v371, 24
      %v636 = vpop.permute.xlu0 %635
      %637 = vrot.lane.b32.xlu0 %v372, 24
      %v638 = vpop.permute.xlu0 %637
      %639 = vrot.lane.b32.xlu0 %v555, 24
      %v640 = vpop.permute.xlu0 %639
      %641 = vrot.lane.b32.xlu0 %v626, 24
      %v642 = vpop.permute.xlu0 %641
      %v644 = vunpack.c.l.b16 %v332
      %v645 = vpack.c.b16 %v644, %v644
      %v647 = vshrl.u32 %v626, 16
      %v649 = vshll.u32 %v626, 16
      %v651 = vrot.slane %v649, 1
      %v652 = vor.u32 %v647, %v651
      %v654 = vshll.u32 %v645, 16
      %v656 = vrot.slane %v654, 1
      %v657 = vsel %vm397, %v652, %v656
      %658 = vrot.lane.b32.xlu0 %v433, 28
      %v659 = vpop.permute.xlu0 %658
      %660 = vrot.lane.b32.xlu0 %v445, 28
      %v661 = vpop.permute.xlu0 %660
      %662 = vrot.lane.b32.xlu0 %v457, 28
      %v663 = vpop.permute.xlu0 %662
      %664 = vrot.lane.b32.xlu0 %v469, 28
      %v665 = vpop.permute.xlu0 %664
      %666 = vrot.lane.b32.xlu0 %v481, 28
      %v667 = vpop.permute.xlu0 %666
      %668 = vrot.lane.b32.xlu0 %v493, 28
      %v669 = vpop.permute.xlu0 %668
      %670 = vrot.lane.b32.xlu0 %v586, 28
      %v671 = vpop.permute.xlu0 %670
      %672 = vrot.lane.b32.xlu0 %v657, 28
      %v673 = vpop.permute.xlu0 %672
      %v674 = vrot.slane %v626, 1
      %v675 = vrot.slane %v645, 1
      %v676 = vsel %vm510, %v674, %v675
      %677 = vrot.lane.b32.xlu0 %v519, 32
      %v678 = vpop.permute.xlu0 %677
      %679 = vrot.lane.b32.xlu0 %v522, 32
      %v680 = vpop.permute.xlu0 %679
      %681 = vrot.lane.b32.xlu0 %v525, 32
      %v682 = vpop.permute.xlu0 %681
      %683 = vrot.lane.b32.xlu0 %v528, 32
      %v684 = vpop.permute.xlu0 %683
      %685 = vrot.lane.b32.xlu0 %v531, 32
      %v686 = vpop.permute.xlu0 %685
      %687 = vrot.lane.b32.xlu0 %v534, 32
      %v688 = vpop.permute.xlu0 %687
      %689 = vrot.lane.b32.xlu0 %v605, 32
      %v690 = vpop.permute.xlu0 %689
      %691 = vrot.lane.b32.xlu0 %v676, 32
      %v692 = vpop.permute.xlu0 %691
      %vm693 = vcmask 31744
      %v695 = vsel %vm693, %v365, %v495
      %v697 = vsel %vm693, %v366, %v497
      %v699 = vsel %vm693, %v367, %v499
      %v701 = vsel %vm693, %v368, %v501
      %v703 = vsel %vm693, %v369, %v503
      %v705 = vsel %vm693, %v370, %v505
      %v707 = vsel %vm693, %v371, %v507
      %v709 = vsel %vm693, %v372, %v509
      %vm710 = vcmask 64512
      %v712 = vsel %vm710, %v695, %v536
      %v714 = vsel %vm710, %v697, %v538
      %v716 = vsel %vm710, %v699, %v540
      %v718 = vsel %vm710, %v701, %v542
      %v720 = vsel %vm710, %v703, %v544
      %v722 = vsel %vm710, %v705, %v546
      %v724 = vsel %vm710, %v707, %v548
      %v726 = vsel %vm710, %v709, %v550
      %vm727 = vcmask 97280
      %v729 = vsel %vm727, %v712, %v557
      %v731 = vsel %vm727, %v714, %v559
      %v733 = vsel %vm727, %v716, %v561
      %v735 = vsel %vm727, %v718, %v563
      %v737 = vsel %vm727, %v720, %v565
      %v739 = vsel %vm727, %v722, %v567
      %v741 = vsel %vm727, %v724, %v569
      %v743 = vsel %vm727, %v726, %v571
      %vm744 = vcmask 130048
      %v746 = vsel %vm744, %v729, %v588
      %v748 = vsel %vm744, %v731, %v590
      %v750 = vsel %vm744, %v733, %v592
      %v752 = vsel %vm744, %v735, %v594
      %v754 = vsel %vm744, %v737, %v596
      %v756 = vsel %vm744, %v739, %v598
      %v758 = vsel %vm744, %v741, %v600
      %v760 = vsel %vm744, %v743, %v602
      %vm761 = vcmask 162816
      %v763 = vsel %vm761, %v746, %v607
      %v765 = vsel %vm761, %v748, %v609
      %v767 = vsel %vm761, %v750, %v611
      %v769 = vsel %vm761, %v752, %v613
      %v771 = vsel %vm761, %v754, %v615
      %v773 = vsel %vm761, %v756, %v617
      %v775 = vsel %vm761, %v758, %v619
      %v777 = vsel %vm761, %v760, %v621
      %vm778 = vcmask 195584
      %v780 = vsel %vm778, %v763, %v628
      %v782 = vsel %vm778, %v765, %v630
      %v784 = vsel %vm778, %v767, %v632
      %v786 = vsel %vm778, %v769, %v634
      %v788 = vsel %vm778, %v771, %v636
      %v790 = vsel %vm778, %v773, %v638
      %v792 = vsel %vm778, %v775, %v640
      %v794 = vsel %vm778, %v777, %v642
      %vm795 = vcmask 228352
      %v797 = vsel %vm795, %v780, %v659
      %v799 = vsel %vm795, %v782, %v661
      %v801 = vsel %vm795, %v784, %v663
      %v803 = vsel %vm795, %v786, %v665
      %v805 = vsel %vm795, %v788, %v667
      %v807 = vsel %vm795, %v790, %v669
      %v809 = vsel %vm795, %v792, %v671
      %v811 = vsel %vm795, %v794, %v673
      %vm812 = vcmask 261120
      %v814 = vsel %vm812, %v797, %v678
      %v816 = vsel %vm812, %v799, %v680
      %v818 = vsel %vm812, %v801, %v682
      %v820 = vsel %vm812, %v803, %v684
      %v822 = vsel %vm812, %v805, %v686
      %v824 = vsel %vm812, %v807, %v688
      %v826 = vsel %vm812, %v809, %v690
      %v828 = vsel %vm812, %v811, %v692
      %v829 = vld [vmem:[%s1] sm:$0xf]
      %v830 = vld [vmem:[%s1 + $0x4] sm:$0xf]
      %v831 = vld [vmem:[%s1 + $0x8] sm:$0xf]
      %v832 = vld [vmem:[%s1 + $0xc] sm:$0xf]
      %v833 = vld [vmem:[%s1 + $0x10] sm:$0x3]
      %v834 = vld [vmem:[%s2] sm:$0x1]
      %v836 = vlaneseq
      %v837 = vshrl.u32 %v836, 7
      %v838 = vsub.s32 0, %v837
      %v839 = vrot.slane %v834, %v838
      %v846 = vunpack.c.l.b16 %v829
      %v847 = vunpack.c.l.b16 %v830
      %v848 = vunpack.c.l.b16 %v831
      %v849 = vunpack.c.l.b16 %v832
      %v850 = vunpack.c.l.b16 %v833
      %v851 = vpack.c.b16 %v847, %v846
      %v852 = vpack.c.b16 %v849, %v848
      %v853 = vpack.c.b16 %v850, %v850
      %vm856 = vcmask 293888
      %v857 = vsel %vm856, %v814, 0
      %v859 = vsel %vm856, %v816, 0
      %v861 = vsel %vm856, %v818, 0
      %v863 = vsel %vm856, %v820, 0
      %v865 = vsel %vm856, %v822, 0
      %v867 = vsel %vm856, %v824, 0
      %v869 = vsel %vm856, %v826, 0
      %v871 = vsel %vm856, %v828, 0
      %vm873 = vcmask 1041408
      %v875 = vsel %vm873, %v853, 0
      %877 = vmatprep.subr.bf16.mxu0 0
      %878 = vmatpush1.bf16.msra.mxu0 0
      %879 = vmatprep.subr.bf16.mxu0 0
      %880 = vmatpush1.bf16.msra.mxu0 0
      %881 = vmatprep.subr.bf16.mxu0 0
      %882 = vmatpush1.bf16.msra.mxu0 0
      %883 = vmatprep.subr.bf16.mxu0 0
      %884 = vmatpush1.bf16.msra.mxu0 0
      %885 = vmatprep.subr.bf16.mxu0 0
      %886 = vmatpush1.bf16.msra.mxu0 0
      %887 = vmatprep.subr.bf16.mxu0 0
      %888 = vmatpush1.bf16.msra.mxu0 %v875
      %889 = vmatprep.subr.bf16.mxu0 0
      %890 = vmatpush1.bf16.msra.mxu0 %v852
      %891 = vmatprep.subr.bf16.mxu0 0
      %892 = vmatpush1.bf16.msra.mxu0 %v851
      %893 = vmatprep.subr.bf16.mxu0 0
      %894 = vmatpush2.bf16.msra.mxu0 0
      %895 = vmatprep.subr.bf16.mxu0 0
      %896 = vmatpush2.bf16.msra.mxu0 0
      %897 = vmatprep.subr.bf16.mxu0 0
      %898 = vmatpush2.bf16.msra.mxu0 0
      %899 = vmatprep.subr.bf16.mxu0 0
      %900 = vmatpush2.bf16.msra.mxu0 0
      %901 = vmatprep.subr.bf16.mxu0 0
      %902 = vmatpush2.bf16.msra.mxu0 0
      %903 = vmatprep.subr.bf16.mxu0 0
      %904 = vmatpush2.bf16.msra.mxu0 0
      %905 = vmatprep.subr.bf16.mxu0 0
      %906 = vmatpush2.bf16.msra.mxu0 0
      %907 = vmatprep.subr.bf16.mxu0 0
      %908 = vmatpush2.bf16.msra.mxu0 0
      %909 = vmatprep.mubr.bf16.mxu0 0
      %910 = vmatmul.mubr.bf16.gmra.mxu0 %v857
      %v911 = vpop.f32.mrf.mxu0
      %v912 = vadd.f32 %v839, %v911
      %v913 = vpop.f32.mrf.mxu0
      %v914 = vpop.f32.mrf.mxu0
      %v915 = vadd.f32 %v839, %v914
      %v916 = vpop.f32.mrf.mxu0
      %917 = vmatprep.mubr.bf16.mxu0 0
      %918 = vmatmul.mubr.bf16.gmra.mxu0 %v859
      %v919 = vpop.f32.mrf.mxu0
      %v920 = vadd.f32 %v839, %v919
      %v921 = vpop.f32.mrf.mxu0
      %v922 = vpop.f32.mrf.mxu0
      %v923 = vadd.f32 %v839, %v922
      %v924 = vpop.f32.mrf.mxu0
      %925 = vmatprep.mubr.bf16.mxu0 0
      %926 = vmatmul.mubr.bf16.gmra.mxu0 %v861
      %v927 = vpop.f32.mrf.mxu0
      %v928 = vadd.f32 %v839, %v927
      %v929 = vpop.f32.mrf.mxu0
      %v930 = vpop.f32.mrf.mxu0
      %v931 = vadd.f32 %v839, %v930
      %v932 = vpop.f32.mrf.mxu0
      %933 = vmatprep.mubr.bf16.mxu0 0
      %934 = vmatmul.mubr.bf16.gmra.mxu0 %v863
      %v935 = vpop.f32.mrf.mxu0
      %v936 = vadd.f32 %v839, %v935
      %v937 = vpop.f32.mrf.mxu0
      %v938 = vpop.f32.mrf.mxu0
      %v939 = vadd.f32 %v839, %v938
      %v940 = vpop.f32.mrf.mxu0
      %941 = vmatprep.mubr.bf16.mxu0 0
      %942 = vmatmul.mubr.bf16.gmra.mxu0 %v865
      %v943 = vpop.f32.mrf.mxu0
      %v944 = vadd.f32 %v839, %v943
      %v945 = vpop.f32.mrf.mxu0
      %v946 = vpop.f32.mrf.mxu0
      %v947 = vadd.f32 %v839, %v946
      %v948 = vpop.f32.mrf.mxu0
      %949 = vmatprep.mubr.bf16.mxu0 0
      %950 = vmatmul.mubr.bf16.gmra.mxu0 %v867
      %v951 = vpop.f32.mrf.mxu0
      %v952 = vadd.f32 %v839, %v951
      %v953 = vpop.f32.mrf.mxu0
      %v954 = vpop.f32.mrf.mxu0
      %v955 = vadd.f32 %v839, %v954
      %v956 = vpop.f32.mrf.mxu0
      %957 = vmatprep.mubr.bf16.mxu0 0
      %958 = vmatmul.mubr.bf16.gmra.mxu0 %v869
      %v959 = vpop.f32.mrf.mxu0
      %v960 = vadd.f32 %v839, %v959
      %v961 = vpop.f32.mrf.mxu0
      %v962 = vpop.f32.mrf.mxu0
      %v963 = vadd.f32 %v839, %v962
      %v964 = vpop.f32.mrf.mxu0
      %965 = vmatprep.mubr.bf16.mxu0 0
      %966 = vmatmul.mubr.bf16.gmra.mxu0 %v871
      %v967 = vpop.f32.mrf.mxu0
      %v968 = vadd.f32 %v839, %v967
      %v969 = vpop.f32.mrf.mxu0
      %v970 = vpop.f32.mrf.mxu0
      %v971 = vadd.f32 %v839, %v970
      %v972 = vpop.f32.mrf.mxu0
      %973 = vdwg.mxu0
      %v974 = vpack.c.bf16 %v915, %v912
      %v975 = vpack.c.bf16 %v923, %v920
      %v976 = vpack.c.bf16 %v931, %v928
      %v977 = vpack.c.bf16 %v939, %v936
      %v978 = vpack.c.bf16 %v947, %v944
      %v979 = vpack.c.bf16 %v955, %v952
      %v980 = vpack.c.bf16 %v963, %v960
      %v981 = vpack.c.bf16 %v971, %v968
      %v990 = vunpack.c.l.b16 %v974
      %v991 = vunpack.c.h.b16 %v974
      %v992 = vunpack.c.l.b16 %v975
      %v993 = vunpack.c.h.b16 %v975
      %v994 = vunpack.c.l.b16 %v976
      %v995 = vunpack.c.h.b16 %v976
      %v996 = vunpack.c.l.b16 %v977
      %v997 = vunpack.c.h.b16 %v977
      %v998 = vunpack.c.l.b16 %v978
      %v999 = vunpack.c.h.b16 %v978
      %v1000 = vunpack.c.l.b16 %v979
      %v1001 = vunpack.c.h.b16 %v979
      %v1002 = vunpack.c.l.b16 %v980
      %v1003 = vunpack.c.h.b16 %v980
      %v1004 = vunpack.c.l.b16 %v981
      %v1005 = vunpack.c.h.b16 %v981
      %v1006 = vpack.c.b16 %v990, %v990
      %v1007 = vpack.c.b16 %v991, %v991
      %v1008 = vpack.c.b16 %v992, %v992
      %v1009 = vpack.c.b16 %v993, %v993
      %v1010 = vpack.c.b16 %v994, %v994
      %v1011 = vpack.c.b16 %v995, %v995
      %v1012 = vpack.c.b16 %v996, %v996
      %v1013 = vpack.c.b16 %v997, %v997
      %v1014 = vpack.c.b16 %v998, %v998
      %v1015 = vpack.c.b16 %v999, %v999
      %v1016 = vpack.c.b16 %v1000, %v1000
      %v1017 = vpack.c.b16 %v1001, %v1001
      %v1018 = vpack.c.b16 %v1002, %v1002
      %v1019 = vpack.c.b16 %v1003, %v1003
      %v1020 = vpack.c.b16 %v1004, %v1004
      %v1021 = vpack.c.b16 %v1005, %v1005
      %1038 = vst [vmem:[%s288] sm:$0xf] %v1006
      %1039 = vst [vmem:[%s288 + $0x4] sm:$0xf] %v1007
      %1040 = vst [vmem:[%s288 + $0x8] sm:$0xf] %v1008
      %1041 = vst [vmem:[%s288 + $0xc] sm:$0xf] %v1009
      %1042 = vst [vmem:[%s288 + $0x10] sm:$0xf] %v1010
      %1043 = vst [vmem:[%s288 + $0x14] sm:$0xf] %v1011
      %1044 = vst [vmem:[%s288 + $0x18] sm:$0xf] %v1012
      %1045 = vst [vmem:[%s288 + $0x1c] sm:$0xf] %v1013
      %1046 = vst [vmem:[%s288 + $0x20] sm:$0xf] %v1014
      %1047 = vst [vmem:[%s288 + $0x24] sm:$0xf] %v1015
      %1048 = vst [vmem:[%s288 + $0x28] sm:$0xf] %v1016
      %1049 = vst [vmem:[%s288 + $0x2c] sm:$0xf] %v1017
      %1050 = vst [vmem:[%s288 + $0x30] sm:$0xf] %v1018
      %1051 = vst [vmem:[%s288 + $0x34] sm:$0xf] %v1019
      %1052 = vst [vmem:[%s288 + $0x38] sm:$0xf] %v1020
      %1053 = vst [vmem:[%s288 + $0x3c] sm:$0xf] %v1021
      %v1054 = vunpack.c.l.bf16 %v974
      %v1055 = vunpack.c.h.bf16 %v974
      %v1056 = vunpack.c.l.bf16 %v975
      %v1057 = vunpack.c.h.bf16 %v975
      %v1058 = vunpack.c.l.bf16 %v976
      %v1059 = vunpack.c.h.bf16 %v976
      %v1060 = vunpack.c.l.bf16 %v977
      %v1061 = vunpack.c.h.bf16 %v977
      %v1062 = vunpack.c.l.bf16 %v978
      %v1063 = vunpack.c.h.bf16 %v978
      %v1064 = vunpack.c.l.bf16 %v979
      %v1065 = vunpack.c.h.bf16 %v979
      %v1066 = vunpack.c.l.bf16 %v980
      %v1067 = vunpack.c.h.bf16 %v980
      %v1068 = vunpack.c.l.bf16 %v981
      %v1069 = vunpack.c.h.bf16 %v981
      %v1070 = vadd.f32 %v1054, %v1055
      %v1071 = vadd.f32 %v1070, %v1056
      %v1072 = vadd.f32 %v1071, %v1057
      %v1073 = vadd.f32 %v1072, %v1058
      %v1074 = vadd.f32 %v1073, %v1059
      %v1075 = vadd.f32 %v1074, %v1060
      %v1076 = vadd.f32 %v1075, %v1061
      %v1077 = vadd.f32 %v1076, %v1062
      %v1078 = vadd.f32 %v1077, %v1063
      %v1079 = vadd.f32 %v1078, %v1064
      %v1080 = vadd.f32 %v1079, %v1065
      %v1081 = vadd.f32 %v1080, %v1066
      %v1082 = vadd.f32 %v1081, %v1067
      %v1083 = vadd.f32 %v1082, %v1068
      %v1084 = vadd.f32 %v1083, %v1069
      %v1085 = vrot.slane %v1084, 4
      %v1086 = vadd.f32 %v1084, %v1085
      %v1087 = vrot.slane %v1086, 2
      %v1088 = vadd.f32 %v1086, %v1087
      %v1089 = vrot.slane %v1088, 1
      %v1090 = vadd.f32 %v1088, %v1089
      %v1091 = vmul.f32 %v1054, %v1054
      %v1092 = vmul.f32 %v1055, %v1055
      %v1093 = vmul.f32 %v1056, %v1056
      %v1094 = vmul.f32 %v1057, %v1057
      %v1095 = vmul.f32 %v1058, %v1058
      %v1096 = vmul.f32 %v1059, %v1059
      %v1097 = vmul.f32 %v1060, %v1060
      %v1098 = vmul.f32 %v1061, %v1061
      %v1099 = vmul.f32 %v1062, %v1062
      %v1100 = vmul.f32 %v1063, %v1063
      %v1101 = vmul.f32 %v1064, %v1064
      %v1102 = vmul.f32 %v1065, %v1065
      %v1103 = vmul.f32 %v1066, %v1066
      %v1104 = vmul.f32 %v1067, %v1067
      %v1105 = vmul.f32 %v1068, %v1068
      %v1106 = vmul.f32 %v1069, %v1069
      %v1107 = vadd.f32 %v1091, %v1092
      %v1108 = vadd.f32 %v1107, %v1093
      %v1109 = vadd.f32 %v1108, %v1094
      %v1110 = vadd.f32 %v1109, %v1095
      %v1111 = vadd.f32 %v1110, %v1096
      %v1112 = vadd.f32 %v1111, %v1097
      %v1113 = vadd.f32 %v1112, %v1098
      %v1114 = vadd.f32 %v1113, %v1099
      %v1115 = vadd.f32 %v1114, %v1100
      %v1116 = vadd.f32 %v1115, %v1101
      %v1117 = vadd.f32 %v1116, %v1102
      %v1118 = vadd.f32 %v1117, %v1103
      %v1119 = vadd.f32 %v1118, %v1104
      %v1120 = vadd.f32 %v1119, %v1105
      %v1121 = vadd.f32 %v1120, %v1106
      %v1122 = vrot.slane %v1121, 4
      %v1123 = vadd.f32 %v1121, %v1122
      %v1124 = vrot.slane %v1123, 2
      %v1125 = vadd.f32 %v1123, %v1124
      %v1126 = vrot.slane %v1125, 1
      %v1127 = vadd.f32 %v1125, %v1126
      %vm1128 = vcmask 1040384
      %v1129 = vsel %vm1128, %v1090, %v1127
      %1130 = vst [vmem:[%s297] sm:$0x3] %v1129
      %s1131 = smul.u32 8, %s23
      %p1132 = scmp.lt.s32.totalorder %s22, 1
      %s1133 = scalar_select %p1132, %s22, 1
      %p1134 = scmp.lt.s32.totalorder %s1131, 15
      %s1135 = scalar_select %p1134, %s1131, 15
      %s1136 = smul.addr %s1135, 2
      %s1137 = smul.addr %s1133, 32
      %s1138 = sadd.s32 %s1136, %s1137
      %s1139 = smul.addr %s1138, 4
      %s1140 = scalar_lea.vmem %s5, %s1139
      %p1141 = scmp.lt.s32.totalorder %s22, 1
      %s1142 = scalar_select %p1141, %s22, 1
      %p1143 = scmp.lt.s32.totalorder %s23, 1
      %s1144 = scalar_select %p1143, %s23, 1
      %s1145 = smul.addr %s1142, 2
      %s1146 = sadd.s32 %s1144, %s1145
      %s1147 = smul.addr %s1146, 2
      %s1148 = scalar_lea.vmem %s6, %s1147
      // Predicated region
      $region41: #{conv_block_forward.3} parent=39 // pred_check
        %p1149 = pneg %p160
      $region42: #{conv_block_forward.3} parent=39 // pred_check_branch
        %1151 = sbr.rel (%p1149) target = $region44
      $region43: #{conv_block_forward.3} parent=39 // pred_region
        %s1152 = smul.u32 8, %s23
      $region44: #{conv_block_forward.3} parent=39 // pred_fallthru
        _
      // Predicated region
      $region45: #{conv_block_forward.3} parent=39 // pred_check
        %p1153 = pneg %p188
      $region46: #{conv_block_forward.3} parent=39 // pred_check_branch
        %1155 = sbr.rel (%p1153) target = $region48
      $region47: #{conv_block_forward.3} parent=39 // pred_region
        _
      $region48: #{conv_block_forward.3} parent=39 // pred_fallthru
        _
    $region40: #{conv_block_forward.3} parent=5 // pred_fallthru
      _
    %p1156 = scmp.le.s32.totalorder 2, %s13
    // Predicated region
    $region49: #{conv_block_forward.3} parent=5 // pred_check
      %p1157 = pneg %p1156
    $region50: #{conv_block_forward.3} parent=5 // pred_check_branch
      %1159 = sbr.rel (%p1157) target = $region52
    $region51: #{conv_block_forward.3} parent=5 // pred_region
      %s1160 = ssub.s32 %s13, 2
      // Predicated region
      $region53: #{conv_block_forward.3} parent=51 // pred_check
        %p1161 = pneg %p166
      $region54: #{conv_block_forward.3} parent=51 // pred_check_branch
        %1163 = sbr.rel (%p1161) target = $region56
      $region55: #{conv_block_forward.3} parent=51 // pred_region
        %s1164 = smul.u32 8, %s25
        %p1165 = scmp.lt.s32.totalorder %s24, 1
        %s1166 = scalar_select %p1165, %s24, 1
        %p1167 = scmp.lt.s32.totalorder %s1164, 15
        %s1168 = scalar_select %p1167, %s1164, 15
        %s1169 = smul.addr %s1168, 2
        %s1170 = smul.addr %s1166, 32
        %s1171 = sadd.s32 %s1169, %s1170
        %s1172 = smul.addr %s1171, 4
        %s1173 = scalar_lea.vmem %s5, %s1172
      $region56: #{conv_block_forward.3} parent=51 // pred_fallthru
        _
      // Predicated region
      $region57: #{conv_block_forward.3} parent=51 // pred_check
        %p1174 = pneg %p194
      $region58: #{conv_block_forward.3} parent=51 // pred_check_branch
        %1176 = sbr.rel (%p1174) target = $region60
      $region59: #{conv_block_forward.3} parent=51 // pred_region
        %p1177 = scmp.lt.s32.totalorder %s24, 1
        %s1178 = scalar_select %p1177, %s24, 1
        %p1179 = scmp.lt.s32.totalorder %s25, 1
        %s1180 = scalar_select %p1179, %s25, 1
        %s1181 = smul.addr %s1178, 2
        %s1182 = sadd.s32 %s1180, %s1181
        %s1183 = smul.addr %s1182, 2
        %s1184 = scalar_lea.vmem %s6, %s1183
      $region60: #{conv_block_forward.3} parent=51 // pred_fallthru
        _
    $region52: #{conv_block_forward.3} parent=5 // pred_fallthru
      _
  $region6: #{conv_block_forward.3} parent=0 // loop_footer
    %s17 = sadd.s32 1, %s13
  $region7: #{conv_block_forward.3} parent=0 // loop_footer_branch
    %12 = sbr.rel target = $region3
  $region8: #{conv_block_forward.3} parent=0 // loop_exit
    _

// kernel: conv_block_forward.4
$region0: #{conv_block_forward.4}
  #allocation0 [shape = 'u32[]', space=smem, size = 0x4, offset = 0x4, fixed_abs, tag = 'smem constant byte address 0x4 - core index']
  #allocation1 [shape = 'u32[144,128]{1,0:T(1,128)}', space=vmem, size = 0x12000, scoped, tag = 'internal scratch']
  %s0 = inlined_call_operand.vmem [shape: bf16[2,18,18,128], index: 0, kind: input, shape index: {}]
  %s1 = inlined_call_operand.vmem [shape: bf16[72,128], index: 1, kind: input, shape index: {}]
  %s2 = inlined_call_operand.vmem [shape: f32[1,128], index: 2, kind: input, shape index: {}]
  %s3 = inlined_call_operand.vmem [shape: f32[1,128], index: 3, kind: input, shape index: {}]
  %s4 = inlined_call_operand.vmem [shape: f32[1,128], index: 4, kind: input, shape index: {}]
  %s5 = inlined_call_operand.vmem [shape: bf16[2,16,16,128], index: 5, kind: output, shape index: {0}]
  %s6 = inlined_call_operand.vmem [shape: f32[2,2,2,128], index: 6, kind: output, shape index: {1}]
  %7 = xla_tuple %s5, %s6
  %s8 = sld [smem:[#allocation0]]
  $region61: #{conv_block_forward.4} parent=0
    _
  %s10 = ssub.s32 1, %s8
  %s11 = scalar_select 0, %s10, %s8
  loop: start=0, step=1, limit=6
  $region2: #{conv_block_forward.4} parent=0 // loop_pre_header
    _
  $region3: #{conv_block_forward.4} parent=0 // loop_header
    %s13 = sphi 0, %s17
    %p14 = scmp.ge.s32.totalorder %s13, 6
    %s20 = sphi 0, %s32
    %s21 = sphi 0, %s28
    %s22 = sphi 0, %s20
    %s23 = sphi 0, %s21
    %s24 = sphi 0, %s22
    %s25 = sphi 0, %s23
    %s35 = sphi 0, %s37
    %s38 = sphi 0, %s35
    %s39 = sphi 0, %s38
    %s55 = sphi 0, %s39
    %s59 = sphi 0, %s59
    %s61 = sphi 0, %s59
    %s62 = sphi 0, %s61
    %s76 = sphi 0, %s62
    %s80 = sphi 0, %s80
    %s82 = sphi 0, %s80
    %s83 = sphi 0, %s82
    %s97 = sphi 0, %s83
    %s101 = sphi 0, %s101
    %s103 = sphi 0, %s101
    %s104 = sphi 0, %s103
    %s118 = sphi 0, %s104
    %s122 = sphi 0, %s122
    %s124 = sphi 0, %s122
    %s125 = sphi 0, %s124
    %s139 = sphi 0, %s125
    %s147 = sphi 0, %s149
    %s150 = sphi 0, %s147
    %s151 = sphi 0, %s150
    %s167 = sphi 0, %s151
    %s175 = sphi 0, %s177
    %s178 = sphi 0, %s175
    %s179 = sphi 0, %s178
    %s195 = sphi 0, %s179
  $region4: #{conv_block_forward.4} parent=0 // loop_header_branch
    %16 = sbr.rel (%p14) target = $region8
  $region5: #{conv_block_forward.4} parent=0 // loop_body
    %s18 = ssub.s32 %s13, 1
    %s19 = ssub.s32 %s13, 2
    %s26 = sadd.s32 1, %s21
    %p27 = scmp.ge.s32.totalorder %s26, 2
    %s28 = scalar_select %p27, 0, %s26
    %s29 = sadd.s32 1, %s20
    %s30 = scalar_select %p27, %s29, %s20
    %p31 = scmp.ge.s32.totalorder %s30, 2
    %s32 = scalar_select %p31, 0, %s30
    %s33 = ssub.s32 %s20, %s32
    %p34 = scmp.eq.s32.totalorder %s33, 0
    %s36 = sadd.s32 %s35, 1
    %s37 = scalar_select %p34, %s35, %s36
    %p40 = pneg %p34
    %p41 = scmp.eq.s32.totalorder %s13, 3
    %p42 = por %p40, %p41
    %p43 = scmp.ne.s32.totalorder %s35, %s38
    %p44 = scmp.eq.s32.totalorder %s13, 0
    %p45 = por %p43, %p44
    %p46 = scmp.ne.s32.totalorder %s35, %s38
    %p47 = scmp.eq.s32.totalorder %s18, 3
    %p48 = por %p46, %p47
    %p49 = scmp.ne.s32.totalorder %s38, %s39
    %p50 = scmp.eq.s32.totalorder %s18, 0
    %p51 = por %p49, %p50
    %p52 = scmp.ne.s32.totalorder %s38, %s39
    %p53 = scmp.eq.s32.totalorder %s19, 3
    %p54 = por %p52, %p53
    %p56 = scmp.ne.s32.totalorder %s39, %s55
    %p57 = scmp.eq.s32.totalorder %s19, 0
    %p58 = por %p56, %p57
    %s60 = sadd.s32 %s59, 1
    %p63 = scmp.eq.s32.totalorder %s13, 3
    %p64 = scmp.ne.s32.totalorder %s59, %s61
    %p65 = scmp.eq.s32.totalorder %s13, 0
    %p66 = por %p64, %p65
    %p67 = scmp.ne.s32.totalorder %s59, %s61
    %p68 = scmp.eq.s32.totalorder %s18, 3
    %p69 = por %p67, %p68
    %p70 = scmp.ne.s32.totalorder %s61, %s62
    %p71 = scmp.eq.s32.totalorder %s18, 0
    %p72 = por %p70, %p71
    %p73 = scmp.ne.s32.totalorder %s61, %s62
    %p74 = scmp.eq.s32.totalorder %s19, 3
    %p75 = por %p73, %p74
    %p77 = scmp.ne.s32.totalorder %s62, %s76
    %p78 = scmp.eq.s32.totalorder %s19, 0
    %p79 = por %p77, %p78
    %s81 = sadd.s32 %s80, 1
    %p84 = scmp.eq.s32.totalorder %s13, 3
    %p85 = scmp.ne.s32.totalorder %s80, %s82
    %p86 = scmp.eq.s32.totalorder %s13, 0
    %p87 = por %p85, %p86
    %p88 = scmp.ne.s32.totalorder %s80, %s82
    %p89 = scmp.eq.s32.totalorder %s18, 3
    %p90 = por %p88, %p89
    %p91 = scmp.ne.s32.totalorder %s82, %s83
    %p92 = scmp.eq.s32.totalorder %s18, 0
    %p93 = por %p91, %p92
    %p94 = scmp.ne.s32.totalorder %s82, %s83
    %p95 = scmp.eq.s32.totalorder %s19, 3
    %p96 = por %p94, %p95
    %p98 = scmp.ne.s32.totalorder %s83, %s97
    %p99 = scmp.eq.s32.totalorder %s19, 0
    %p100 = por %p98, %p99
    %s102 = sadd.s32 %s101, 1
    %p105 = scmp.eq.s32.totalorder %s13, 3
    %p106 = scmp.ne.s32.totalorder %s101, %s103
    %p107 = scmp.eq.s32.totalorder %s13, 0
    %p108 = por %p106, %p107
    %p109 = scmp.ne.s32.totalorder %s101, %s103
    %p110 = scmp.eq.s32.totalorder %s18, 3
    %p111 = por %p109, %p110
    %p112 = scmp.ne.s32.totalorder %s103, %s104
    %p113 = scmp.eq.s32.totalorder %s18, 0
    %p114 = por %p112, %p113
    %p115 = scmp.ne.s32.totalorder %s103, %s104
    %p116 = scmp.eq.s32.totalorder %s19, 3
    %p117 = por %p115, %p116
    %p119 = scmp.ne.s32.totalorder %s104, %s118
    %p120 = scmp.eq.s32.totalorder %s19, 0
    %p121 = por %p119, %p120
    %s123 = sadd.s32 %s122, 1
    %p126 = scmp.eq.s32.totalorder %s13, 3
    %p127 = scmp.ne.s32.totalorder %s122, %s124
    %p128 = scmp.eq.s32.totalorder %s13, 0
    %p129 = por %p127, %p128
    %p130 = scmp.ne.s32.totalorder %s122, %s124
    %p131 = scmp.eq.s32.totalorder %s18, 3
    %p132 = por %p130, %p131
    %p133 = scmp.ne.s32.totalorder %s124, %s125
    %p134 = scmp.eq.s32.totalorder %s18, 0
    %p135 = por %p133, %p134
    %p136 = scmp.ne.s32.totalorder %s124, %s125
    %p137 = scmp.eq.s32.totalorder %s19, 3
    %p138 = por %p136, %p137
    %p140 = scmp.ne.s32.totalorder %s125, %s139
    %p141 = scmp.eq.s32.totalorder %s19, 0
    %p142 = por %p140, %p141
    %s143 = ssub.s32 %s20, %s32
    %s144 = ssub.s32 %s21, %s28
    %s145 = sor.u32 %s143, %s144
    %p146 = scmp.eq.s32.totalorder %s145, 0
    %s148 = sadd.s32 %s147, 1
    %s149 = scalar_select %p146, %s147, %s148
    %p152 = pneg %p146
    %p153 = scmp.eq.s32.totalorder %s13, 3
    %p154 = por %p152, %p153
    %p155 = scmp.ne.s32.totalorder %s147, %s150
    %p156 = scmp.eq.s32.totalorder %s13, 0
    %p157 = por %p155, %p156
    %p158 = scmp.ne.s32.totalorder %s147, %s150
    %p159 = scmp.eq.s32.totalorder %s18, 3
    %p160 = por %p158, %p159
    %p161 = scmp.ne.s32.totalorder %s150, %s151
    %p162 = scmp.eq.s32.totalorder %s18, 0
    %p163 = por %p161, %p162
    %p164 = scmp.ne.s32.totalorder %s150, %s151
    %p165 = scmp.eq.s32.totalorder %s19, 3
    %p166 = por %p164, %p165
    %p168 = scmp.ne.s32.totalorder %s151, %s167
    %p169 = scmp.eq.s32.totalorder %s19, 0
    %p170 = por %p168, %p169
    %s171 = ssub.s32 %s20, %s32
    %s172 = ssub.s32 %s21, %s28
    %s173 = sor.u32 %s171, %s172
    %p174 = scmp.eq.s32.totalorder %s173, 0
    %s176 = sadd.s32 %s175, 1
    %s177 = scalar_select %p174, %s175, %s176
    %p180 = pneg %p174
    %p181 = scmp.eq.s32.totalorder %s13, 3
    %p182 = por %p180, %p181
    %p183 = scmp.ne.s32.totalorder %s175, %s178
    %p184 = scmp.eq.s32.totalorder %s13, 0
    %p185 = por %p183, %p184
    %p186 = scmp.ne.s32.totalorder %s175, %s178
    %p187 = scmp.eq.s32.totalorder %s18, 3
    %p188 = por %p186, %p187
    %p189 = scmp.ne.s32.totalorder %s178, %s179
    %p190 = scmp.eq.s32.totalorder %s18, 0
    %p191 = por %p189, %p190
    %p192 = scmp.ne.s32.totalorder %s178, %s179
    %p193 = scmp.eq.s32.totalorder %s19, 3
    %p194 = por %p192, %p193
    %p196 = scmp.ne.s32.totalorder %s179, %s195
    %p197 = scmp.eq.s32.totalorder %s19, 0
    %p198 = por %p196, %p197
    %p199 = scmp.le.s32.totalorder 1, %s13
    %p200 = scmp.lt.s32.totalorder %s13, 5
    %p201 = pnand %p199, %p200
    %p202 = pneg %p201
    // Predicated region
    $region9: #{conv_block_forward.4} parent=5 // pred_check
      _
    $region10: #{conv_block_forward.4} parent=5 // pred_check_branch
      %204 = sbr.rel (%p201) target = $region12
    $region11: #{conv_block_forward.4} parent=5 // pred_region
      %s205 = ssub.s32 %s13, 1
      // Predicated region
      $region13: #{conv_block_forward.4} parent=11 // pred_check
        %p206 = pneg %p72
      $region14: #{conv_block_forward.4} parent=11 // pred_check_branch
        %208 = sbr.rel (%p206) target = $region16
      $region15: #{conv_block_forward.4} parent=11 // pred_region
        _
      $region16: #{conv_block_forward.4} parent=11 // pred_fallthru
        _
      // Predicated region
      $region17: #{conv_block_forward.4} parent=11 // pred_check
        %p209 = pneg %p93
      $region18: #{conv_block_forward.4} parent=11 // pred_check_branch
        %211 = sbr.rel (%p209) target = $region20
      $region19: #{conv_block_forward.4} parent=11 // pred_region
        _
      $region20: #{conv_block_forward.4} parent=11 // pred_fallthru
        _
      // Predicated region
      $region21: #{conv_block_forward.4} parent=11 // pred_check
        %p212 = pneg %p114
      $region22: #{conv_block_forward.4} parent=11 // pred_check_branch
        %214 = sbr.rel (%p212) target = $region24
      $region23: #{conv_block_forward.4} parent=11 // pred_region
        _
      $region24: #{conv_block_forward.4} parent=11 // pred_fallthru
        _
      // Predicated region
      $region25: #{conv_block_forward.4} parent=11 // pred_check
        %p215 = pneg %p135
      $region26: #{conv_block_forward.4} parent=11 // pred_check_branch
        %217 = sbr.rel (%p215) target = $region28
      $region27: #{conv_block_forward.4} parent=11 // pred_region
        _
      $region28: #{conv_block_forward.4} parent=11 // pred_fallthru
        _
    $region12: #{conv_block_forward.4} parent=5 // pred_fallthru
      _
    %p218 = scmp.lt.s32.totalorder %s13, 4
    // Predicated region
    $region29: #{conv_block_forward.4} parent=5 // pred_check
      %p219 = pneg %p218
    $region30: #{conv_block_forward.4} parent=5 // pred_check_branch
      %221 = sbr.rel (%p219) target = $region32
    $region31: #{conv_block_forward.4} parent=5 // pred_region
      // Predicated region
      $region33: #{conv_block_forward.4} parent=31 // pred_check
        %p222 = pneg %p45
      $region34: #{conv_block_forward.4} parent=31 // pred_check_branch
        %224 = sbr.rel (%p222) target = $region36
      $region35: #{conv_block_forward.4} parent=31 // pred_region
        %p225 = scmp.lt.s32.totalorder %s20, 1
        %s226 = scalar_select %p225, %s20, 1
        %s227 = smul.addr %s226, 54
        %s228 = smul.addr %s227, 4
        %s229 = scalar_lea.vmem %s0, %s228
      $region36: #{conv_block_forward.4} parent=31 // pred_fallthru
        _
    $region32: #{conv_block_forward.4} parent=5 // pred_fallthru
      _
    %p230 = scmp.le.s32.totalorder 1, %s13
    %p231 = scmp.lt.s32.totalorder %s13, 5
    %p232 = pnand %p230, %p231
    %p233 = pneg %p232
    // Predicated region
    $region37: #{conv_block_forward.4} parent=5 // pred_check
      _
    $region38: #{conv_block_forward.4} parent=5 // pred_check_branch
      %235 = sbr.rel (%p232) target = $region40
    $region39: #{conv_block_forward.4} parent=5 // pred_region
      %s236 = ssub.s32 %s13, 1
      %p237 = scmp.lt.s32.totalorder %s22, 1
      %s238 = scalar_select %p237, %s22, 1
      %s239 = smul.addr %s238, 54
      %s240 = smul.addr %s239, 4
      %s241 = scalar_lea.vmem %s0, %s240
      %p242 = pneg %p51
      %p243 = pneg %p48
      %p244 = pneg %p72
      %p245 = pneg %p69
      %p246 = pneg %p93
      %p247 = pneg %p90
      %p248 = pneg %p114
      %p249 = pneg %p111
      %p250 = pneg %p135
      %p251 = pneg %p132
      %p252 = pneg %p163
      %p253 = pneg %p160
      %s254 = smul.u32 8, %s23
      %p255 = scmp.lt.s32.totalorder %s22, 1
      %s256 = scalar_select %p255, %s22, 1
      %p257 = scmp.lt.s32.totalorder %s254, 15
      %s258 = scalar_select %p257, %s254, 15
      %s259 = smul.addr %s258, 2
      %s260 = smul.addr %s256, 32
      %s261 = sadd.s32 %s259, %s260
      %s262 = smul.addr %s261, 4
      %s263 = scalar_lea.vmem %s5, %s262
      %p264 = pneg %p191
      %p265 = pneg %p188
      %p266 = scmp.lt.s32.totalorder %s22, 1
      %s267 = scalar_select %p266, %s22, 1
      %p268 = scmp.lt.s32.totalorder %s23, 1
      %s269 = scalar_select %p268, %s23, 1
      %s270 = smul.addr %s267, 2
      %s271 = sadd.s32 %s269, %s270
      %s272 = smul.addr %s271, 2
      %s273 = scalar_lea.vmem %s6, %s272
      %p274 = scmp.lt.s32.totalorder %s22, 1
      %s275 = scalar_select %p274, %s22, 1
      %s276 = smul.addr %s275, 54
      %s277 = smul.addr %s276, 4
      %s278 = scalar_lea.vmem %s0, %s277
      %s279 = smul.u32 8, %s23
      %p280 = scmp.lt.s32.totalorder %s22, 1
      %s281 = scalar_select %p280, %s22, 1
      %p282 = scmp.lt.s32.totalorder %s279, 15
      %s283 = scalar_select %p282, %s279, 15
      %s284 = smul.addr %s283, 2
      %s285 = smul.addr %s281, 32
      %s286 = sadd.s32 %s284, %s285
      %s287 = smul.addr %s286, 4
      %s288 = scalar_lea.vmem %s5, %s287
      %s289 = smul.u32 8, %s23
      %p290 = scmp.lt.s32.totalorder %s22, 1
      %s291 = scalar_select %p290, %s22, 1
      %p292 = scmp.lt.s32.totalorder %s23, 1
      %s293 = scalar_select %p292, %s23, 1
      %s294 = smul.addr %s291, 2
      %s295 = sadd.s32 %s293, %s294
      %s296 = smul.addr %s295, 2
      %s297 = scalar_lea.vmem %s6, %s296
      %s299 = smul.u32 %s23, 8
      %s300 = smul.u32 %s299, 3
      %s301 = smul.addr %s300, 4
      %s302 = scalar_lea.vmem %s278, %s301
      %v303 = vld [vmem:[%s302] sm:$0xf]
      %v304 = vld [vmem:[%s302 + $0x4] sm:$0xf]
      %v305 = vld [vmem:[%s302 + $0x8] sm:$0x1]
      %v306 = vld [vmem:[%s302 + $0xc] sm:$0xf]
      %v307 = vld [vmem:[%s302 + $0x10] sm:$0xf]
      %v308 = vld [vmem:[%s302 + $0x14] sm:$0x1]
      %v309 = vld [vmem:[%s302 + $0x18] sm:$0xf]
      %v310 = vld [vmem:[%s302 + $0x1c] sm:$0xf]
      %v311 = vld [vmem:[%s302 + $0x20] sm:$0x1]
      %v312 = vld [vmem:[%s302 + $0x24] sm:$0xf]
      %v313 = vld [vmem:[%s302 + $0x28] sm:$0xf]
      %v314 = vld [vmem:[%s302 + $0x2c] sm:$0x1]
      %v315 = vld [vmem:[%s302 + $0x30] sm:$0xf]
      %v316 = vld [vmem:[%s302 + $0x34] sm:$0xf]
      %v317 = vld [vmem:[%s302 + $0x38] sm:$0x1]
      %v318 = vld [vmem:[%s302 + $0x3c] sm:$0xf]
      %v319 = vld [vmem:[%s302 + $0x40] sm:$0xf]
      %v320 = vld [vmem:[%s302 + $0x44] sm:$0x1]
      %v321 = vld [vmem:[%s302 + $0x48] sm:$0xf]
      %v322 = vld [vmem:[%s302 + $0x4c] sm:$0xf]
      %v323 = vld [vmem:[%s302 + $0x50] sm:$0x1]
      %v324 = vld [vmem:[%s302 + $0x54] sm:$0xf]
      %v325 = vld [vmem:[%s302 + $0x58] sm:$0xf]
      %v326 = vld [vmem:[%s302 + $0x5c] sm:$0x1]
      %v327 = vld [vmem:[%s302 + $0x60] sm:$0xf]
      %v328 = vld [vmem:[%s302 + $0x64] sm:$0xf]
      %v329 = vld [vmem:[%s302 + $0x68] sm:$0x1]
      %v330 = vld [vmem:[%s302 + $0x6c] sm:$0xf]
      %v331 = vld [vmem:[%s302 + $0x70] sm:$0xf]
      %v332 = vld [vmem:[%s302 + $0x74] sm:$0x1]
      %v333 = vld [vmem:[%s3] sm:$0x1]
      %v334 = vld [vmem:[%s4] sm:$0x1]
      %v335 = vunpack.c.l.bf16 %v303
      %v336 = vunpack.c.l.bf16 %v304
      %v337 = vunpack.c.l.bf16 %v305
      %v338 = vunpack.c.l.bf16 %v306
      %v339 = vunpack.c.l.bf16 %v307
      %v340 = vunpack.c.l.bf16 %v308
      %v341 = vunpack.c.l.bf16 %v309
      %v342 = vunpack.c.l.bf16 %v310
      %v343 = vunpack.c.l.bf16 %v311
      %v344 = vunpack.c.l.bf16 %v312
      %v345 = vunpack.c.l.bf16 %v313
      %v346 = vunpack.c.l.bf16 %v314
      %v347 = vunpack.c.l.bf16 %v315
      %v348 = vunpack.c.l.bf16 %v316
      %v349 = vunpack.c.l.bf16 %v317
      %v350 = vunpack.c.l.bf16 %v318
      %v351 = vunpack.c.l.bf16 %v319
      %v352 = vunpack.c.l.bf16 %v320
      %v353 = vunpack.c.l.bf16 %v321
      %v354 = vunpack.c.l.bf16 %v322
      %v355 = vunpack.c.l.bf16 %v323
      %v356 = vunpack.c.l.bf16 %v324
      %v357 = vunpack.c.l.bf16 %v325
      %v358 = vunpack.c.l.bf16 %v326
      %v359 = vunpack.c.l.bf16 %v327
      %v360 = vunpack.c.l.bf16 %v328
      %v361 = vunpack.c.l.bf16 %v329
      %v362 = vunpack.c.l.bf16 %v330
      %v363 = vunpack.c.l.bf16 %v331
      %v364 = vunpack.c.l.bf16 %v332
      %v366 = vlaneseq
      %v367 = vshrl.u32 %v366, 7
      %v368 = vsub.s32 0, %v367
      %v369 = vrot.slane %v333, %v368
      %v371 = vmul.f32 %v335, %v369
      %v372 = vmul.f32 %v336, %v369
      %v373 = vmul.f32 %v337, %v369
      %v374 = vmul.f32 %v338, %v369
      %v375 = vmul.f32 %v339, %v369
      %v376 = vmul.f32 %v340, %v369
      %v377 = vmul.f32 %v341, %v369
      %v378 = vmul.f32 %v342, %v369
      %v379 = vmul.f32 %v343, %v369
      %v380 = vmul.f32 %v344, %v369
      %v381 = vmul.f32 %v345, %v369
      %v382 = vmul.f32 %v346, %v369
      %v383 = vmul.f32 %v347, %v369
      %v384 = vmul.f32 %v348, %v369
      %v385 = vmul.f32 %v349, %v369
      %v386 = vmul.f32 %v350, %v369
      %v387 = vmul.f32 %v351, %v369
      %v388 = vmul.f32 %v352, %v369
      %v389 = vmul.f32 %v353, %v369
      %v390 = vmul.f32 %v354, %v369
      %v391 = vmul.f32 %v355, %v369
      %v392 = vmul.f32 %v356, %v369
      %v393 = vmul.f32 %v357, %v369
      %v394 = vmul.f32 %v358, %v369
      %v395 = vmul.f32 %v359, %v369
      %v396 = vmul.f32 %v360, %v369
      %v397 = vmul.f32 %v361, %v369
      %v398 = vmul.f32 %v362, %v369
      %v399 = vmul.f32 %v363, %v369
      %v400 = vmul.f32 %v364, %v369
      %v402 = vlaneseq
      %v403 = vshrl.u32 %v402, 7
      %v404 = vsub.s32 0, %v403
      %v405 = vrot.slane %v334, %v404
      %v407 = vadd.f32 %v371, %v405
      %v408 = vadd.f32 %v372, %v405
      %v409 = vadd.f32 %v373, %v405
      %v410 = vadd.f32 %v374, %v405
      %v411 = vadd.f32 %v375, %v405
      %v412 = vadd.f32 %v376, %v405
      %v413 = vadd.f32 %v377, %v405
      %v414 = vadd.f32 %v378, %v405
      %v415 = vadd.f32 %v379, %v405
      %v416 = vadd.f32 %v380, %v405
      %v417 = vadd.f32 %v381, %v405
      %v418 = vadd.f32 %v382, %v405
      %v419 = vadd.f32 %v383, %v405
      %v420 = vadd.f32 %v384, %v405
      %v421 = vadd.f32 %v385, %v405
      %v422 = vadd.f32 %v386, %v405
      %v423 = vadd.f32 %v387, %v405
      %v424 = vadd.f32 %v388, %v405
      %v425 = vadd.f32 %v389, %v405
      %v426 = vadd.f32 %v390, %v405
      %v427 = vadd.f32 %v391, %v405
      %v428 = vadd.f32 %v392, %v405
      %v429 = vadd.f32 %v393, %v405
      %v430 = vadd.f32 %v394, %v405
      %v431 = vadd.f32 %v395, %v405
      %v432 = vadd.f32 %v396, %v405
      %v433 = vadd.f32 %v397, %v405
      %v434 = vadd.f32 %v398, %v405
      %v435 = vadd.f32 %v399, %v405
      %v436 = vadd.f32 %v400, %v405
      %v437 = vmax.f32 %v407, 0.0
      %v438 = vmax.f32 %v408, 0.0
      %v439 = vmax.f32 %v409, 0.0
      %v440 = vmax.f32 %v410, 0.0
      %v441 = vmax.f32 %v411, 0.0
      %v442 = vmax.f32 %v412, 0.0
      %v443 = vmax.f32 %v413, 0.0
      %v444 = vmax.f32 %v414, 0.0
      %v445 = vmax.f32 %v415, 0.0
      %v446 = vmax.f32 %v416, 0.0
      %v447 = vmax.f32 %v417, 0.0
      %v448 = vmax.f32 %v418, 0.0
      %v449 = vmax.f32 %v419, 0.0
      %v450 = vmax.f32 %v420, 0.0
      %v451 = vmax.f32 %v421, 0.0
      %v452 = vmax.f32 %v422, 0.0
      %v453 = vmax.f32 %v423, 0.0
      %v454 = vmax.f32 %v424, 0.0
      %v455 = vmax.f32 %v425, 0.0
      %v456 = vmax.f32 %v426, 0.0
      %v457 = vmax.f32 %v427, 0.0
      %v458 = vmax.f32 %v428, 0.0
      %v459 = vmax.f32 %v429, 0.0
      %v460 = vmax.f32 %v430, 0.0
      %v461 = vmax.f32 %v431, 0.0
      %v462 = vmax.f32 %v432, 0.0
      %v463 = vmax.f32 %v433, 0.0
      %v464 = vmax.f32 %v434, 0.0
      %v465 = vmax.f32 %v435, 0.0
      %v466 = vmax.f32 %v436, 0.0
      %v467 = vstv %s299
      %v468 = vadd.s32 %v467, 1
      %v469 = vadd.s32 %v467, 2
      %v470 = vadd.s32 %v467, 3
      %v471 = vadd.s32 %v467, 4
      %v472 = vadd.s32 %v467, 5
      %v473 = vadd.s32 %v467, 6
      %v474 = vadd.s32 %v467, 7
      %v475 = vadd.s32 %v467, 8
      %v476 = vadd.s32 %v467, 9
      %v477 = vlaneseq
      %v478 = vshrl.u32 %v477, 7
      %v479 = vadd.s32 %v478, 8
      %v480 = vadd.s32 %v478, 16
      %vm481 = vcmp.gt.s32.totalorder %v467, 0
      %vm482 = vcmp.gt.s32.totalorder %v468, 0
      %vm483 = vcmp.gt.s32.totalorder %v469, 0
      %vm484 = vcmp.gt.s32.totalorder %v470, 0
      %vm485 = vcmp.gt.s32.totalorder %v471, 0
      %vm486 = vcmp.gt.s32.totalorder %v472, 0
      %vm487 = vcmp.gt.s32.totalorder %v473, 0
      %vm488 = vcmp.gt.s32.totalorder %v474, 0
      %vm489 = vcmp.gt.s32.totalorder %v475, 0
      %vm490 = vcmp.gt.s32.totalorder %v476, 0
      %vm491 = vcmp.lt.s32.totalorder %v467, 17
      %vm492 = vcmp.lt.s32.totalorder %v468, 17
      %vm493 = vcmp.lt.s32.totalorder %v469, 17
      %vm494 = vcmp.lt.s32.totalorder %v470, 17
      %vm495 = vcmp.lt.s32.totalorder %v471, 17
      %vm496 = vcmp.lt.s32.totalorder %v472, 17
      %vm497 = vcmp.lt.s32.totalorder %v473, 17
      %vm498 = vcmp.lt.s32.totalorder %v474, 17
      %vm499 = vcmp.lt.s32.totalorder %v475, 17
      %vm500 = vcmp.lt.s32.totalorder %v476, 17
      %vm501 = vmand %vm481, %vm491
      %vm502 = vmand %vm482, %vm492
      %vm503 = vmand %vm483, %vm493
      %vm504 = vmand %vm484, %vm494
      %vm505 = vmand %vm485, %vm495
      %vm506 = vmand %vm486, %vm496
      %vm507 = vmand %vm487, %vm497
      %vm508 = vmand %vm488, %vm498
      %vm509 = vmand %vm489, %vm499
      %vm510 = vmand %vm490, %vm500
      %vm511 = vcmp.gt.s32.totalorder %v478, 0
      %vm512 = vcmp.gt.s32.totalorder %v479, 0
      %vm513 = vcmp.gt.s32.totalorder %v480, 0
      %vm514 = vmand %vm501, %vm511
      %vm515 = vmand %vm501, %vm512
      %vm516 = vmand %vm501, %vm513
      %vm517 = vmand %vm502, %vm511
      %vm518 = vmand %vm502, %vm512
      %vm519 = vmand %vm502, %vm513
      %vm520 = vmand %vm503, %vm511
      %vm521 = vmand %vm503, %vm512
      %vm522 = vmand %vm503, %vm513
      %vm523 = vmand %vm504, %vm511
      %vm524 = vmand %vm504, %vm512
      %vm525 = vmand %vm504, %vm513
      %vm526 = vmand %vm505, %vm511
      %vm527 = vmand %vm505, %vm512
      %vm528 = vmand %vm505, %vm513
      %vm529 = vmand %vm506, %vm511
      %vm530 = vmand %vm506, %vm512
      %vm531 = vmand %vm506, %vm513
      %vm532 = vmand %vm507, %vm511
      %vm533 = vmand %vm507, %vm512
      %vm534 = vmand %vm507, %vm513
      %vm535 = vmand %vm508, %vm511
      %vm536 = vmand %vm508, %vm512
      %vm537 = vmand %vm508, %vm513
      %vm538 = vmand %vm509, %vm511
      %vm539 = vmand %vm509, %vm512
      %vm540 = vmand %vm509, %vm513
      %vm541 = vmand %vm510, %vm511
      %vm542 = vmand %vm510, %vm512
      %vm543 = vmand %vm510, %vm513
      %vm544 = vcmp.lt.s32.totalorder %v478, 17
      %vm545 = vcmp.lt.s32.totalorder %v479, 17
      %vm546 = vcmp.lt.s32.totalorder %v480, 17
      %vm547 = vmand %vm514, %vm544
      %vm548 = vmand %vm515, %vm545
      %vm549 = vmand %vm516, %vm546
      %vm550 = vmand %vm517, %vm544
      %vm551 = vmand %vm518, %vm545
      %vm552 = vmand %vm519, %vm546
      %vm553 = vmand %vm520, %vm544
      %vm554 = vmand %vm521, %vm545
      %vm555 = vmand %vm522, %vm546
      %vm556 = vmand %vm523, %vm544
      %vm557 = vmand %vm524, %vm545
      %vm558 = vmand %vm525, %vm546
      %vm559 = vmand %vm526, %vm544
      %vm560 = vmand %vm527, %vm545
      %vm561 = vmand %vm528, %vm546
      %vm562 = vmand %vm529, %vm544
      %vm563 = vmand %vm530, %vm545
      %vm564 = vmand %vm531, %vm546
      %vm565 = vmand %vm532, %vm544
      %vm566 = vmand %vm533, %vm545
      %vm567 = vmand %vm534, %vm546
      %vm568 = vmand %vm535, %vm544
      %vm569 = vmand %vm536, %vm545
      %vm570 = vmand %vm537, %vm546
      %vm571 = vmand %vm538, %vm544
      %vm572 = vmand %vm539, %vm545
      %vm573 = vmand %vm540, %vm546
      %vm574 = vmand %vm541, %vm544
      %vm575 = vmand %vm542, %vm545
      %vm576 = vmand %vm543, %vm546
      %v577 = vsel %vm547, %v437, 0.0
      %v578 = vsel %vm548, %v438, 0.0
      %v579 = vsel %vm549, %v439, 0.0
      %v580 = vsel %vm550, %v440, 0.0
      %v581 = vsel %vm551, %v441, 0.0
      %v582 = vsel %vm552, %v442, 0.0
      %v583 = vsel %vm553, %v443, 0.0
      %v584 = vsel %vm554, %v444, 0.0
      %v585 = vsel %vm555, %v445, 0.0
      %v586 = vsel %vm556, %v446, 0.0
      %v587 = vsel %vm557, %v447, 0.0
      %v588 = vsel %vm558, %v448, 0.0
      %v589 = vsel %vm559, %v449, 0.0
      %v590 = vsel %vm560, %v450, 0.0
      %v591 = vsel %vm561, %v451, 0.0
      %v592 = vsel %vm562, %v452, 0.0
      %v593 = vsel %vm563, %v453, 0.0
      %v594 = vsel %vm564, %v454, 0.0
      %v595 = vsel %vm565, %v455, 0.0
      %v596 = vsel %vm566, %v456, 0.0
      %v597 = vsel %vm567, %v457, 0.0
      %v598 = vsel %vm568, %v458, 0.0
      %v599 = vsel %vm569, %v459, 0.0
      %v600 = vsel %vm570, %v460, 0.0
      %v601 = vsel %vm571, %v461, 0.0
      %v602 = vsel %vm572, %v462, 0.0
      %v603 = vsel %vm573, %v463, 0.0
      %v604 = vsel %vm574, %v464, 0.0
      %v605 = vsel %vm575, %v465, 0.0
      %v606 = vsel %vm576, %v466, 0.0
      %v607 = vpack.c.bf16 %v578, %v577
      %v608 = vpack.c.bf16 %v579, %v579
      %v609 = vpack.c.bf16 %v581, %v580
      %v610 = vpack.c.bf16 %v582, %v582
      %v611 = vpack.c.bf16 %v584, %v583
      %v612 = vpack.c.bf16 %v585, %v585
      %v613 = vpack.c.bf16 %v587, %v586
      %v614 = vpack.c.bf16 %v588, %v588
      %v615 = vpack.c.bf16 %v590, %v589
      %v616 = vpack.c.bf16 %v591, %v591
      %v617 = vpack.c.bf16 %v593, %v592
      %v618 = vpack.c.bf16 %v594, %v594
      %v619 = vpack.c.bf16 %v596, %v595
      %v620 = vpack.c.bf16 %v597, %v597
      %v621 = vpack.c.bf16 %v599, %v598
      %v622 = vpack.c.bf16 %v600, %v600
      %v623 = vpack.c.bf16 %v602, %v601
      %v624 = vpack.c.bf16 %v603, %v603
      %v625 = vpack.c.bf16 %v605, %v604
      %v626 = vpack.c.bf16 %v606, %v606
      %vm627 = vsmask.f32 7424
      %v629 = vshrl.u32 %v607, 16
      %v631 = vshll.u32 %v607, 16
      %v633 = vrot.slane %v631, 1
      %v634 = vor.u32 %v629, %v633
      %v636 = vshll.u32 %v608, 16
      %v638 = vrot.slane %v636, 1
      %v639 = vsel %vm627, %v634, %v638
      %v641 = vshrl.u32 %v609, 16
      %v643 = vshll.u32 %v609, 16
      %v645 = vrot.slane %v643, 1
      %v646 = vor.u32 %v641, %v645
      %v648 = vshll.u32 %v610, 16
      %v650 = vrot.slane %v648, 1
      %v651 = vsel %vm627, %v646, %v650
      %v653 = vshrl.u32 %v611, 16
      %v655 = vshll.u32 %v611, 16
      %v657 = vrot.slane %v655, 1
      %v658 = vor.u32 %v653, %v657
      %v660 = vshll.u32 %v612, 16
      %v662 = vrot.slane %v660, 1
      %v663 = vsel %vm627, %v658, %v662
      %v665 = vshrl.u32 %v613, 16
      %v667 = vshll.u32 %v613, 16
      %v669 = vrot.slane %v667, 1
      %v670 = vor.u32 %v665, %v669
      %v672 = vshll.u32 %v614, 16
      %v674 = vrot.slane %v672, 1
      %v675 = vsel %vm627, %v670, %v674
      %v677 = vshrl.u32 %v615, 16
      %v679 = vshll.u32 %v615, 16
      %v681 = vrot.slane %v679, 1
      %v682 = vor.u32 %v677, %v681
      %v684 = vshll.u32 %v616, 16
      %v686 = vrot.slane %v684, 1
      %v687 = vsel %vm627, %v682, %v686
      %v689 = vshrl.u32 %v617, 16
      %v691 = vshll.u32 %v617, 16
      %v693 = vrot.slane %v691, 1
      %v694 = vor.u32 %v689, %v693
      %v696 = vshll.u32 %v618, 16
      %v698 = vrot.slane %v696, 1
      %v699 = vsel %vm627, %v694, %v698
      %v701 = vshrl.u32 %v619, 16
      %v703 = vshll.u32 %v619, 16
      %v705 = vrot.slane %v703, 1
      %v706 = vor.u32 %v701, %v705
      %v708 = vshll.u32 %v620, 16
      %v710 = vrot.slane %v708, 1
      %v711 = vsel %vm627, %v706, %v710
      %v713 = vshrl.u32 %v621, 16
      %v715 = vshll.u32 %v621, 16
      %v717 = vrot.slane %v715, 1
      %v718 = vor.u32 %v713, %v717
      %v720 = vshll.u32 %v622, 16
      %v722 = vrot.slane %v720, 1
      %v723 = vsel %vm627, %v718, %v722
      %724 = vrot.lane.b32.xlu0 %v639, 8
      %v725 = vpop.permute.xlu0 %724
      %726 = vrot.lane.b32.xlu0 %v651, 8
      %v727 = vpop.permute.xlu0 %726
      %728 = vrot.lane.b32.xlu0 %v663, 8
      %v729 = vpop.permute.xlu0 %728
      %730 = vrot.lane.b32.xlu0 %v675, 8
      %v731 = vpop.permute.xlu0 %730
      %732 = vrot.lane.b32.xlu0 %v687, 8
      %v733 = vpop.permute.xlu0 %732
      %734 = vrot.lane.b32.xlu0 %v699, 8
      %v735 = vpop.permute.xlu0 %734
      %736 = vrot.lane.b32.xlu0 %v711, 8
      %v737 = vpop.permute.xlu0 %736
      %738 = vrot.lane.b32.xlu0 %v723, 8
      %v739 = vpop.permute.xlu0 %738
      %vm756 = vcmask 1046528
      %v757 = vrot.slane %v607, 1
      %v758 = vrot.slane %v608, 1
      %v759 = vsel %vm756, %v757, %v758
      %v760 = vrot.slane %v609, 1
      %v761 = vrot.slane %v610, 1
      %v762 = vsel %vm756, %v760, %v761
      %v763 = vrot.slane %v611, 1
      %v764 = vrot.slane %v612, 1
      %v765 = vsel %vm756, %v763, %v764
      %v766 = vrot.slane %v613, 1
      %v767 = vrot.slane %v614, 1
      %v768 = vsel %vm756, %v766, %v767
      %v769 = vrot.slane %v615, 1
      %v770 = vrot.slane %v616, 1
      %v771 = vsel %vm756, %v769, %v770
      %v772 = vrot.slane %v617, 1
      %v773 = vrot.slane %v618, 1
      %v774 = vsel %vm756, %v772, %v773
      %v775 = vrot.slane %v619, 1
      %v776 = vrot.slane %v620, 1
      %v777 = vsel %vm756, %v775, %v776
      %v778 = vrot.slane %v621, 1
      %v779 = vrot.slane %v622, 1
      %v780 = vsel %vm756, %v778, %v779
      %781 = vrot.lane.b32.xlu0 %v759, 16
      %v782 = vpop.permute.xlu0 %781
      %783 = vrot.lane.b32.xlu0 %v762, 16
      %v784 = vpop.permute.xlu0 %783
      %785 = vrot.lane.b32.xlu0 %v765, 16
      %v786 = vpop.permute.xlu0 %785
      %787 = vrot.lane.b32.xlu0 %v768, 16
      %v788 = vpop.permute.xlu0 %787
      %789 = vrot.lane.b32.xlu0 %v771, 16
      %v790 = vpop.permute.xlu0 %789
      %791 = vrot.lane.b32.xlu0 %v774, 16
      %v792 = vpop.permute.xlu0 %791
      %793 = vrot.lane.b32.xlu0 %v777, 16
      %v794 = vpop.permute.xlu0 %793
      %795 = vrot.lane.b32.xlu0 %v780, 16
      %v796 = vpop.permute.xlu0 %795
      %798 = vrot.lane.b32.xlu0 %v609, 24
      %v799 = vpop.permute.xlu0 %798
      %800 = vrot.lane.b32.xlu0 %v611, 24
      %v801 = vpop.permute.xlu0 %800
      %802 = vrot.lane.b32.xlu0 %v613, 24
      %v803 = vpop.permute.xlu0 %802
      %804 = vrot.lane.b32.xlu0 %v615, 24
      %v805 = vpop.permute.xlu0 %804
      %806 = vrot.lane.b32.xlu0 %v617, 24
      %v807 = vpop.permute.xlu0 %806
      %808 = vrot.lane.b32.xlu0 %v619, 24
      %v809 = vpop.permute.xlu0 %808
      %810 = vrot.lane.b32.xlu0 %v621, 24
      %v811 = vpop.permute.xlu0 %810
      %812 = vrot.lane.b32.xlu0 %v623, 24
      %v813 = vpop.permute.xlu0 %812
      %v815 = vshrl.u32 %v623, 16
      %v817 = vshll.u32 %v623, 16
      %v819 = vrot.slane %v817, 1
      %v820 = vor.u32 %v815, %v819
      %v822 = vshll.u32 %v624, 16
      %v824 = vrot.slane %v822, 1
      %v825 = vsel %vm627, %v820, %v824
      %826 = vrot.lane.b32.xlu0 %v651, 32
      %v827 = vpop.permute.xlu0 %826
      %828 = vrot.lane.b32.xlu0 %v663, 32
      %v829 = vpop.permute.xlu0 %828
      %830 = vrot.lane.b32.xlu0 %v675, 32
      %v831 = vpop.permute.xlu0 %830
      %832 = vrot.lane.b32.xlu0 %v687, 32
      %v833 = vpop.permute.xlu0 %832
      %834 = vrot.lane.b32.xlu0 %v699, 32
      %v835 = vpop.permute.xlu0 %834
      %836 = vrot.lane.b32.xlu0 %v711, 32
      %v837 = vpop.permute.xlu0 %836
      %838 = vrot.lane.b32.xlu0 %v723, 32
      %v839 = vpop.permute.xlu0 %838
      %840 = vrot.lane.b32.xlu0 %v825, 32
      %v841 = vpop.permute.xlu0 %840
      %v843 = vrot.slane %v623, 1
      %v844 = vrot.slane %v624, 1
      %v845 = vsel %vm756, %v843, %v844
      %846 = vrot.lane.b32.xlu0 %v762, 40
      %v847 = vpop.permute.xlu0 %846
      %848 = vrot.lane.b32.xlu0 %v765, 40
      %v849 = vpop.permute.xlu0 %848
      %850 = vrot.lane.b32.xlu0 %v768, 40
      %v851 = vpop.permute.xlu0 %850
      %852 = vrot.lane.b32.xlu0 %v771, 40
      %v853 = vpop.permute.xlu0 %852
      %854 = vrot.lane.b32.xlu0 %v774, 40
      %v855 = vpop.permute.xlu0 %854
      %856 = vrot.lane.b32.xlu0 %v777, 40
      %v857 = vpop.permute.xlu0 %856
      %858 = vrot.lane.b32.xlu0 %v780, 40
      %v859 = vpop.permute.xlu0 %858
      %860 = vrot.lane.b32.xlu0 %v845, 40
      %v861 = vpop.permute.xlu0 %860
      %863 = vrot.lane.b32.xlu0 %v611, 48
      %v864 = vpop.permute.xlu0 %863
      %865 = vrot.lane.b32.xlu0 %v613, 48
      %v866 = vpop.permute.xlu0 %865
      %867 = vrot.lane.b32.xlu0 %v615, 48
      %v868 = vpop.permute.xlu0 %867
      %869 = vrot.lane.b32.xlu0 %v617, 48
      %v870 = vpop.permute.xlu0 %869
      %871 = vrot.lane.b32.xlu0 %v619, 48
      %v872 = vpop.permute.xlu0 %871
      %873 = vrot.lane.b32.xlu0 %v621, 48
      %v874 = vpop.permute.xlu0 %873
      %875 = vrot.lane.b32.xlu0 %v623, 48
      %v876 = vpop.permute.xlu0 %875
      %877 = vrot.lane.b32.xlu0 %v625, 48
      %v878 = vpop.permute.xlu0 %877
      %v880 = vshrl.u32 %v625, 16
      %v882 = vshll.u32 %v625, 16
      %v884 = vrot.slane %v882, 1
      %v885 = vor.u32 %v880, %v884
      %v887 = vshll.u32 %v626, 16
      %v889 = vrot.slane %v887, 1
      %v890 = vsel %vm627, %v885, %v889
      %891 = vrot.lane.b32.xlu0 %v663, 56
      %v892 = vpop.permute.xlu0 %891
      %893 = vrot.lane.b32.xlu0 %v675, 56
      %v894 = vpop.permute.xlu0 %893
      %895 = vrot.lane.b32.xlu0 %v687, 56
      %v896 = vpop.permute.xlu0 %895
      %897 = vrot.lane.b32.xlu0 %v699, 56
      %v898 = vpop.permute.xlu0 %897
      %899 = vrot.lane.b32.xlu0 %v711, 56
      %v900 = vpop.permute.xlu0 %899
      %901 = vrot.lane.b32.xlu0 %v723, 56
      %v902 = vpop.permute.xlu0 %901
      %903 = vrot.lane.b32.xlu0 %v825, 56
      %v904 = vpop.permute.xlu0 %903
      %905 = vrot.lane.b32.xlu0 %v890, 56
      %v906 = vpop.permute.xlu0 %905
      %v908 = vrot.slane %v625, 1
      %v909 = vrot.slane %v626, 1
      %v910 = vsel %vm756, %v908, %v909
      %911 = vrot.lane.b32.xlu0 %v765, 64
      %v912 = vpop.permute.xlu0 %911
      %913 = vrot.lane.b32.xlu0 %v768, 64
      %v914 = vpop.permute.xlu0 %913
      %915 = vrot.lane.b32.xlu0 %v771, 64
      %v916 = vpop.permute.xlu0 %915
      %917 = vrot.lane.b32.xlu0 %v774, 64
      %v918 = vpop.permute.xlu0 %917
      %919 = vrot.lane.b32.xlu0 %v777, 64
      %v920 = vpop.permute.xlu0 %919
      %921 = vrot.lane.b32.xlu0 %v780, 64
      %v922 = vpop.permute.xlu0 %921
      %923 = vrot.lane.b32.xlu0 %v845, 64
      %v924 = vpop.permute.xlu0 %923
      %925 = vrot.lane.b32.xlu0 %v910, 64
      %v926 = vpop.permute.xlu0 %925
      %vm927 = vcmask 64512
      %v929 = vsel %vm927, %v607, %v725
      %v931 = vsel %vm927, %v609, %v727
      %v933 = vsel %vm927, %v611, %v729
      %v935 = vsel %vm927, %v613, %v731
      %v937 = vsel %vm927, %v615, %v733
      %v939 = vsel %vm927, %v617, %v735
      %v941 = vsel %vm927, %v619, %v737
      %v943 = vsel %vm927, %v621, %v739
      %vm944 = vcmask 130048
      %v946 = vsel %vm944, %v929, %v782
      %v948 = vsel %vm944, %v931, %v784
      %v950 = vsel %vm944, %v933, %v786
      %v952 = vsel %vm944, %v935, %v788
      %v954 = vsel %vm944, %v937, %v790
      %v956 = vsel %vm944, %v939, %v792
      %v958 = vsel %vm944, %v941, %v794
      %v960 = vsel %vm944, %v943, %v796
      %vm961 = vcmask 195584
      %v963 = vsel %vm961, %v946, %v799
      %v965 = vsel %vm961, %v948, %v801
      %v967 = vsel %vm961, %v950, %v803
      %v969 = vsel %vm961, %v952, %v805
      %v971 = vsel %vm961, %v954, %v807
      %v973 = vsel %vm961, %v956, %v809
      %v975 = vsel %vm961, %v958, %v811
      %v977 = vsel %vm961, %v960, %v813
      %vm978 = vcmask 261120
      %v980 = vsel %vm978, %v963, %v827
      %v982 = vsel %vm978, %v965, %v829
      %v984 = vsel %vm978, %v967, %v831
      %v986 = vsel %vm978, %v969, %v833
      %v988 = vsel %vm978, %v971, %v835
      %v990 = vsel %vm978, %v973, %v837
      %v992 = vsel %vm978, %v975, %v839
      %v994 = vsel %vm978, %v977, %v841
      %vm995 = vcmask 326656
      %v997 = vsel %vm995, %v980, %v847
      %v999 = vsel %vm995, %v982, %v849
      %v1001 = vsel %vm995, %v984, %v851
      %v1003 = vsel %vm995, %v986, %v853
      %v1005 = vsel %vm995, %v988, %v855
      %v1007 = vsel %vm995, %v990, %v857
      %v1009 = vsel %vm995, %v992, %v859
      %v1011 = vsel %vm995, %v994, %v861
      %vm1012 = vcmask 392192
      %v1014 = vsel %vm1012, %v997, %v864
      %v1016 = vsel %vm1012, %v999, %v866
      %v1018 = vsel %vm1012, %v1001, %v868
      %v1020 = vsel %vm1012, %v1003, %v870
      %v1022 = vsel %vm1012, %v1005, %v872
      %v1024 = vsel %vm1012, %v1007, %v874
      %v1026 = vsel %vm1012, %v1009, %v876
      %v1028 = vsel %vm1012, %v1011, %v878
      %vm1029 = vcmask 457728
      %v1031 = vsel %vm1029, %v1014, %v892
      %v1033 = vsel %vm1029, %v1016, %v894
      %v1035 = vsel %vm1029, %v1018, %v896
      %v1037 = vsel %vm1029, %v1020, %v898
      %v1039 = vsel %vm1029, %v1022, %v900
      %v1041 = vsel %vm1029, %v1024, %v902
      %v1043 = vsel %vm1029, %v1026, %v904
      %v1045 = vsel %vm1029, %v1028, %v906
      %vm1046 = vcmask 523264
      %v1048 = vsel %vm1046, %v1031, %v912
      %v1050 = vsel %vm1046, %v1033, %v914
      %v1052 = vsel %vm1046, %v1035, %v916
      %v1054 = vsel %vm1046, %v1037, %v918
      %v1056 = vsel %vm1046, %v1039, %v920
      %v1058 = vsel %vm1046, %v1041, %v922
      %v1060 = vsel %vm1046, %v1043, %v924
      %v1062 = vsel %vm1046, %v1045, %v926
      %v1063 = vld [vmem:[%s1] sm:$0xf]
      %v1064 = vld [vmem:[%s1 + $0x4] sm:$0xf]
      %v1065 = vld [vmem:[%s1 + $0x8] sm:$0xf]
      %v1066 = vld [vmem:[%s1 + $0xc] sm:$0xf]
      %v1067 = vld [vmem:[%s1 + $0x10] sm:$0xf]
      %v1068 = vld [vmem:[%s1 + $0x14] sm:$0xf]
      %v1069 = vld [vmem:[%s1 + $0x18] sm:$0xf]
      %v1070 = vld [vmem:[%s1 + $0x1c] sm:$0xf]
      %v1071 = vld [vmem:[%s1 + $0x20] sm:$0xf]
      %v1072 = vld [vmem:[%s2] sm:$0x1]
      %v1074 = vlaneseq
      %v1075 = vshrl.u32 %v1074, 7
      %v1076 = vsub.s32 0, %v1075
      %v1077 = vrot.slane %v1072, %v1076
      %v1088 = vunpack.c.l.b16 %v1063
      %v1089 = vunpack.c.l.b16 %v1064
      %v1090 = vunpack.c.l.b16 %v1065
      %v1091 = vunpack.c.l.b16 %v1066
      %v1092 = vunpack.c.l.b16 %v1067
      %v1093 = vunpack.c.l.b16 %v1068
      %v1094 = vunpack.c.l.b16 %v1069
      %v1095 = vunpack.c.l.b16 %v1070
      %v1096 = vunpack.c.l.b16 %v1071
      %v1097 = vpack.c.b16 %v1089, %v1088
      %v1098 = vpack.c.b16 %v1091, %v1090
      %v1099 = vpack.c.b16 %v1093, %v1092
      %v1100 = vpack.c.b16 %v1095, %v1094
      %v1101 = vpack.c.b16 %v1096, %v1096
      %vm1106 = vcmask 588800
      %v1107 = vsel %vm1106, %v1048, 0
      %v1109 = vsel %vm1106, %v1050, 0
      %v1111 = vsel %vm1106, %v1052, 0
      %v1113 = vsel %vm1106, %v1054, 0
      %v1115 = vsel %vm1106, %v1056, 0
      %v1117 = vsel %vm1106, %v1058, 0
      %v1119 = vsel %vm1106, %v1060, 0
      %v1121 = vsel %vm1106, %v1062, 0
      %vm1123 = vcmask 1043456
      %v1125 = vsel %vm1123, %v1101, 0
      %1127 = vmatprep.subr.bf16.mxu0 0
      %1128 = vmatpush1.bf16.msra.mxu0 0
      %1129 = vmatprep.subr.bf16.mxu0 0
      %1130 = vmatpush1.bf16.msra.mxu0 0
      %1131 = vmatprep.subr.bf16.mxu0 0
      %1132 = vmatpush1.bf16.msra.mxu0 0
      %1133 = vmatprep.subr.bf16.mxu0 0
      %1134 = vmatpush1.bf16.msra.mxu0 %v1125
      %1135 = vmatprep.subr.bf16.mxu0 0
      %1136 = vmatpush1.bf16.msra.mxu0 %v1100
      %1137 = vmatprep.subr.bf16.mxu0 0
      %1138 = vmatpush1.bf16.msra.mxu0 %v1099
      %1139 = vmatprep.subr.bf16.mxu0 0
      %1140 = vmatpush1.bf16.msra.mxu0 %v1098
      %1141 = vmatprep.subr.bf16.mxu0 0
      %1142 = vmatpush1.bf16.msra.mxu0 %v1097
      %1143 = vmatprep.subr.bf16.mxu0 0
      %1144 = vmatpush2.bf16.msra.mxu0 0
      %1145 = vmatprep.subr.bf16.mxu0 0
      %1146 = vmatpush2.bf16.msra.mxu0 0
      %1147 = vmatprep.subr.bf16.mxu0 0
      %1148 = vmatpush2.bf16.msra.mxu0 0
      %1149 = vmatprep.subr.bf16.mxu0 0
      %1150 = vmatpush2.bf16.msra.mxu0 0
      %1151 = vmatprep.subr.bf16.mxu0 0
      %1152 = vmatpush2.bf16.msra.mxu0 0
      %1153 = vmatprep.subr.bf16.mxu0 0
      %1154 = vmatpush2.bf16.msra.mxu0 0
      %1155 = vmatprep.subr.bf16.mxu0 0
      %1156 = vmatpush2.bf16.msra.mxu0 0
      %1157 = vmatprep.subr.bf16.mxu0 0
      %1158 = vmatpush2.bf16.msra.mxu0 0
      %1159 = vmatprep.mubr.bf16.mxu0 0
      %1160 = vmatmul.mubr.bf16.gmra.mxu0 %v1107
      %v1161 = vpop.f32.mrf.mxu0
      %v1162 = vadd.f32 %v1077, %v1161
      %v1163 = vpop.f32.mrf.mxu0
      %v1164 = vpop.f32.mrf.mxu0
      %v1165 = vadd.f32 %v1077, %v1164
      %v1166 = vpop.f32.mrf.mxu0
      %1167 = vmatprep.mubr.bf16.mxu0 0
      %1168 = vmatmul.mubr.bf16.gmra.mxu0 %v1109
      %v1169 = vpop.f32.mrf.mxu0
      %v1170 = vadd.f32 %v1077, %v1169
      %v1171 = vpop.f32.mrf.mxu0
      %v1172 = vpop.f32.mrf.mxu0
      %v1173 = vadd.f32 %v1077, %v1172
      %v1174 = vpop.f32.mrf.mxu0
      %1175 = vmatprep.mubr.bf16.mxu0 0
      %1176 = vmatmul.mubr.bf16.gmra.mxu0 %v1111
      %v1177 = vpop.f32.mrf.mxu0
      %v1178 = vadd.f32 %v1077, %v1177
      %v1179 = vpop.f32.mrf.mxu0
      %v1180 = vpop.f32.mrf.mxu0
      %v1181 = vadd.f32 %v1077, %v1180
      %v1182 = vpop.f32.mrf.mxu0
      %1183 = vmatprep.mubr.bf16.mxu0 0
      %1184 = vmatmul.mubr.bf16.gmra.mxu0 %v1113
      %v1185 = vpop.f32.mrf.mxu0
      %v1186 = vadd.f32 %v1077, %v1185
      %v1187 = vpop.f32.mrf.mxu0
      %v1188 = vpop.f32.mrf.mxu0
      %v1189 = vadd.f32 %v1077, %v1188
      %v1190 = vpop.f32.mrf.mxu0
      %1191 = vmatprep.mubr.bf16.mxu0 0
      %1192 = vmatmul.mubr.bf16.gmra.mxu0 %v1115
      %v1193 = vpop.f32.mrf.mxu0
      %v1194 = vadd.f32 %v1077, %v1193
      %v1195 = vpop.f32.mrf.mxu0
      %v1196 = vpop.f32.mrf.mxu0
      %v1197 = vadd.f32 %v1077, %v1196
      %v1198 = vpop.f32.mrf.mxu0
      %1199 = vmatprep.mubr.bf16.mxu0 0
      %1200 = vmatmul.mubr.bf16.gmra.mxu0 %v1117
      %v1201 = vpop.f32.mrf.mxu0
      %v1202 = vadd.f32 %v1077, %v1201
      %v1203 = vpop.f32.mrf.mxu0
      %v1204 = vpop.f32.mrf.mxu0
      %v1205 = vadd.f32 %v1077, %v1204
      %v1206 = vpop.f32.mrf.mxu0
      %1207 = vmatprep.mubr.bf16.mxu0 0
      %1208 = vmatmul.mubr.bf16.gmra.mxu0 %v1119
      %v1209 = vpop.f32.mrf.mxu0
      %v1210 = vadd.f32 %v1077, %v1209
      %v1211 = vpop.f32.mrf.mxu0
      %v1212 = vpop.f32.mrf.mxu0
      %v1213 = vadd.f32 %v1077, %v1212
      %v1214 = vpop.f32.mrf.mxu0
      %1215 = vmatprep.mubr.bf16.mxu0 0
      %1216 = vmatmul.mubr.bf16.gmra.mxu0 %v1121
      %v1217 = vpop.f32.mrf.mxu0
      %v1218 = vadd.f32 %v1077, %v1217
      %v1219 = vpop.f32.mrf.mxu0
      %v1220 = vpop.f32.mrf.mxu0
      %v1221 = vadd.f32 %v1077, %v1220
      %v1222 = vpop.f32.mrf.mxu0
      %1223 = vdwg.mxu0
      %v1224 = vpack.c.bf16 %v1165, %v1162
      %v1225 = vpack.c.bf16 %v1173, %v1170
      %v1226 = vpack.c.bf16 %v1181, %v1178
      %v1227 = vpack.c.bf16 %v1189, %v1186
      %v1228 = vpack.c.bf16 %v1197, %v1194
      %v1229 = vpack.c.bf16 %v1205, %v1202
      %v1230 = vpack.c.bf16 %v1213, %v1210
      %v1231 = vpack.c.bf16 %v1221, %v1218
      %v1240 = vunpack.c.l.b16 %v1224
      %v1241 = vunpack.c.h.b16 %v1224
      %v1242 = vunpack.c.l.b16 %v1225
      %v1243 = vunpack.c.h.b16 %v1225
      %v1244 = vunpack.c.l.b16 %v1226
      %v1245 = vunpack.c.h.b16 %v1226
      %v1246 = vunpack.c.l.b16 %v1227
      %v1247 = vunpack.c.h.b16 %v1227
      %v1248 = vunpack.c.l.b16 %v1228
      %v1249 = vunpack.c.h.b16 %v1228
      %v1250 = vunpack.c.l.b16 %v1229
      %v1251 = vunpack.c.h.b16 %v1229
      %v1252 = vunpack.c.l.b16 %v1230
      %v1253 = vunpack.c.h.b16 %v1230
      %v1254 = vunpack.c.l.b16 %v1231
      %v1255 = vunpack.c.h.b16 %v1231
      %v1256 = vpack.c.b16 %v1240, %v1240
      %v1257 = vpack.c.b16 %v1241, %v1241
      %v1258 = vpack.c.b16 %v1242, %v1242
      %v1259 = vpack.c.b16 %v1243, %v1243
      %v1260 = vpack.c.b16 %v1244, %v1244
      %v1261 = vpack.c.b16 %v1245, %v1245
      %v1262 = vpack.c.b16 %v1246, %v1246
      %v1263 = vpack.c.b16 %v1247, %v1247
      %v1264 = vpack.c.b16 %v1248, %v1248
      %v1265 = vpack.c.b16 %v1249, %v1249
      %v1266 = vpack.c.b16 %v1250, %v1250
      %v1267 = vpack.c.b16 %v1251, %v1251
      %v1268 = vpack.c.b16 %v1252, %v1252
      %v1269 = vpack.c.b16 %v1253, %v1253
      %v1270 = vpack.c.b16 %v1254, %v1254
      %v1271 = vpack.c.b16 %v1255, %v1255
      %1288 = vst [vmem:[%s288] sm:$0xf] %v1256
      %1289 = vst [vmem:[%s288 + $0x4] sm:$0xf] %v1257
      %1290 = vst [vmem:[%s288 + $0x8] sm:$0xf] %v1258
      %1291 = vst [vmem:[%s288 + $0xc] sm:$0xf] %v1259
      %1292 = vst [vmem:[%s288 + $0x10] sm:$0xf] %v1260
      %1293 = vst [vmem:[%s288 + $0x14] sm:$0xf] %v1261
      %1294 = vst [vmem:[%s288 + $0x18] sm:$0xf] %v1262
      %1295 = vst [vmem:[%s288 + $0x1c] sm:$0xf] %v1263
      %1296 = vst [vmem:[%s288 + $0x20] sm:$0xf] %v1264
      %1297 = vst [vmem:[%s288 + $0x24] sm:$0xf] %v1265
      %1298 = vst [vmem:[%s288 + $0x28] sm:$0xf] %v1266
      %1299 = vst [vmem:[%s288 + $0x2c] sm:$0xf] %v1267
      %1300 = vst [vmem:[%s288 + $0x30] sm:$0xf] %v1268
      %1301 = vst [vmem:[%s288 + $0x34] sm:$0xf] %v1269
      %1302 = vst [vmem:[%s288 + $0x38] sm:$0xf] %v1270
      %1303 = vst [vmem:[%s288 + $0x3c] sm:$0xf] %v1271
      %v1304 = vunpack.c.l.bf16 %v1224
      %v1305 = vunpack.c.h.bf16 %v1224
      %v1306 = vunpack.c.l.bf16 %v1225
      %v1307 = vunpack.c.h.bf16 %v1225
      %v1308 = vunpack.c.l.bf16 %v1226
      %v1309 = vunpack.c.h.bf16 %v1226
      %v1310 = vunpack.c.l.bf16 %v1227
      %v1311 = vunpack.c.h.bf16 %v1227
      %v1312 = vunpack.c.l.bf16 %v1228
      %v1313 = vunpack.c.h.bf16 %v1228
      %v1314 = vunpack.c.l.bf16 %v1229
      %v1315 = vunpack.c.h.bf16 %v1229
      %v1316 = vunpack.c.l.bf16 %v1230
      %v1317 = vunpack.c.h.bf16 %v1230
      %v1318 = vunpack.c.l.bf16 %v1231
      %v1319 = vunpack.c.h.bf16 %v1231
      %v1320 = vadd.f32 %v1304, %v1305
      %v1321 = vadd.f32 %v1320, %v1306
      %v1322 = vadd.f32 %v1321, %v1307
      %v1323 = vadd.f32 %v1322, %v1308
      %v1324 = vadd.f32 %v1323, %v1309
      %v1325 = vadd.f32 %v1324, %v1310
      %v1326 = vadd.f32 %v1325, %v1311
      %v1327 = vadd.f32 %v1326, %v1312
      %v1328 = vadd.f32 %v1327, %v1313
      %v1329 = vadd.f32 %v1328, %v1314
      %v1330 = vadd.f32 %v1329, %v1315
      %v1331 = vadd.f32 %v1330, %v1316
      %v1332 = vadd.f32 %v1331, %v1317
      %v1333 = vadd.f32 %v1332, %v1318
      %v1334 = vadd.f32 %v1333, %v1319
      %v1335 = vrot.slane %v1334, 4
      %v1336 = vadd.f32 %v1334, %v1335
      %v1337 = vrot.slane %v1336, 2
      %v1338 = vadd.f32 %v1336, %v1337
      %v1339 = vrot.slane %v1338, 1
      %v1340 = vadd.f32 %v1338, %v1339
      %v1341 = vmul.f32 %v1304, %v1304
      %v1342 = vmul.f32 %v1305, %v1305
      %v1343 = vmul.f32 %v1306, %v1306
      %v1344 = vmul.f32 %v1307, %v1307
      %v1345 = vmul.f32 %v1308, %v1308
      %v1346 = vmul.f32 %v1309, %v1309
      %v1347 = vmul.f32 %v1310, %v1310
      %v1348 = vmul.f32 %v1311, %v1311
      %v1349 = vmul.f32 %v1312, %v1312
      %v1350 = vmul.f32 %v1313, %v1313
      %v1351 = vmul.f32 %v1314, %v1314
      %v1352 = vmul.f32 %v1315, %v1315
      %v1353 = vmul.f32 %v1316, %v1316
      %v1354 = vmul.f32 %v1317, %v1317
      %v1355 = vmul.f32 %v1318, %v1318
      %v1356 = vmul.f32 %v1319, %v1319
      %v1357 = vadd.f32 %v1341, %v1342
      %v1358 = vadd.f32 %v1357, %v1343
      %v1359 = vadd.f32 %v1358, %v1344
      %v1360 = vadd.f32 %v1359, %v1345
      %v1361 = vadd.f32 %v1360, %v1346
      %v1362 = vadd.f32 %v1361, %v1347
      %v1363 = vadd.f32 %v1362, %v1348
      %v1364 = vadd.f32 %v1363, %v1349
      %v1365 = vadd.f32 %v1364, %v1350
      %v1366 = vadd.f32 %v1365, %v1351
      %v1367 = vadd.f32 %v1366, %v1352
      %v1368 = vadd.f32 %v1367, %v1353
      %v1369 = vadd.f32 %v1368, %v1354
      %v1370 = vadd.f32 %v1369, %v1355
      %v1371 = vadd.f32 %v1370, %v1356
      %v1372 = vrot.slane %v1371, 4
      %v1373 = vadd.f32 %v1371, %v1372
      %v1374 = vrot.slane %v1373, 2
      %v1375 = vadd.f32 %v1373, %v1374
      %v1376 = vrot.slane %v1375, 1
      %v1377 = vadd.f32 %v1375, %v1376
      %vm1378 = vcmask 1040384
      %v1379 = vsel %vm1378, %v1340, %v1377
      %1380 = vst [vmem:[%s297] sm:$0x3] %v1379
      %s1381 = smul.u32 8, %s23
      %p1382 = scmp.lt.s32.totalorder %s22, 1
      %s1383 = scalar_select %p1382, %s22, 1
      %p1384 = scmp.lt.s32.totalorder %s1381, 15
      %s1385 = scalar_select %p1384, %s1381, 15
      %s1386 = smul.addr %s1385, 2
      %s1387 = smul.addr %s1383, 32
      %s1388 = sadd.s32 %s1386, %s1387
      %s1389 = smul.addr %s1388, 4
      %s1390 = scalar_lea.vmem %s5, %s1389
      %p1391 = scmp.lt.s32.totalorder %s22, 1
      %s1392 = scalar_select %p1391, %s22, 1
      %p1393 = scmp.lt.s32.totalorder %s23, 1
      %s1394 = scalar_select %p1393, %s23, 1
      %s1395 = smul.addr %s1392, 2
      %s1396 = sadd.s32 %s1394, %s1395
      %s1397 = smul.addr %s1396, 2
      %s1398 = scalar_lea.vmem %s6, %s1397
      // Predicated region
      $region41: #{conv_block_forward.4} parent=39 // pred_check
        %p1399 = pneg %p160
      $region42: #{conv_block_forward.4} parent=39 // pred_check_branch
        %1401 = sbr.rel (%p1399) target = $region44
      $region43: #{conv_block_forward.4} parent=39 // pred_region
        %s1402 = smul.u32 8, %s23
      $region44: #{conv_block_forward.4} parent=39 // pred_fallthru
        _
      // Predicated region
      $region45: #{conv_block_forward.4} parent=39 // pred_check
        %p1403 = pneg %p188
      $region46: #{conv_block_forward.4} parent=39 // pred_check_branch
        %1405 = sbr.rel (%p1403) target = $region48
      $region47: #{conv_block_forward.4} parent=39 // pred_region
        _
      $region48: #{conv_block_forward.4} parent=39 // pred_fallthru
        _
    $region40: #{conv_block_forward.4} parent=5 // pred_fallthru
      _
    %p1406 = scmp.le.s32.totalorder 2, %s13
    // Predicated region
    $region49: #{conv_block_forward.4} parent=5 // pred_check
      %p1407 = pneg %p1406
    $region50: #{conv_block_forward.4} parent=5 // pred_check_branch
      %1409 = sbr.rel (%p1407) target = $region52
    $region51: #{conv_block_forward.4} parent=5 // pred_region
      %s1410 = ssub.s32 %s13, 2
      // Predicated region
      $region53: #{conv_block_forward.4} parent=51 // pred_check
        %p1411 = pneg %p166
      $region54: #{conv_block_forward.4} parent=51 // pred_check_branch
        %1413 = sbr.rel (%p1411) target = $region56
      $region55: #{conv_block_forward.4} parent=51 // pred_region
        %s1414 = smul.u32 8, %s25
        %p1415 = scmp.lt.s32.totalorder %s24, 1
        %s1416 = scalar_select %p1415, %s24, 1
        %p1417 = scmp.lt.s32.totalorder %s1414, 15
        %s1418 = scalar_select %p1417, %s1414, 15
        %s1419 = smul.addr %s1418, 2
        %s1420 = smul.addr %s1416, 32
        %s1421 = sadd.s32 %s1419, %s1420
        %s1422 = smul.addr %s1421, 4
        %s1423 = scalar_lea.vmem %s5, %s1422
      $region56: #{conv_block_forward.4} parent=51 // pred_fallthru
        _
      // Predicated region
      $region57: #{conv_block_forward.4} parent=51 // pred_check
        %p1424 = pneg %p194
      $region58: #{conv_block_forward.4} parent=51 // pred_check_branch
        %1426 = sbr.rel (%p1424) target = $region60
      $region59: #{conv_block_forward.4} parent=51 // pred_region
        %p1427 = scmp.lt.s32.totalorder %s24, 1
        %s1428 = scalar_select %p1427, %s24, 1
        %p1429 = scmp.lt.s32.totalorder %s25, 1
        %s1430 = scalar_select %p1429, %s25, 1
        %s1431 = smul.addr %s1428, 2
        %s1432 = sadd.s32 %s1430, %s1431
        %s1433 = smul.addr %s1432, 2
        %s1434 = scalar_lea.vmem %s6, %s1433
      $region60: #{conv_block_forward.4} parent=51 // pred_fallthru
        _
    $region52: #{conv_block_forward.4} parent=5 // pred_fallthru
      _
  $region6: #{conv_block_forward.4} parent=0 // loop_footer
    %s17 = sadd.s32 1, %s13
  $region7: #{conv_block_forward.4} parent=0 // loop_footer_branch
    %12 = sbr.rel target = $region3
  $region8: #{conv_block_forward.4} parent=0 // loop_exit
    _

</llo_original>
